<compile_context>
chip_gen: v7x
topology: tpu7x:2x2x1
jax: 0.10.0
libtpu: 0.0.40
codegen_flags: <defaults>
</compile_context>

<pallas_src>
import functools

import jax
import jax.numpy as jnp
from jax.experimental import pallas as pl
from jax.experimental.pallas import tpu as pltpu


def _disp_warp_kernel(x_ref, y_ref, w1_ref, b1_ref, w2_ref, b2_ref,
                      wf_ref, bf_ref, o_ref, zp_ref,
                      *, H, W, in_cs, c_hidden, out_cs, slope):
    # x_ref/y_ref : (1, in_cs, H*W)        lane-dense input blocks
    # w*_ref      : (9*Cin, Cout)          im2col weights
    # b*_ref      : (1, Cout)
    # o_ref       : (1, out_cs, H*W)       lane-dense output block
    # zp_ref      : (H+2, W+2, c_hidden)   padded activation scratch (VMEM)
    HW = H * W
    cin2 = 2 * in_cs

    # Zero the padded scratch once; the 1-pixel border stays zero for every
    # layer, which implements Conv2d(..., padding=1) "same" semantics.
    zp_ref[...] = jnp.zeros(zp_ref.shape, zp_ref.dtype)

    # Fused input transform: z = concat(y + x, y - x) along channels.
    xv = x_ref[0]                                     # (in_cs, H*W)
    yv = y_ref[0]
    z = jnp.concatenate([yv + xv, yv - xv], axis=0)   # (2*in_cs, H*W)
    zp_ref[1:1 + H, 1:1 + W, :cin2] = z.T.reshape(H, W, cin2)

    def im2col(n_ch):
        # (H*W, 9*n_ch) patch matrix for a 3x3 "same" conv.
        zp = zp_ref[...]                              # (H+2, W+2, c_hidden)
        cols = []
        for dy in range(3):
            for dx in range(3):
                cols.append(zp[dy:dy + H, dx:dx + W, :n_ch].reshape(HW, n_ch))
        return jnp.concatenate(cols, axis=1)

    def leaky(a):
        return jnp.where(a > 0, a, slope * a)

    # encoder 1: Conv3x3(2*in_cs -> c_hidden) + LeakyReLU(0.1)
    h = leaky(jnp.dot(im2col(cin2), w1_ref[...],
                      preferred_element_type=jnp.float32) + b1_ref[...])
    zp_ref[1:1 + H, 1:1 + W, :] = h.reshape(H, W, c_hidden)

    # encoder 2: Conv3x3(c_hidden -> c_hidden) + LeakyReLU(0.1)
    h = leaky(jnp.dot(im2col(c_hidden), w2_ref[...],
                      preferred_element_type=jnp.float32) + b2_ref[...])
    zp_ref[1:1 + H, 1:1 + W, :] = h.reshape(H, W, c_hidden)

    # flow head: Conv3x3(c_hidden -> out_cs), zero-initialized, no activation.
    f = jnp.dot(im2col(c_hidden), wf_ref[...],
                preferred_element_type=jnp.float32) + bf_ref[...]   # (H*W, out_cs)
    o_ref[0] = f.T                                    # (out_cs, H*W), lane-dense store


def disp_warp_forward(x, y, params):
    """x, y: (N, in_cs, H, W) NCHW (PyTorch convention). Returns (N, out_cs, H, W)."""
    w1, b1, w2, b2, wf, bf = params
    N, in_cs, H, W = x.shape
    cin2 = 2 * in_cs
    c_hidden = w1.shape[-1]
    out_cs = wf.shape[-1]
    HW = H * W

    # Lane-dense activation layout for HBM I/O: (N, C, H*W).
    # NCHW -> (N, C, H*W) is a contiguous, metadata-only reshape.
    xf = x.reshape(N, in_cs, HW).astype(jnp.float32)
    yf = y.reshape(N, in_cs, HW).astype(jnp.float32)

    # im2col weights: (3, 3, Cin, Cout) -> (9*Cin, Cout); row index is
    # (dy*3 + dx)*Cin + ci, matching the in-kernel patch column ordering.
    w1m = w1.reshape(9 * cin2, c_hidden).astype(jnp.float32)
    w2m = w2.reshape(9 * c_hidden, c_hidden).astype(jnp.float32)
    wfm = wf.reshape(9 * c_hidden, out_cs).astype(jnp.float32)
    b1m = b1.reshape(1, c_hidden).astype(jnp.float32)
    b2m = b2.reshape(1, c_hidden).astype(jnp.float32)
    bfm = bf.reshape(1, out_cs).astype(jnp.float32)

    kernel = functools.partial(
        _disp_warp_kernel, H=H, W=W, in_cs=in_cs,
        c_hidden=c_hidden, out_cs=out_cs, slope=0.1)

    out = pl.pallas_call(
        kernel,
        out_shape=jax.ShapeDtypeStruct((N, out_cs, HW), jnp.float32),
        grid=(N,),
        in_specs=[
            pl.BlockSpec((1, in_cs, HW), lambda n: (n, 0, 0)),
            pl.BlockSpec((1, in_cs, HW), lambda n: (n, 0, 0)),
            pl.BlockSpec((9 * cin2, c_hidden), lambda n: (0, 0)),
            pl.BlockSpec((1, c_hidden), lambda n: (0, 0)),
            pl.BlockSpec((9 * c_hidden, c_hidden), lambda n: (0, 0)),
            pl.BlockSpec((1, c_hidden), lambda n: (0, 0)),
            pl.BlockSpec((9 * c_hidden, out_cs), lambda n: (0, 0)),
            pl.BlockSpec((1, out_cs), lambda n: (0, 0)),
        ],
        out_specs=pl.BlockSpec((1, out_cs, HW), lambda n: (n, 0, 0)),
        scratch_shapes=[pltpu.VMEM((H + 2, W + 2, c_hidden), jnp.float32)],
        compiler_params=pltpu.CompilerParams(
            dimension_semantics=("parallel",)),
    )(xf, yf, w1m, b1m, w2m, b2m, wfm, bfm)
    return out.reshape(N, out_cs, H, W)


def init_params(key, in_cs=1, N_s=8, out_cs=2, lk_size=3):
    assert lk_size == 3, "kernel written for lk_size=3"
    c_hidden = 2 * N_s
    k1, k2 = jax.random.split(key)

    def kaiming(k, shape):
        fan_in = shape[0] * shape[1] * shape[2]
        return jax.random.normal(k, shape, jnp.float32) * jnp.sqrt(2.0 / fan_in)

    # encoder 1: Conv2d(2*in_cs, 2*N_s, 3, 1, 1) + LeakyReLU
    w1 = kaiming(k1, (3, 3, 2 * in_cs, c_hidden))
    b1 = jnp.zeros((c_hidden,), jnp.float32)
    # encoder 2: Conv2d(2*N_s, 2*N_s, 3, 1, 1) + LeakyReLU
    w2 = kaiming(k2, (3, 3, c_hidden, c_hidden))
    b2 = jnp.zeros((c_hidden,), jnp.float32)
    # flow: Conv2d(2*N_s, out_cs, 3, 1, 1) with init_zero_flow() -> all zeros
    wf = jnp.zeros((3, 3, c_hidden, out_cs), jnp.float32)
    bf = jnp.zeros((out_cs,), jnp.float32)
    return (w1, b1, w2, b2, wf, bf)


def _disp_warp_reference(x, y, params):
    """Pure-JAX (XLA conv) reference, used only for the numerical self-check."""
    w1, b1, w2, b2, wf, bf = params
    z = jnp.concatenate([y + x, y - x], axis=1)          # NCHW
    z = jnp.transpose(z, (0, 2, 3, 1))                   # NHWC

    def conv(a, w, b):
        o = jax.lax.conv_general_dilated(
            a, w, window_strides=(1, 1), padding="SAME",
            dimension_numbers=("NHWC", "HWIO", "NHWC"),
            precision=jax.lax.Precision.HIGHEST)
        return o + b

    h = conv(z, w1, b1)
    h = jnp.where(h > 0, h, 0.1 * h)
    h = conv(h, w2, b2)
    h = jnp.where(h > 0, h, 0.1 * h)
    f = conv(h, wf, bf)
    return jnp.transpose(f, (0, 3, 1, 2))                # NHWC -> NCHW


if __name__ == "__main__":
    key = jax.random.PRNGKey(0)
    kx, ky, kp, kw = jax.random.split(key, 4)

    N, in_cs, H, W = 2, 1, 16, 16
    N_s, out_cs = 8, 2                                   # small but structure-preserving

    x = jax.random.normal(kx, (N, in_cs, H, W), jnp.float32)
    y = jax.random.normal(ky, (N, in_cs, H, W), jnp.float32)
    params = init_params(kp, in_cs=in_cs, N_s=N_s, out_cs=out_cs)

    # Official forward (flow head zero-initialized, as in the PyTorch module).
    out = jax.block_until_ready(disp_warp_forward(x, y, params))
    assert out.shape == (N, out_cs, H, W), out.shape
    assert out.dtype == jnp.float32

    # Non-vacuous numerical check: the zero-init flow head makes the official
    # output identically zero, so also validate the full conv path with a
    # nonzero flow head against a pure-JAX reference.
    w1, b1, w2, b2, wf, bf = params
    wf_t = 0.1 * jax.random.normal(kw, wf.shape, jnp.float32)
    bf_t = jnp.full(bf.shape, 0.05, jnp.float32)
    test_params = (w1, b1, w2, b2, wf_t, bf_t)
    got = jax.block_until_ready(disp_warp_forward(x, y, test_params))
    want = jax.block_until_ready(_disp_warp_reference(x, y, test_params))
    assert bool(jnp.allclose(got, want, rtol=2e-2, atol=2e-2)), \
        float(jnp.max(jnp.abs(got - want)))
    assert bool(jnp.allclose(out, jnp.zeros_like(out)))   # zero-init flow head

    print("KERNEL_OK")
</pallas_src>

<mosaic_0001>
module attributes {stable_mosaic.version = 11 : i64} {
  func.func @_disp_warp_kernel(%arg0: i32, %arg1: memref<1x1x256xf32, #tpu.memory_space<vmem>>, %arg2: memref<1x1x256xf32, #tpu.memory_space<vmem>>, %arg3: memref<18x16xf32, #tpu.memory_space<vmem>>, %arg4: memref<1x16xf32, #tpu.memory_space<vmem>>, %arg5: memref<144x16xf32, #tpu.memory_space<vmem>>, %arg6: memref<1x16xf32, #tpu.memory_space<vmem>>, %arg7: memref<144x2xf32, #tpu.memory_space<vmem>>, %arg8: memref<1x2xf32, #tpu.memory_space<vmem>>, %arg9: memref<1x2x256xf32, #tpu.memory_space<vmem>>, %arg10: memref<18x18x16xf32, #tpu.memory_space<vmem>>) attributes {dimension_semantics = [#tpu.dimension_semantics<parallel>], iteration_bounds = array<i64: 2>, scalar_prefetch = 0 : i64, scratch_operands = 1 : i64, tpu.core_type = #tpu.core_type<tc>, window_params = [{transform_indices = @transform_0, window_bounds = array<i64: 1, 1, 256>}, {transform_indices = @transform_1, window_bounds = array<i64: 1, 1, 256>}, {pipeline_mode = #tpu.pipeline_mode<synchronous>, transform_indices = @transform_2, window_bounds = array<i64: 18, 16>}, {pipeline_mode = #tpu.pipeline_mode<synchronous>, transform_indices = @transform_3, window_bounds = array<i64: 1, 16>}, {pipeline_mode = #tpu.pipeline_mode<synchronous>, transform_indices = @transform_4, window_bounds = array<i64: 144, 16>}, {pipeline_mode = #tpu.pipeline_mode<synchronous>, transform_indices = @transform_5, window_bounds = array<i64: 1, 16>}, {pipeline_mode = #tpu.pipeline_mode<synchronous>, transform_indices = @transform_6, window_bounds = array<i64: 144, 2>}, {pipeline_mode = #tpu.pipeline_mode<synchronous>, transform_indices = @transform_7, window_bounds = array<i64: 1, 2>}, {transform_indices = @transform_8, window_bounds = array<i64: 1, 2, 256>}]} {
    %cst = arith.constant 0.000000e+00 : f32
    %0 = vector.broadcast %cst : f32 to vector<18x18x16xf32>
    %c0 = arith.constant 0 : index
    %c0_0 = arith.constant 0 : index
    %c0_1 = arith.constant 0 : index
    %1 = vector.load %arg10[%c0, %c0_0, %c0_1] : memref<18x18x16xf32, #tpu.memory_space<vmem>>, vector<18x18x16xf32>
    tpu.vector_store %arg10[%c0, %c0_0, %c0_1], %0 {strides = array<i32>} : memref<18x18x16xf32, #tpu.memory_space<vmem>>, vector<18x18x16xf32>,
    %c0_2 = arith.constant 0 : index
    %c0_3 = arith.constant 0 : index
    %c0_4 = arith.constant 0 : index
    %2 = vector.load %arg1[%c0_2, %c0_3, %c0_4] : memref<1x1x256xf32, #tpu.memory_space<vmem>>, vector<1x1x256xf32>
    %3 = vector.shape_cast %2 : vector<1x1x256xf32> to vector<1x256xf32>
    %c0_5 = arith.constant 0 : index
    %c0_6 = arith.constant 0 : index
    %c0_7 = arith.constant 0 : index
    %4 = vector.load %arg2[%c0_5, %c0_6, %c0_7] : memref<1x1x256xf32, #tpu.memory_space<vmem>>, vector<1x1x256xf32>
    %5 = vector.shape_cast %4 : vector<1x1x256xf32> to vector<1x256xf32>
    %6 = arith.addf %5, %3 : vector<1x256xf32>
    %7 = arith.subf %5, %3 : vector<1x256xf32>
    %8 = tpu.concatenate %6, %7 in 0 : vector<1x256xf32>, vector<1x256xf32> -> vector<2x256xf32>
    %9 = tpu.transpose %8, [1, 0] : vector<2x256xf32> -> vector<256x2xf32>
    %10 = vector.shape_cast %9 : vector<256x2xf32> to vector<16x16x2xf32>
    %c1 = arith.constant 1 : index
    %c1_8 = arith.constant 1 : index
    %c0_9 = arith.constant 0 : index
    %11 = vector.load %arg10[%c1, %c1_8, %c0_9] : memref<18x18x16xf32, #tpu.memory_space<vmem>>, vector<16x16x2xf32>
    tpu.vector_store %arg10[%c1, %c1_8, %c0_9], %10 {strides = array<i32>} : memref<18x18x16xf32, #tpu.memory_space<vmem>>, vector<16x16x2xf32>,
    %c0_10 = arith.constant 0 : index
    %c0_11 = arith.constant 0 : index
    %c0_12 = arith.constant 0 : index
    %12 = vector.load %arg10[%c0_10, %c0_11, %c0_12] : memref<18x18x16xf32, #tpu.memory_space<vmem>>, vector<18x18x16xf32>
    %13 = vector.extract_strided_slice %12 {offsets = [0, 0, 0], sizes = [16, 16, 2], strides = [1, 1, 1]} : vector<18x18x16xf32> to vector<16x16x2xf32>
    %14 = vector.shape_cast %13 : vector<16x16x2xf32> to vector<256x2xf32>
    %15 = vector.extract_strided_slice %12 {offsets = [0, 1, 0], sizes = [16, 16, 2], strides = [1, 1, 1]} : vector<18x18x16xf32> to vector<16x16x2xf32>
    %16 = vector.shape_cast %15 : vector<16x16x2xf32> to vector<256x2xf32>
    %17 = vector.extract_strided_slice %12 {offsets = [0, 2, 0], sizes = [16, 16, 2], strides = [1, 1, 1]} : vector<18x18x16xf32> to vector<16x16x2xf32>
    %18 = vector.shape_cast %17 : vector<16x16x2xf32> to vector<256x2xf32>
    %19 = vector.extract_strided_slice %12 {offsets = [1, 0, 0], sizes = [16, 16, 2], strides = [1, 1, 1]} : vector<18x18x16xf32> to vector<16x16x2xf32>
    %20 = vector.shape_cast %19 : vector<16x16x2xf32> to vector<256x2xf32>
    %21 = vector.extract_strided_slice %12 {offsets = [1, 1, 0], sizes = [16, 16, 2], strides = [1, 1, 1]} : vector<18x18x16xf32> to vector<16x16x2xf32>
    %22 = vector.shape_cast %21 : vector<16x16x2xf32> to vector<256x2xf32>
    %23 = vector.extract_strided_slice %12 {offsets = [1, 2, 0], sizes = [16, 16, 2], strides = [1, 1, 1]} : vector<18x18x16xf32> to vector<16x16x2xf32>
    %24 = vector.shape_cast %23 : vector<16x16x2xf32> to vector<256x2xf32>
    %25 = vector.extract_strided_slice %12 {offsets = [2, 0, 0], sizes = [16, 16, 2], strides = [1, 1, 1]} : vector<18x18x16xf32> to vector<16x16x2xf32>
    %26 = vector.shape_cast %25 : vector<16x16x2xf32> to vector<256x2xf32>
    %27 = vector.extract_strided_slice %12 {offsets = [2, 1, 0], sizes = [16, 16, 2], strides = [1, 1, 1]} : vector<18x18x16xf32> to vector<16x16x2xf32>
    %28 = vector.shape_cast %27 : vector<16x16x2xf32> to vector<256x2xf32>
    %29 = vector.extract_strided_slice %12 {offsets = [2, 2, 0], sizes = [16, 16, 2], strides = [1, 1, 1]} : vector<18x18x16xf32> to vector<16x16x2xf32>
    %30 = vector.shape_cast %29 : vector<16x16x2xf32> to vector<256x2xf32>
    %31 = tpu.concatenate %14, %16, %18, %20, %22, %24, %26, %28, %30 in 1 : vector<256x2xf32>, vector<256x2xf32>, vector<256x2xf32>, vector<256x2xf32>, vector<256x2xf32>, vector<256x2xf32>, vector<256x2xf32>, vector<256x2xf32>, vector<256x2xf32> -> vector<256x18xf32>
    %c0_13 = arith.constant 0 : index
    %c0_14 = arith.constant 0 : index
    %32 = vector.load %arg3[%c0_13, %c0_14] : memref<18x16xf32, #tpu.memory_space<vmem>>, vector<18x16xf32>
    %cst_15 = arith.constant dense<0.000000e+00> : vector<256x16xf32>
    %33 = tpu.matmul %31, %32, %cst_15 {dimension_numbers = #tpu.dot_dimension_numbers<[1], [0], [0], [1], [0, 0, 1, 1], [], []>} : vector<256x18xf32>, vector<18x16xf32>, vector<256x16xf32> -> vector<256x16xf32>
    %c0_16 = arith.constant 0 : index
    %c0_17 = arith.constant 0 : index
    %34 = vector.load %arg4[%c0_16, %c0_17] : memref<1x16xf32, #tpu.memory_space<vmem>>, vector<1x16xf32>
    %35 = vector.broadcast %34 : vector<1x16xf32> to vector<256x16xf32>
    %36 = arith.addf %33, %35 : vector<256x16xf32>
    %cst_18 = arith.constant 0.000000e+00 : f32
    %37 = vector.broadcast %cst_18 : f32 to vector<256x16xf32>
    %38 = arith.cmpf ogt, %36, %37 : vector<256x16xf32>
    %cst_19 = arith.constant 1.000000e-01 : f32
    %39 = vector.broadcast %cst_19 : f32 to vector<256x16xf32>
    %40 = arith.mulf %39, %36 : vector<256x16xf32>
    %41 = arith.select %38, %36, %40 : vector<256x16xi1>, vector<256x16xf32>
    %42 = vector.shape_cast %41 : vector<256x16xf32> to vector<16x16x16xf32>
    %c1_20 = arith.constant 1 : index
    %c1_21 = arith.constant 1 : index
    %c0_22 = arith.constant 0 : index
    %43 = vector.load %arg10[%c1_20, %c1_21, %c0_22] : memref<18x18x16xf32, #tpu.memory_space<vmem>>, vector<16x16x16xf32>
    tpu.vector_store %arg10[%c1_20, %c1_21, %c0_22], %42 {strides = array<i32>} : memref<18x18x16xf32, #tpu.memory_space<vmem>>, vector<16x16x16xf32>,
    %c0_23 = arith.constant 0 : index
    %c0_24 = arith.constant 0 : index
    %c0_25 = arith.constant 0 : index
    %44 = vector.load %arg10[%c0_23, %c0_24, %c0_25] : memref<18x18x16xf32, #tpu.memory_space<vmem>>, vector<18x18x16xf32>
    %45 = vector.extract_strided_slice %44 {offsets = [0, 0, 0], sizes = [16, 16, 16], strides = [1, 1, 1]} : vector<18x18x16xf32> to vector<16x16x16xf32>
    %46 = vector.shape_cast %45 : vector<16x16x16xf32> to vector<256x16xf32>
    %47 = vector.extract_strided_slice %44 {offsets = [0, 1, 0], sizes = [16, 16, 16], strides = [1, 1, 1]} : vector<18x18x16xf32> to vector<16x16x16xf32>
    %48 = vector.shape_cast %47 : vector<16x16x16xf32> to vector<256x16xf32>
    %49 = vector.extract_strided_slice %44 {offsets = [0, 2, 0], sizes = [16, 16, 16], strides = [1, 1, 1]} : vector<18x18x16xf32> to vector<16x16x16xf32>
    %50 = vector.shape_cast %49 : vector<16x16x16xf32> to vector<256x16xf32>
    %51 = vector.extract_strided_slice %44 {offsets = [1, 0, 0], sizes = [16, 16, 16], strides = [1, 1, 1]} : vector<18x18x16xf32> to vector<16x16x16xf32>
    %52 = vector.shape_cast %51 : vector<16x16x16xf32> to vector<256x16xf32>
    %53 = vector.extract_strided_slice %44 {offsets = [1, 1, 0], sizes = [16, 16, 16], strides = [1, 1, 1]} : vector<18x18x16xf32> to vector<16x16x16xf32>
    %54 = vector.shape_cast %53 : vector<16x16x16xf32> to vector<256x16xf32>
    %55 = vector.extract_strided_slice %44 {offsets = [1, 2, 0], sizes = [16, 16, 16], strides = [1, 1, 1]} : vector<18x18x16xf32> to vector<16x16x16xf32>
    %56 = vector.shape_cast %55 : vector<16x16x16xf32> to vector<256x16xf32>
    %57 = vector.extract_strided_slice %44 {offsets = [2, 0, 0], sizes = [16, 16, 16], strides = [1, 1, 1]} : vector<18x18x16xf32> to vector<16x16x16xf32>
    %58 = vector.shape_cast %57 : vector<16x16x16xf32> to vector<256x16xf32>
    %59 = vector.extract_strided_slice %44 {offsets = [2, 1, 0], sizes = [16, 16, 16], strides = [1, 1, 1]} : vector<18x18x16xf32> to vector<16x16x16xf32>
    %60 = vector.shape_cast %59 : vector<16x16x16xf32> to vector<256x16xf32>
    %61 = vector.extract_strided_slice %44 {offsets = [2, 2, 0], sizes = [16, 16, 16], strides = [1, 1, 1]} : vector<18x18x16xf32> to vector<16x16x16xf32>
    %62 = vector.shape_cast %61 : vector<16x16x16xf32> to vector<256x16xf32>
    %63 = tpu.concatenate %46, %48, %50, %52, %54, %56, %58, %60, %62 in 1 : vector<256x16xf32>, vector<256x16xf32>, vector<256x16xf32>, vector<256x16xf32>, vector<256x16xf32>, vector<256x16xf32>, vector<256x16xf32>, vector<256x16xf32>, vector<256x16xf32> -> vector<256x144xf32>
    %c0_26 = arith.constant 0 : index
    %c0_27 = arith.constant 0 : index
    %64 = vector.load %arg5[%c0_26, %c0_27] : memref<144x16xf32, #tpu.memory_space<vmem>>, vector<144x16xf32>
    %cst_28 = arith.constant dense<0.000000e+00> : vector<256x16xf32>
    %65 = tpu.matmul %63, %64, %cst_28 {dimension_numbers = #tpu.dot_dimension_numbers<[1], [0], [0], [1], [0, 0, 1, 1], [], []>} : vector<256x144xf32>, vector<144x16xf32>, vector<256x16xf32> -> vector<256x16xf32>
    %c0_29 = arith.constant 0 : index
    %c0_30 = arith.constant 0 : index
    %66 = vector.load %arg6[%c0_29, %c0_30] : memref<1x16xf32, #tpu.memory_space<vmem>>, vector<1x16xf32>
    %67 = vector.broadcast %66 : vector<1x16xf32> to vector<256x16xf32>
    %68 = arith.addf %65, %67 : vector<256x16xf32>
    %cst_31 = arith.constant 0.000000e+00 : f32
    %69 = vector.broadcast %cst_31 : f32 to vector<256x16xf32>
    %70 = arith.cmpf ogt, %68, %69 : vector<256x16xf32>
    %cst_32 = arith.constant 1.000000e-01 : f32
    %71 = vector.broadcast %cst_32 : f32 to vector<256x16xf32>
    %72 = arith.mulf %71, %68 : vector<256x16xf32>
    %73 = arith.select %70, %68, %72 : vector<256x16xi1>, vector<256x16xf32>
    %74 = vector.shape_cast %73 : vector<256x16xf32> to vector<16x16x16xf32>
    %c1_33 = arith.constant 1 : index
    %c1_34 = arith.constant 1 : index
    %c0_35 = arith.constant 0 : index
    %75 = vector.load %arg10[%c1_33, %c1_34, %c0_35] : memref<18x18x16xf32, #tpu.memory_space<vmem>>, vector<16x16x16xf32>
    tpu.vector_store %arg10[%c1_33, %c1_34, %c0_35], %74 {strides = array<i32>} : memref<18x18x16xf32, #tpu.memory_space<vmem>>, vector<16x16x16xf32>,
    %c0_36 = arith.constant 0 : index
    %c0_37 = arith.constant 0 : index
    %c0_38 = arith.constant 0 : index
    %76 = vector.load %arg10[%c0_36, %c0_37, %c0_38] : memref<18x18x16xf32, #tpu.memory_space<vmem>>, vector<18x18x16xf32>
    %77 = vector.extract_strided_slice %76 {offsets = [0, 0, 0], sizes = [16, 16, 16], strides = [1, 1, 1]} : vector<18x18x16xf32> to vector<16x16x16xf32>
    %78 = vector.shape_cast %77 : vector<16x16x16xf32> to vector<256x16xf32>
    %79 = vector.extract_strided_slice %76 {offsets = [0, 1, 0], sizes = [16, 16, 16], strides = [1, 1, 1]} : vector<18x18x16xf32> to vector<16x16x16xf32>
    %80 = vector.shape_cast %79 : vector<16x16x16xf32> to vector<256x16xf32>
    %81 = vector.extract_strided_slice %76 {offsets = [0, 2, 0], sizes = [16, 16, 16], strides = [1, 1, 1]} : vector<18x18x16xf32> to vector<16x16x16xf32>
    %82 = vector.shape_cast %81 : vector<16x16x16xf32> to vector<256x16xf32>
    %83 = vector.extract_strided_slice %76 {offsets = [1, 0, 0], sizes = [16, 16, 16], strides = [1, 1, 1]} : vector<18x18x16xf32> to vector<16x16x16xf32>
    %84 = vector.shape_cast %83 : vector<16x16x16xf32> to vector<256x16xf32>
    %85 = vector.extract_strided_slice %76 {offsets = [1, 1, 0], sizes = [16, 16, 16], strides = [1, 1, 1]} : vector<18x18x16xf32> to vector<16x16x16xf32>
    %86 = vector.shape_cast %85 : vector<16x16x16xf32> to vector<256x16xf32>
    %87 = vector.extract_strided_slice %76 {offsets = [1, 2, 0], sizes = [16, 16, 16], strides = [1, 1, 1]} : vector<18x18x16xf32> to vector<16x16x16xf32>
    %88 = vector.shape_cast %87 : vector<16x16x16xf32> to vector<256x16xf32>
    %89 = vector.extract_strided_slice %76 {offsets = [2, 0, 0], sizes = [16, 16, 16], strides = [1, 1, 1]} : vector<18x18x16xf32> to vector<16x16x16xf32>
    %90 = vector.shape_cast %89 : vector<16x16x16xf32> to vector<256x16xf32>
    %91 = vector.extract_strided_slice %76 {offsets = [2, 1, 0], sizes = [16, 16, 16], strides = [1, 1, 1]} : vector<18x18x16xf32> to vector<16x16x16xf32>
    %92 = vector.shape_cast %91 : vector<16x16x16xf32> to vector<256x16xf32>
    %93 = vector.extract_strided_slice %76 {offsets = [2, 2, 0], sizes = [16, 16, 16], strides = [1, 1, 1]} : vector<18x18x16xf32> to vector<16x16x16xf32>
    %94 = vector.shape_cast %93 : vector<16x16x16xf32> to vector<256x16xf32>
    %95 = tpu.concatenate %78, %80, %82, %84, %86, %88, %90, %92, %94 in 1 : vector<256x16xf32>, vector<256x16xf32>, vector<256x16xf32>, vector<256x16xf32>, vector<256x16xf32>, vector<256x16xf32>, vector<256x16xf32>, vector<256x16xf32>, vector<256x16xf32> -> vector<256x144xf32>
    %c0_39 = arith.constant 0 : index
    %c0_40 = arith.constant 0 : index
    %96 = vector.load %arg7[%c0_39, %c0_40] : memref<144x2xf32, #tpu.memory_space<vmem>>, vector<144x2xf32>
    %cst_41 = arith.constant dense<0.000000e+00> : vector<256x2xf32>
    %97 = tpu.matmul %95, %96, %cst_41 {dimension_numbers = #tpu.dot_dimension_numbers<[1], [0], [0], [1], [0, 0, 1, 1], [], []>} : vector<256x144xf32>, vector<144x2xf32>, vector<256x2xf32> -> vector<256x2xf32>
    %c0_42 = arith.constant 0 : index
    %c0_43 = arith.constant 0 : index
    %98 = vector.load %arg8[%c0_42, %c0_43] : memref<1x2xf32, #tpu.memory_space<vmem>>, vector<1x2xf32>
    %99 = vector.broadcast %98 : vector<1x2xf32> to vector<256x2xf32>
    %100 = arith.addf %97, %99 : vector<256x2xf32>
    %101 = tpu.transpose %100, [1, 0] : vector<256x2xf32> -> vector<2x256xf32>
    %c0_44 = arith.constant 0 : index
    %c0_45 = arith.constant 0 : index
    %c0_46 = arith.constant 0 : index
    %102 = vector.load %arg9[%c0_44, %c0_45, %c0_46] : memref<1x2x256xf32, #tpu.memory_space<vmem>>, vector<1x2x256xf32>
    %103 = vector.shape_cast %102 : vector<1x2x256xf32> to vector<2x256xf32>
    %104 = vector.shape_cast %101 : vector<2x256xf32> to vector<1x2x256xf32>
    tpu.vector_store %arg9[%c0_44, %c0_45, %c0_46], %104 {strides = array<i32>} : memref<1x2x256xf32, #tpu.memory_space<vmem>>, vector<1x2x256xf32>,
    return
  }
  func.func @transform_0(%arg0: i32) -> (i32, i32, i32) {
    %c0_i32 = arith.constant 0 : i32
    %c0_i32_0 = arith.constant 0 : i32
    %c0_i32_1 = arith.constant 0 : i32
    return %arg0, %c0_i32, %c0_i32_0 : i32, i32, i32
  }
  func.func @transform_1(%arg0: i32) -> (i32, i32, i32) {
    %c0_i32 = arith.constant 0 : i32
    %c0_i32_0 = arith.constant 0 : i32
    %c0_i32_1 = arith.constant 0 : i32
    return %arg0, %c0_i32, %c0_i32_0 : i32, i32, i32
  }
  func.func @transform_2(%arg0: i32) -> (i32, i32) {
    %c0_i32 = arith.constant 0 : i32
    %c0_i32_0 = arith.constant 0 : i32
    %c0_i32_1 = arith.constant 0 : i32
    return %c0_i32, %c0_i32_0 : i32, i32
  }
  func.func @transform_3(%arg0: i32) -> (i32, i32) {
    %c0_i32 = arith.constant 0 : i32
    %c0_i32_0 = arith.constant 0 : i32
    %c0_i32_1 = arith.constant 0 : i32
    return %c0_i32, %c0_i32_0 : i32, i32
  }
  func.func @transform_4(%arg0: i32) -> (i32, i32) {
    %c0_i32 = arith.constant 0 : i32
    %c0_i32_0 = arith.constant 0 : i32
    %c0_i32_1 = arith.constant 0 : i32
    return %c0_i32, %c0_i32_0 : i32, i32
  }
  func.func @transform_5(%arg0: i32) -> (i32, i32) {
    %c0_i32 = arith.constant 0 : i32
    %c0_i32_0 = arith.constant 0 : i32
    %c0_i32_1 = arith.constant 0 : i32
    return %c0_i32, %c0_i32_0 : i32, i32
  }
  func.func @transform_6(%arg0: i32) -> (i32, i32) {
    %c0_i32 = arith.constant 0 : i32
    %c0_i32_0 = arith.constant 0 : i32
    %c0_i32_1 = arith.constant 0 : i32
    return %c0_i32, %c0_i32_0 : i32, i32
  }
  func.func @transform_7(%arg0: i32) -> (i32, i32) {
    %c0_i32 = arith.constant 0 : i32
    %c0_i32_0 = arith.constant 0 : i32
    %c0_i32_1 = arith.constant 0 : i32
    return %c0_i32, %c0_i32_0 : i32, i32
  }
  func.func @transform_8(%arg0: i32) -> (i32, i32, i32) {
    %c0_i32 = arith.constant 0 : i32
    %c0_i32_0 = arith.constant 0 : i32
    %c0_i32_1 = arith.constant 0 : i32
    return %arg0, %c0_i32, %c0_i32_0 : i32, i32, i32
  }
}

</mosaic_0001>

<llo_original>
// kernel: tpu_custom_call.1
$region0: #{tpu_custom_call.1}
  #allocation0 [shape = 'u32[]', space=smem, size = 0x4, offset = 0x4, fixed_abs, tag = 'smem constant byte address 0x4 - core index']
  #allocation1 [shape = 'u32[144,128]{1,0:T(1,128)}', space=vmem, size = 0x12000, scoped, tag = 'internal scratch']
  #allocation2 [shape = 'f32[18,18,16]{2,1,0:T(8,128)}', space=vmem, size = 0x36000, scoped, tag = 'scratch operand']
  %s0 = inlined_call_operand.vmem [shape: f32[2,1,256], index: 0, kind: input, shape index: {}]
  %s1 = inlined_call_operand.vmem [shape: f32[2,1,256], index: 1, kind: input, shape index: {}]
  %s2 = inlined_call_operand.vmem [shape: f32[18,16], index: 2, kind: input, shape index: {}]
  %s3 = inlined_call_operand.vmem [shape: f32[1,16], index: 3, kind: input, shape index: {}]
  %s4 = inlined_call_operand.vmem [shape: f32[144,16], index: 4, kind: input, shape index: {}]
  %s5 = inlined_call_operand.vmem [shape: f32[1,16], index: 5, kind: input, shape index: {}]
  %s6 = inlined_call_operand.vmem [shape: f32[144,2], index: 6, kind: input, shape index: {}]
  %s7 = inlined_call_operand.vmem [shape: f32[1,2], index: 7, kind: input, shape index: {}]
  %s8 = inlined_call_operand.hbm [shape: f32[2,2,256], index: 8, kind: output, shape index: {}]
  %s9 = sld [smem:[#allocation0]]
  $region65: #{tpu_custom_call.1} parent=0
    _
  %s11 = ssub.s32 1, %s9
  %s12 = scalar_select 0, %s11, %s9
  $region1: #{tpu_custom_call.1} parent=0
    #allocation3 [shape = 'u8[4096]{0}', space=vmem, size = 0x1000, scoped, tag = 'output window, operand 0']
    #allocation4 [shape = 's32[2]{0}', space=sflag, size = 0x8, scoped, tag = 'scoped memory for tpu_custom_call.1']
    %13 = vsyncpa [#allocation4], 0
    %s14 = scalar_lea.sflag [#allocation4], 1
    %15 = vsyncpa %s14, 0
    loop: start=0, step=1, limit=4
    $region2: #{tpu_custom_call.1} parent=1 // loop_pre_header
      _
    $region3: #{tpu_custom_call.1} parent=1 // loop_header
      %s17 = sphi 0, %s21
      %p18 = scmp.ge.s32.totalorder %s17, 4
      %s27 = sphi 0, %s29
      %s30 = sphi 0, %s27
      %s31 = sphi 0, %s30
      %s47 = sphi 0, %s31
      %s53 = sphi 0, %s55
      %s56 = sphi 0, %s53
      %s57 = sphi 0, %s56
      %s73 = sphi 0, %s57
      %s77 = sphi 0, %s77
      %s79 = sphi 0, %s77
      %s80 = sphi 0, %s79
      %s94 = sphi 0, %s80
      %s98 = sphi 0, %s98
      %s100 = sphi 0, %s98
      %s101 = sphi 0, %s100
      %s115 = sphi 0, %s101
      %s119 = sphi 0, %s119
      %s121 = sphi 0, %s119
      %s122 = sphi 0, %s121
      %s136 = sphi 0, %s122
      %s140 = sphi 0, %s140
      %s142 = sphi 0, %s140
      %s143 = sphi 0, %s142
      %s157 = sphi 0, %s143
      %s161 = sphi 0, %s161
      %s163 = sphi 0, %s161
      %s164 = sphi 0, %s163
      %s178 = sphi 0, %s164
      %s182 = sphi 0, %s182
      %s184 = sphi 0, %s182
      %s185 = sphi 0, %s184
      %s199 = sphi 0, %s185
      %s205 = sphi 0, %s207
      %s208 = sphi 0, %s205
      %s209 = sphi 0, %s208
      %s225 = sphi 0, %s209
    $region4: #{tpu_custom_call.1} parent=1 // loop_header_branch
      %20 = sbr.rel (%p18) target = $region8
    $region5: #{tpu_custom_call.1} parent=1 // loop_body
      %s22 = ssub.s32 %s17, 1
      %s23 = ssub.s32 %s17, 2
      %s24 = sadd.s32 %s17, 1
      %s25 = ssub.s32 %s17, %s24
      %p26 = scmp.eq.s32.totalorder %s25, 0
      %s28 = sadd.s32 %s27, 1
      %s29 = scalar_select %p26, %s27, %s28
      %p32 = pneg %p26
      %p33 = scmp.eq.s32.totalorder %s17, 1
      %p34 = por %p32, %p33
      %p35 = scmp.ne.s32.totalorder %s27, %s30
      %p36 = scmp.eq.s32.totalorder %s17, 0
      %p37 = por %p35, %p36
      %p38 = scmp.ne.s32.totalorder %s27, %s30
      %p39 = scmp.eq.s32.totalorder %s22, 1
      %p40 = por %p38, %p39
      %p41 = scmp.ne.s32.totalorder %s30, %s31
      %p42 = scmp.eq.s32.totalorder %s22, 0
      %p43 = por %p41, %p42
      %p44 = scmp.ne.s32.totalorder %s30, %s31
      %p45 = scmp.eq.s32.totalorder %s23, 1
      %p46 = por %p44, %p45
      %p48 = scmp.ne.s32.totalorder %s31, %s47
      %p49 = scmp.eq.s32.totalorder %s23, 0
      %p50 = por %p48, %p49
      %s51 = ssub.s32 %s17, %s24
      %p52 = scmp.eq.s32.totalorder %s51, 0
      %s54 = sadd.s32 %s53, 1
      %s55 = scalar_select %p52, %s53, %s54
      %p58 = pneg %p52
      %p59 = scmp.eq.s32.totalorder %s17, 1
      %p60 = por %p58, %p59
      %p61 = scmp.ne.s32.totalorder %s53, %s56
      %p62 = scmp.eq.s32.totalorder %s17, 0
      %p63 = por %p61, %p62
      %p64 = scmp.ne.s32.totalorder %s53, %s56
      %p65 = scmp.eq.s32.totalorder %s22, 1
      %p66 = por %p64, %p65
      %p67 = scmp.ne.s32.totalorder %s56, %s57
      %p68 = scmp.eq.s32.totalorder %s22, 0
      %p69 = por %p67, %p68
      %p70 = scmp.ne.s32.totalorder %s56, %s57
      %p71 = scmp.eq.s32.totalorder %s23, 1
      %p72 = por %p70, %p71
      %p74 = scmp.ne.s32.totalorder %s57, %s73
      %p75 = scmp.eq.s32.totalorder %s23, 0
      %p76 = por %p74, %p75
      %s78 = sadd.s32 %s77, 1
      %p81 = scmp.eq.s32.totalorder %s17, 1
      %p82 = scmp.ne.s32.totalorder %s77, %s79
      %p83 = scmp.eq.s32.totalorder %s17, 0
      %p84 = por %p82, %p83
      %p85 = scmp.ne.s32.totalorder %s77, %s79
      %p86 = scmp.eq.s32.totalorder %s22, 1
      %p87 = por %p85, %p86
      %p88 = scmp.ne.s32.totalorder %s79, %s80
      %p89 = scmp.eq.s32.totalorder %s22, 0
      %p90 = por %p88, %p89
      %p91 = scmp.ne.s32.totalorder %s79, %s80
      %p92 = scmp.eq.s32.totalorder %s23, 1
      %p93 = por %p91, %p92
      %p95 = scmp.ne.s32.totalorder %s80, %s94
      %p96 = scmp.eq.s32.totalorder %s23, 0
      %p97 = por %p95, %p96
      %s99 = sadd.s32 %s98, 1
      %p102 = scmp.eq.s32.totalorder %s17, 1
      %p103 = scmp.ne.s32.totalorder %s98, %s100
      %p104 = scmp.eq.s32.totalorder %s17, 0
      %p105 = por %p103, %p104
      %p106 = scmp.ne.s32.totalorder %s98, %s100
      %p107 = scmp.eq.s32.totalorder %s22, 1
      %p108 = por %p106, %p107
      %p109 = scmp.ne.s32.totalorder %s100, %s101
      %p110 = scmp.eq.s32.totalorder %s22, 0
      %p111 = por %p109, %p110
      %p112 = scmp.ne.s32.totalorder %s100, %s101
      %p113 = scmp.eq.s32.totalorder %s23, 1
      %p114 = por %p112, %p113
      %p116 = scmp.ne.s32.totalorder %s101, %s115
      %p117 = scmp.eq.s32.totalorder %s23, 0
      %p118 = por %p116, %p117
      %s120 = sadd.s32 %s119, 1
      %p123 = scmp.eq.s32.totalorder %s17, 1
      %p124 = scmp.ne.s32.totalorder %s119, %s121
      %p125 = scmp.eq.s32.totalorder %s17, 0
      %p126 = por %p124, %p125
      %p127 = scmp.ne.s32.totalorder %s119, %s121
      %p128 = scmp.eq.s32.totalorder %s22, 1
      %p129 = por %p127, %p128
      %p130 = scmp.ne.s32.totalorder %s121, %s122
      %p131 = scmp.eq.s32.totalorder %s22, 0
      %p132 = por %p130, %p131
      %p133 = scmp.ne.s32.totalorder %s121, %s122
      %p134 = scmp.eq.s32.totalorder %s23, 1
      %p135 = por %p133, %p134
      %p137 = scmp.ne.s32.totalorder %s122, %s136
      %p138 = scmp.eq.s32.totalorder %s23, 0
      %p139 = por %p137, %p138
      %s141 = sadd.s32 %s140, 1
      %p144 = scmp.eq.s32.totalorder %s17, 1
      %p145 = scmp.ne.s32.totalorder %s140, %s142
      %p146 = scmp.eq.s32.totalorder %s17, 0
      %p147 = por %p145, %p146
      %p148 = scmp.ne.s32.totalorder %s140, %s142
      %p149 = scmp.eq.s32.totalorder %s22, 1
      %p150 = por %p148, %p149
      %p151 = scmp.ne.s32.totalorder %s142, %s143
      %p152 = scmp.eq.s32.totalorder %s22, 0
      %p153 = por %p151, %p152
      %p154 = scmp.ne.s32.totalorder %s142, %s143
      %p155 = scmp.eq.s32.totalorder %s23, 1
      %p156 = por %p154, %p155
      %p158 = scmp.ne.s32.totalorder %s143, %s157
      %p159 = scmp.eq.s32.totalorder %s23, 0
      %p160 = por %p158, %p159
      %s162 = sadd.s32 %s161, 1
      %p165 = scmp.eq.s32.totalorder %s17, 1
      %p166 = scmp.ne.s32.totalorder %s161, %s163
      %p167 = scmp.eq.s32.totalorder %s17, 0
      %p168 = por %p166, %p167
      %p169 = scmp.ne.s32.totalorder %s161, %s163
      %p170 = scmp.eq.s32.totalorder %s22, 1
      %p171 = por %p169, %p170
      %p172 = scmp.ne.s32.totalorder %s163, %s164
      %p173 = scmp.eq.s32.totalorder %s22, 0
      %p174 = por %p172, %p173
      %p175 = scmp.ne.s32.totalorder %s163, %s164
      %p176 = scmp.eq.s32.totalorder %s23, 1
      %p177 = por %p175, %p176
      %p179 = scmp.ne.s32.totalorder %s164, %s178
      %p180 = scmp.eq.s32.totalorder %s23, 0
      %p181 = por %p179, %p180
      %s183 = sadd.s32 %s182, 1
      %p186 = scmp.eq.s32.totalorder %s17, 1
      %p187 = scmp.ne.s32.totalorder %s182, %s184
      %p188 = scmp.eq.s32.totalorder %s17, 0
      %p189 = por %p187, %p188
      %p190 = scmp.ne.s32.totalorder %s182, %s184
      %p191 = scmp.eq.s32.totalorder %s22, 1
      %p192 = por %p190, %p191
      %p193 = scmp.ne.s32.totalorder %s184, %s185
      %p194 = scmp.eq.s32.totalorder %s22, 0
      %p195 = por %p193, %p194
      %p196 = scmp.ne.s32.totalorder %s184, %s185
      %p197 = scmp.eq.s32.totalorder %s23, 1
      %p198 = por %p196, %p197
      %p200 = scmp.ne.s32.totalorder %s185, %s199
      %p201 = scmp.eq.s32.totalorder %s23, 0
      %p202 = por %p200, %p201
      %s203 = ssub.s32 %s17, %s24
      %p204 = scmp.eq.s32.totalorder %s203, 0
      %s206 = sadd.s32 %s205, 1
      %s207 = scalar_select %p204, %s205, %s206
      %p210 = pneg %p204
      %p211 = scmp.eq.s32.totalorder %s17, 1
      %p212 = por %p210, %p211
      %p213 = scmp.ne.s32.totalorder %s205, %s208
      %p214 = scmp.eq.s32.totalorder %s17, 0
      %p215 = por %p213, %p214
      %p216 = scmp.ne.s32.totalorder %s205, %s208
      %p217 = scmp.eq.s32.totalorder %s22, 1
      %p218 = por %p216, %p217
      %p219 = scmp.ne.s32.totalorder %s208, %s209
      %p220 = scmp.eq.s32.totalorder %s22, 0
      %p221 = por %p219, %p220
      %p222 = scmp.ne.s32.totalorder %s208, %s209
      %p223 = scmp.eq.s32.totalorder %s23, 1
      %p224 = por %p222, %p223
      %p226 = scmp.ne.s32.totalorder %s209, %s225
      %p227 = scmp.eq.s32.totalorder %s23, 0
      %p228 = por %p226, %p227
      %p229 = scmp.le.s32.totalorder 1, %s17
      %p230 = scmp.lt.s32.totalorder %s17, 3
      %p231 = pnand %p229, %p230
      %p232 = pneg %p231
      // Predicated region
      $region9: #{tpu_custom_call.1} parent=5 // pred_check
        _
      $region10: #{tpu_custom_call.1} parent=5 // pred_check_branch
        %234 = sbr.rel (%p231) target = $region12
      $region11: #{tpu_custom_call.1} parent=5 // pred_region
        %s235 = ssub.s32 %s17, 1
        // Predicated region
        $region13: #{tpu_custom_call.1} parent=11 // pred_check
          %p236 = pneg %p90
        $region14: #{tpu_custom_call.1} parent=11 // pred_check_branch
          %238 = sbr.rel (%p236) target = $region16
        $region15: #{tpu_custom_call.1} parent=11 // pred_region
          _
        $region16: #{tpu_custom_call.1} parent=11 // pred_fallthru
          _
        // Predicated region
        $region17: #{tpu_custom_call.1} parent=11 // pred_check
          %p239 = pneg %p111
        $region18: #{tpu_custom_call.1} parent=11 // pred_check_branch
          %241 = sbr.rel (%p239) target = $region20
        $region19: #{tpu_custom_call.1} parent=11 // pred_region
          _
        $region20: #{tpu_custom_call.1} parent=11 // pred_fallthru
          _
        // Predicated region
        $region21: #{tpu_custom_call.1} parent=11 // pred_check
          %p242 = pneg %p132
        $region22: #{tpu_custom_call.1} parent=11 // pred_check_branch
          %244 = sbr.rel (%p242) target = $region24
        $region23: #{tpu_custom_call.1} parent=11 // pred_region
          _
        $region24: #{tpu_custom_call.1} parent=11 // pred_fallthru
          _
        // Predicated region
        $region25: #{tpu_custom_call.1} parent=11 // pred_check
          %p245 = pneg %p153
        $region26: #{tpu_custom_call.1} parent=11 // pred_check_branch
          %247 = sbr.rel (%p245) target = $region28
        $region27: #{tpu_custom_call.1} parent=11 // pred_region
          _
        $region28: #{tpu_custom_call.1} parent=11 // pred_fallthru
          _
        // Predicated region
        $region29: #{tpu_custom_call.1} parent=11 // pred_check
          %p248 = pneg %p174
        $region30: #{tpu_custom_call.1} parent=11 // pred_check_branch
          %250 = sbr.rel (%p248) target = $region32
        $region31: #{tpu_custom_call.1} parent=11 // pred_region
          _
        $region32: #{tpu_custom_call.1} parent=11 // pred_fallthru
          _
        // Predicated region
        $region33: #{tpu_custom_call.1} parent=11 // pred_check
          %p251 = pneg %p195
        $region34: #{tpu_custom_call.1} parent=11 // pred_check_branch
          %253 = sbr.rel (%p251) target = $region36
        $region35: #{tpu_custom_call.1} parent=11 // pred_region
          _
        $region36: #{tpu_custom_call.1} parent=11 // pred_fallthru
          _
      $region12: #{tpu_custom_call.1} parent=5 // pred_fallthru
        _
      %p254 = scmp.lt.s32.totalorder %s17, 2
      // Predicated region
      $region37: #{tpu_custom_call.1} parent=5 // pred_check
        %p255 = pneg %p254
      $region38: #{tpu_custom_call.1} parent=5 // pred_check_branch
        %257 = sbr.rel (%p255) target = $region40
      $region39: #{tpu_custom_call.1} parent=5 // pred_region
        // Predicated region
        $region41: #{tpu_custom_call.1} parent=39 // pred_check
          %p258 = pneg %p37
        $region42: #{tpu_custom_call.1} parent=39 // pred_check_branch
          %260 = sbr.rel (%p258) target = $region44
        $region43: #{tpu_custom_call.1} parent=39 // pred_region
          %p261 = scmp.lt.s32.totalorder %s17, 1
          %s262 = scalar_select %p261, %s17, 1
          %s263 = smul.addr %s262, 2
          %s264 = scalar_lea.vmem %s0, %s263
        $region44: #{tpu_custom_call.1} parent=39 // pred_fallthru
          _
        // Predicated region
        $region45: #{tpu_custom_call.1} parent=39 // pred_check
          %p265 = pneg %p63
        $region46: #{tpu_custom_call.1} parent=39 // pred_check_branch
          %267 = sbr.rel (%p265) target = $region48
        $region47: #{tpu_custom_call.1} parent=39 // pred_region
          %p268 = scmp.lt.s32.totalorder %s17, 1
          %s269 = scalar_select %p268, %s17, 1
          %s270 = smul.addr %s269, 2
          %s271 = scalar_lea.vmem %s1, %s270
        $region48: #{tpu_custom_call.1} parent=39 // pred_fallthru
          _
      $region40: #{tpu_custom_call.1} parent=5 // pred_fallthru
        _
      %p272 = scmp.le.s32.totalorder 1, %s17
      %p273 = scmp.lt.s32.totalorder %s17, 3
      %p274 = pnand %p272, %p273
      %p275 = pneg %p274
      // Predicated region
      $region49: #{tpu_custom_call.1} parent=5 // pred_check
        _
      $region50: #{tpu_custom_call.1} parent=5 // pred_check_branch
        %277 = sbr.rel (%p274) target = $region52
      $region51: #{tpu_custom_call.1} parent=5 // pred_region
        %s278 = ssub.s32 %s17, 1
        %p279 = scmp.lt.s32.totalorder %s22, 1
        %s280 = scalar_select %p279, %s22, 1
        %s281 = smul.addr %s280, 2
        %s282 = scalar_lea.vmem %s0, %s281
        %p283 = pneg %p43
        %p284 = pneg %p40
        %p285 = scmp.lt.s32.totalorder %s22, 1
        %s286 = scalar_select %p285, %s22, 1
        %s287 = smul.addr %s286, 2
        %s288 = scalar_lea.vmem %s1, %s287
        %p289 = pneg %p69
        %p290 = pneg %p66
        %p291 = pneg %p90
        %p292 = pneg %p87
        %p293 = pneg %p111
        %p294 = pneg %p108
        %p295 = pneg %p132
        %p296 = pneg %p129
        %p297 = pneg %p153
        %p298 = pneg %p150
        %p299 = pneg %p174
        %p300 = pneg %p171
        %p301 = pneg %p195
        %p302 = pneg %p192
        %p303 = pneg %p221
        %p304 = pneg %p218
        %s305 = sand.u32 %s208, 1
        %s306 = scalar_lea.sflag [#allocation4], %s305
        %s307 = sand.u32 %s208, 1
        %s308 = smul.addr %s307, 4
        %s309 = scalar_lea.vmem [#allocation3], %s308
        %p310 = scmp.lt.s32.totalorder %s22, 1
        %s311 = scalar_select %p310, %s22, 1
        %s312 = smul.addr %s311, 2
        %s313 = scalar_lea.vmem %s0, %s312
        %p314 = scmp.lt.s32.totalorder %s22, 1
        %s315 = scalar_select %p314, %s22, 1
        %s316 = smul.addr %s315, 2
        %s317 = scalar_lea.vmem %s1, %s316
        %vm318 = vcmask 130048
        %319 = vst.msk [vmem:[#allocation2] sm:$0xff] %vm318, 0.0
        %320 = vst.msk [vmem:[#allocation2 + $0x8] sm:$0xff] %vm318, 0.0
        %vm321 = vcmask 123904
        %322 = vst.msk [vmem:[#allocation2 + $0x10] sm:$0x3] %vm321, 0.0
        %323 = vst.msk [vmem:[#allocation2 + $0x18] sm:$0xff] %vm318, 0.0
        %324 = vst.msk [vmem:[#allocation2 + $0x20] sm:$0xff] %vm318, 0.0
        %325 = vst.msk [vmem:[#allocation2 + $0x28] sm:$0x3] %vm321, 0.0
        %326 = vst.msk [vmem:[#allocation2 + $0x30] sm:$0xff] %vm318, 0.0
        %327 = vst.msk [vmem:[#allocation2 + $0x38] sm:$0xff] %vm318, 0.0
        %328 = vst.msk [vmem:[#allocation2 + $0x40] sm:$0x3] %vm321, 0.0
        %329 = vst.msk [vmem:[#allocation2 + $0x48] sm:$0xff] %vm318, 0.0
        %330 = vst.msk [vmem:[#allocation2 + $0x50] sm:$0xff] %vm318, 0.0
        %331 = vst.msk [vmem:[#allocation2 + $0x58] sm:$0x3] %vm321, 0.0
        %332 = vst.msk [vmem:[#allocation2 + $0x60] sm:$0xff] %vm318, 0.0
        %333 = vst.msk [vmem:[#allocation2 + $0x68] sm:$0xff] %vm318, 0.0
        %334 = vst.msk [vmem:[#allocation2 + $0x70] sm:$0x3] %vm321, 0.0
        %335 = vst.msk [vmem:[#allocation2 + $0x78] sm:$0xff] %vm318, 0.0
        %336 = vst.msk [vmem:[#allocation2 + $0x80] sm:$0xff] %vm318, 0.0
        %337 = vst.msk [vmem:[#allocation2 + $0x88] sm:$0x3] %vm321, 0.0
        %338 = vst.msk [vmem:[#allocation2 + $0x90] sm:$0xff] %vm318, 0.0
        %339 = vst.msk [vmem:[#allocation2 + $0x98] sm:$0xff] %vm318, 0.0
        %340 = vst.msk [vmem:[#allocation2 + $0xa0] sm:$0x3] %vm321, 0.0
        %341 = vst.msk [vmem:[#allocation2 + $0xa8] sm:$0xff] %vm318, 0.0
        %342 = vst.msk [vmem:[#allocation2 + $0xb0] sm:$0xff] %vm318, 0.0
        %343 = vst.msk [vmem:[#allocation2 + $0xb8] sm:$0x3] %vm321, 0.0
        %344 = vst.msk [vmem:[#allocation2 + $0xc0] sm:$0xff] %vm318, 0.0
        %345 = vst.msk [vmem:[#allocation2 + $0xc8] sm:$0xff] %vm318, 0.0
        %346 = vst.msk [vmem:[#allocation2 + $0xd0] sm:$0x3] %vm321, 0.0
        %347 = vst.msk [vmem:[#allocation2 + $0xd8] sm:$0xff] %vm318, 0.0
        %348 = vst.msk [vmem:[#allocation2 + $0xe0] sm:$0xff] %vm318, 0.0
        %349 = vst.msk [vmem:[#allocation2 + $0xe8] sm:$0x3] %vm321, 0.0
        %350 = vst.msk [vmem:[#allocation2 + $0xf0] sm:$0xff] %vm318, 0.0
        %351 = vst.msk [vmem:[#allocation2 + $0xf8] sm:$0xff] %vm318, 0.0
        %352 = vst.msk [vmem:[#allocation2 + $0x100] sm:$0x3] %vm321, 0.0
        %353 = vst.msk [vmem:[#allocation2 + $0x108] sm:$0xff] %vm318, 0.0
        %354 = vst.msk [vmem:[#allocation2 + $0x110] sm:$0xff] %vm318, 0.0
        %355 = vst.msk [vmem:[#allocation2 + $0x118] sm:$0x3] %vm321, 0.0
        %356 = vst.msk [vmem:[#allocation2 + $0x120] sm:$0xff] %vm318, 0.0
        %357 = vst.msk [vmem:[#allocation2 + $0x128] sm:$0xff] %vm318, 0.0
        %358 = vst.msk [vmem:[#allocation2 + $0x130] sm:$0x3] %vm321, 0.0
        %359 = vst.msk [vmem:[#allocation2 + $0x138] sm:$0xff] %vm318, 0.0
        %360 = vst.msk [vmem:[#allocation2 + $0x140] sm:$0xff] %vm318, 0.0
        %361 = vst.msk [vmem:[#allocation2 + $0x148] sm:$0x3] %vm321, 0.0
        %362 = vst.msk [vmem:[#allocation2 + $0x150] sm:$0xff] %vm318, 0.0
        %363 = vst.msk [vmem:[#allocation2 + $0x158] sm:$0xff] %vm318, 0.0
        %364 = vst.msk [vmem:[#allocation2 + $0x160] sm:$0x3] %vm321, 0.0
        %365 = vst.msk [vmem:[#allocation2 + $0x168] sm:$0xff] %vm318, 0.0
        %366 = vst.msk [vmem:[#allocation2 + $0x170] sm:$0xff] %vm318, 0.0
        %367 = vst.msk [vmem:[#allocation2 + $0x178] sm:$0x3] %vm321, 0.0
        %368 = vst.msk [vmem:[#allocation2 + $0x180] sm:$0xff] %vm318, 0.0
        %369 = vst.msk [vmem:[#allocation2 + $0x188] sm:$0xff] %vm318, 0.0
        %370 = vst.msk [vmem:[#allocation2 + $0x190] sm:$0x3] %vm321, 0.0
        %371 = vst.msk [vmem:[#allocation2 + $0x198] sm:$0xff] %vm318, 0.0
        %372 = vst.msk [vmem:[#allocation2 + $0x1a0] sm:$0xff] %vm318, 0.0
        %373 = vst.msk [vmem:[#allocation2 + $0x1a8] sm:$0x3] %vm321, 0.0
        %v374 = vld [vmem:[%s313] sm:$0x3]
        %v375 = vld [vmem:[%s317] sm:$0x3]
        %v376 = vadd.f32 %v375, %v374
        %v377 = vsub.f32 %v375, %v374
        %v379 = vlaneseq
        %v380 = vshrl.u32 %v379, 7
        %v381 = vsub.s32 0, %v380
        %v382 = vrot.slane %v376, %v381
        %v383 = vlaneseq
        %v384 = vshrl.u32 %v383, 7
        %v385 = vsub.s32 1, %v384
        %v386 = vrot.slane %v376, %v385
        %v390 = vlaneseq
        %v391 = vshrl.u32 %v390, 7
        %v392 = vsub.s32 0, %v391
        %v393 = vrot.slane %v377, %v392
        %v394 = vlaneseq
        %v395 = vshrl.u32 %v394, 7
        %v396 = vsub.s32 1, %v395
        %v397 = vrot.slane %v377, %v396
        %vm400 = vcmask 1040384
        %v401 = vsel %vm400, %v382, %v393
        %v402 = vsel %vm400, %v386, %v397
        %403 = vxpose.xlu0.b32.start [1/16] %v401, 128
        %404 = vxpose.xlu0.b32.cont [2/16] 0.0, 128
        %405 = vxpose.xlu0.b32.cont [3/16] 0.0, 128
        %406 = vxpose.xlu0.b32.cont [4/16] 0.0, 128
        %407 = vxpose.xlu0.b32.cont [5/16] 0.0, 128
        %408 = vxpose.xlu0.b32.cont [6/16] 0.0, 128
        %409 = vxpose.xlu0.b32.cont [7/16] 0.0, 128
        %410 = vxpose.xlu0.b32.cont [8/16] 0.0, 128
        %411 = vxpose.xlu0.b32.cont [9/16] 0.0, 128
        %412 = vxpose.xlu0.b32.cont [10/16] 0.0, 128
        %413 = vxpose.xlu0.b32.cont [11/16] 0.0, 128
        %414 = vxpose.xlu0.b32.cont [12/16] 0.0, 128
        %415 = vxpose.xlu0.b32.cont [13/16] 0.0, 128
        %416 = vxpose.xlu0.b32.cont [14/16] 0.0, 128
        %417 = vxpose.xlu0.b32.cont [15/16] 0.0, 128
        %418 = vxpose.xlu0.b32.end [16/16] 0.0, 128
        %v419 = vpop.trf.xlu0
        %v420 = vpop.trf.xlu0
        %v421 = vpop.trf.xlu0
        %v422 = vpop.trf.xlu0
        %v423 = vpop.trf.xlu0
        %v424 = vpop.trf.xlu0
        %v425 = vpop.trf.xlu0
        %v426 = vpop.trf.xlu0
        %v427 = vpop.trf.xlu0
        %v428 = vpop.trf.xlu0
        %v429 = vpop.trf.xlu0
        %v430 = vpop.trf.xlu0
        %v431 = vpop.trf.xlu0
        %v432 = vpop.trf.xlu0
        %v433 = vpop.trf.xlu0
        %v434 = vpop.trf.xlu0
        %435 = vxpose.xlu0.b32.start [1/16] %v402, 128
        %436 = vxpose.xlu0.b32.cont [2/16] 0.0, 128
        %437 = vxpose.xlu0.b32.cont [3/16] 0.0, 128
        %438 = vxpose.xlu0.b32.cont [4/16] 0.0, 128
        %439 = vxpose.xlu0.b32.cont [5/16] 0.0, 128
        %440 = vxpose.xlu0.b32.cont [6/16] 0.0, 128
        %441 = vxpose.xlu0.b32.cont [7/16] 0.0, 128
        %442 = vxpose.xlu0.b32.cont [8/16] 0.0, 128
        %443 = vxpose.xlu0.b32.cont [9/16] 0.0, 128
        %444 = vxpose.xlu0.b32.cont [10/16] 0.0, 128
        %445 = vxpose.xlu0.b32.cont [11/16] 0.0, 128
        %446 = vxpose.xlu0.b32.cont [12/16] 0.0, 128
        %447 = vxpose.xlu0.b32.cont [13/16] 0.0, 128
        %448 = vxpose.xlu0.b32.cont [14/16] 0.0, 128
        %449 = vxpose.xlu0.b32.cont [15/16] 0.0, 128
        %450 = vxpose.xlu0.b32.end [16/16] 0.0, 128
        %v451 = vpop.trf.xlu0
        %v452 = vpop.trf.xlu0
        %v453 = vpop.trf.xlu0
        %v454 = vpop.trf.xlu0
        %v455 = vpop.trf.xlu0
        %v456 = vpop.trf.xlu0
        %v457 = vpop.trf.xlu0
        %v458 = vpop.trf.xlu0
        %v459 = vpop.trf.xlu0
        %v460 = vpop.trf.xlu0
        %v461 = vpop.trf.xlu0
        %v462 = vpop.trf.xlu0
        %v463 = vpop.trf.xlu0
        %v464 = vpop.trf.xlu0
        %v465 = vpop.trf.xlu0
        %v466 = vpop.trf.xlu0
        %s467 = scalar_lea.vmem [#allocation2], 24
        %vm468 = vcmask 15360
        %469 = vst.msk [vmem:[%s467 + $0x1] sm:$0xff] %vm468, %v419
        %470 = vst.msk [vmem:[%s467 + $0x9] sm:$0xff] %vm468, %v420
        %471 = vst.msk [vmem:[%s467 + $0x19] sm:$0xff] %vm468, %v421
        %472 = vst.msk [vmem:[%s467 + $0x21] sm:$0xff] %vm468, %v422
        %473 = vst.msk [vmem:[%s467 + $0x31] sm:$0xff] %vm468, %v423
        %474 = vst.msk [vmem:[%s467 + $0x39] sm:$0xff] %vm468, %v424
        %475 = vst.msk [vmem:[%s467 + $0x49] sm:$0xff] %vm468, %v425
        %476 = vst.msk [vmem:[%s467 + $0x51] sm:$0xff] %vm468, %v426
        %477 = vst.msk [vmem:[%s467 + $0x61] sm:$0xff] %vm468, %v427
        %478 = vst.msk [vmem:[%s467 + $0x69] sm:$0xff] %vm468, %v428
        %479 = vst.msk [vmem:[%s467 + $0x79] sm:$0xff] %vm468, %v429
        %480 = vst.msk [vmem:[%s467 + $0x81] sm:$0xff] %vm468, %v430
        %481 = vst.msk [vmem:[%s467 + $0x91] sm:$0xff] %vm468, %v431
        %482 = vst.msk [vmem:[%s467 + $0x99] sm:$0xff] %vm468, %v432
        %483 = vst.msk [vmem:[%s467 + $0xa9] sm:$0xff] %vm468, %v433
        %484 = vst.msk [vmem:[%s467 + $0xb1] sm:$0xff] %vm468, %v434
        %485 = vst.msk [vmem:[%s467 + $0xc1] sm:$0xff] %vm468, %v451
        %486 = vst.msk [vmem:[%s467 + $0xc9] sm:$0xff] %vm468, %v452
        %487 = vst.msk [vmem:[%s467 + $0xd9] sm:$0xff] %vm468, %v453
        %488 = vst.msk [vmem:[%s467 + $0xe1] sm:$0xff] %vm468, %v454
        %489 = vst.msk [vmem:[%s467 + $0xf1] sm:$0xff] %vm468, %v455
        %490 = vst.msk [vmem:[%s467 + $0xf9] sm:$0xff] %vm468, %v456
        %491 = vst.msk [vmem:[%s467 + $0x109] sm:$0xff] %vm468, %v457
        %492 = vst.msk [vmem:[%s467 + $0x111] sm:$0xff] %vm468, %v458
        %493 = vst.msk [vmem:[%s467 + $0x121] sm:$0xff] %vm468, %v459
        %494 = vst.msk [vmem:[%s467 + $0x129] sm:$0xff] %vm468, %v460
        %495 = vst.msk [vmem:[%s467 + $0x139] sm:$0xff] %vm468, %v461
        %496 = vst.msk [vmem:[%s467 + $0x141] sm:$0xff] %vm468, %v462
        %497 = vst.msk [vmem:[%s467 + $0x151] sm:$0xff] %vm468, %v463
        %498 = vst.msk [vmem:[%s467 + $0x159] sm:$0xff] %vm468, %v464
        %499 = vst.msk [vmem:[%s467 + $0x169] sm:$0xff] %vm468, %v465
        %500 = vst.msk [vmem:[%s467 + $0x171] sm:$0xff] %vm468, %v466
        %v501 = vld [vmem:[#allocation2] sm:$0xff]
        %v502 = vld [vmem:[#allocation2 + $0x8] sm:$0xff]
        %v503 = vld [vmem:[#allocation2 + $0x10] sm:$0x3]
        %v504 = vld [vmem:[#allocation2 + $0x18] sm:$0xff]
        %v505 = vld [vmem:[#allocation2 + $0x20] sm:$0xff]
        %v506 = vld [vmem:[#allocation2 + $0x28] sm:$0x3]
        %v507 = vld [vmem:[#allocation2 + $0x30] sm:$0xff]
        %v508 = vld [vmem:[#allocation2 + $0x38] sm:$0xff]
        %v509 = vld [vmem:[#allocation2 + $0x40] sm:$0x3]
        %v510 = vld [vmem:[#allocation2 + $0x48] sm:$0xff]
        %v511 = vld [vmem:[#allocation2 + $0x50] sm:$0xff]
        %v512 = vld [vmem:[#allocation2 + $0x58] sm:$0x3]
        %v513 = vld [vmem:[#allocation2 + $0x60] sm:$0xff]
        %v514 = vld [vmem:[#allocation2 + $0x68] sm:$0xff]
        %v515 = vld [vmem:[#allocation2 + $0x70] sm:$0x3]
        %v516 = vld [vmem:[#allocation2 + $0x78] sm:$0xff]
        %v517 = vld [vmem:[#allocation2 + $0x80] sm:$0xff]
        %v518 = vld [vmem:[#allocation2 + $0x88] sm:$0x3]
        %v519 = vld [vmem:[#allocation2 + $0x90] sm:$0xff]
        %v520 = vld [vmem:[#allocation2 + $0x98] sm:$0xff]
        %v521 = vld [vmem:[#allocation2 + $0xa0] sm:$0x3]
        %v522 = vld [vmem:[#allocation2 + $0xa8] sm:$0xff]
        %v523 = vld [vmem:[#allocation2 + $0xb0] sm:$0xff]
        %v524 = vld [vmem:[#allocation2 + $0xb8] sm:$0x3]
        %v525 = vld [vmem:[#allocation2 + $0xc0] sm:$0xff]
        %v526 = vld [vmem:[#allocation2 + $0xc8] sm:$0xff]
        %v527 = vld [vmem:[#allocation2 + $0xd0] sm:$0x3]
        %v528 = vld [vmem:[#allocation2 + $0xd8] sm:$0xff]
        %v529 = vld [vmem:[#allocation2 + $0xe0] sm:$0xff]
        %v530 = vld [vmem:[#allocation2 + $0xe8] sm:$0x3]
        %v531 = vld [vmem:[#allocation2 + $0xf0] sm:$0xff]
        %v532 = vld [vmem:[#allocation2 + $0xf8] sm:$0xff]
        %v533 = vld [vmem:[#allocation2 + $0x100] sm:$0x3]
        %v534 = vld [vmem:[#allocation2 + $0x108] sm:$0xff]
        %v535 = vld [vmem:[#allocation2 + $0x110] sm:$0xff]
        %v536 = vld [vmem:[#allocation2 + $0x118] sm:$0x3]
        %v537 = vld [vmem:[#allocation2 + $0x120] sm:$0xff]
        %v538 = vld [vmem:[#allocation2 + $0x128] sm:$0xff]
        %v539 = vld [vmem:[#allocation2 + $0x130] sm:$0x3]
        %v540 = vld [vmem:[#allocation2 + $0x138] sm:$0xff]
        %v541 = vld [vmem:[#allocation2 + $0x140] sm:$0xff]
        %v542 = vld [vmem:[#allocation2 + $0x148] sm:$0x3]
        %v543 = vld [vmem:[#allocation2 + $0x150] sm:$0xff]
        %v544 = vld [vmem:[#allocation2 + $0x158] sm:$0xff]
        %v545 = vld [vmem:[#allocation2 + $0x160] sm:$0x3]
        %v546 = vld [vmem:[#allocation2 + $0x168] sm:$0xff]
        %v547 = vld [vmem:[#allocation2 + $0x170] sm:$0xff]
        %v548 = vld [vmem:[#allocation2 + $0x178] sm:$0x3]
        %v549 = vld [vmem:[#allocation2 + $0x180] sm:$0xff]
        %v550 = vld [vmem:[#allocation2 + $0x188] sm:$0xff]
        %v551 = vld [vmem:[#allocation2 + $0x190] sm:$0x3]
        %v552 = vld [vmem:[#allocation2 + $0x198] sm:$0xff]
        %v553 = vld [vmem:[#allocation2 + $0x1a0] sm:$0xff]
        %v554 = vld [vmem:[#allocation2 + $0x1a8] sm:$0x3]
        %vm603 = vcmask 1046528
        %v604 = vrot.slane %v501, 1
        %v605 = vrot.slane %v502, 1
        %v606 = vsel %vm603, %v604, %v605
        %v607 = vrot.slane %v503, 1
        %v608 = vsel %vm603, %v605, %v607
        %v609 = vrot.slane %v504, 1
        %v610 = vrot.slane %v505, 1
        %v611 = vsel %vm603, %v609, %v610
        %v612 = vrot.slane %v506, 1
        %v613 = vsel %vm603, %v610, %v612
        %v614 = vrot.slane %v507, 1
        %v615 = vrot.slane %v508, 1
        %v616 = vsel %vm603, %v614, %v615
        %v617 = vrot.slane %v509, 1
        %v618 = vsel %vm603, %v615, %v617
        %v619 = vrot.slane %v510, 1
        %v620 = vrot.slane %v511, 1
        %v621 = vsel %vm603, %v619, %v620
        %v622 = vrot.slane %v512, 1
        %v623 = vsel %vm603, %v620, %v622
        %v624 = vrot.slane %v513, 1
        %v625 = vrot.slane %v514, 1
        %v626 = vsel %vm603, %v624, %v625
        %v627 = vrot.slane %v515, 1
        %v628 = vsel %vm603, %v625, %v627
        %v629 = vrot.slane %v516, 1
        %v630 = vrot.slane %v517, 1
        %v631 = vsel %vm603, %v629, %v630
        %v632 = vrot.slane %v518, 1
        %v633 = vsel %vm603, %v630, %v632
        %v634 = vrot.slane %v519, 1
        %v635 = vrot.slane %v520, 1
        %v636 = vsel %vm603, %v634, %v635
        %v637 = vrot.slane %v521, 1
        %v638 = vsel %vm603, %v635, %v637
        %v639 = vrot.slane %v522, 1
        %v640 = vrot.slane %v523, 1
        %v641 = vsel %vm603, %v639, %v640
        %v642 = vrot.slane %v524, 1
        %v643 = vsel %vm603, %v640, %v642
        %v644 = vrot.slane %v525, 1
        %v645 = vrot.slane %v526, 1
        %v646 = vsel %vm603, %v644, %v645
        %v647 = vrot.slane %v527, 1
        %v648 = vsel %vm603, %v645, %v647
        %v649 = vrot.slane %v528, 1
        %v650 = vrot.slane %v529, 1
        %v651 = vsel %vm603, %v649, %v650
        %v652 = vrot.slane %v530, 1
        %v653 = vsel %vm603, %v650, %v652
        %v654 = vrot.slane %v531, 1
        %v655 = vrot.slane %v532, 1
        %v656 = vsel %vm603, %v654, %v655
        %v657 = vrot.slane %v533, 1
        %v658 = vsel %vm603, %v655, %v657
        %v659 = vrot.slane %v534, 1
        %v660 = vrot.slane %v535, 1
        %v661 = vsel %vm603, %v659, %v660
        %v662 = vrot.slane %v536, 1
        %v663 = vsel %vm603, %v660, %v662
        %v664 = vrot.slane %v537, 1
        %v665 = vrot.slane %v538, 1
        %v666 = vsel %vm603, %v664, %v665
        %v667 = vrot.slane %v539, 1
        %v668 = vsel %vm603, %v665, %v667
        %v669 = vrot.slane %v540, 1
        %v670 = vrot.slane %v541, 1
        %v671 = vsel %vm603, %v669, %v670
        %v672 = vrot.slane %v542, 1
        %v673 = vsel %vm603, %v670, %v672
        %v674 = vrot.slane %v543, 1
        %v675 = vrot.slane %v544, 1
        %v676 = vsel %vm603, %v674, %v675
        %v677 = vrot.slane %v545, 1
        %v678 = vsel %vm603, %v675, %v677
        %v679 = vrot.slane %v546, 1
        %v680 = vrot.slane %v547, 1
        %v681 = vsel %vm603, %v679, %v680
        %v682 = vrot.slane %v548, 1
        %v683 = vsel %vm603, %v680, %v682
        %vm684 = vcmask 1045504
        %v685 = vrot.slane %v501, 2
        %v686 = vrot.slane %v502, 2
        %v687 = vsel %vm684, %v685, %v686
        %v688 = vrot.slane %v503, 2
        %v689 = vsel %vm684, %v686, %v688
        %v690 = vrot.slane %v504, 2
        %v691 = vrot.slane %v505, 2
        %v692 = vsel %vm684, %v690, %v691
        %v693 = vrot.slane %v506, 2
        %v694 = vsel %vm684, %v691, %v693
        %v695 = vrot.slane %v507, 2
        %v696 = vrot.slane %v508, 2
        %v697 = vsel %vm684, %v695, %v696
        %v698 = vrot.slane %v509, 2
        %v699 = vsel %vm684, %v696, %v698
        %v700 = vrot.slane %v510, 2
        %v701 = vrot.slane %v511, 2
        %v702 = vsel %vm684, %v700, %v701
        %v703 = vrot.slane %v512, 2
        %v704 = vsel %vm684, %v701, %v703
        %v705 = vrot.slane %v513, 2
        %v706 = vrot.slane %v514, 2
        %v707 = vsel %vm684, %v705, %v706
        %v708 = vrot.slane %v515, 2
        %v709 = vsel %vm684, %v706, %v708
        %v710 = vrot.slane %v516, 2
        %v711 = vrot.slane %v517, 2
        %v712 = vsel %vm684, %v710, %v711
        %v713 = vrot.slane %v518, 2
        %v714 = vsel %vm684, %v711, %v713
        %v715 = vrot.slane %v519, 2
        %v716 = vrot.slane %v520, 2
        %v717 = vsel %vm684, %v715, %v716
        %v718 = vrot.slane %v521, 2
        %v719 = vsel %vm684, %v716, %v718
        %v720 = vrot.slane %v522, 2
        %v721 = vrot.slane %v523, 2
        %v722 = vsel %vm684, %v720, %v721
        %v723 = vrot.slane %v524, 2
        %v724 = vsel %vm684, %v721, %v723
        %v725 = vrot.slane %v525, 2
        %v726 = vrot.slane %v526, 2
        %v727 = vsel %vm684, %v725, %v726
        %v728 = vrot.slane %v527, 2
        %v729 = vsel %vm684, %v726, %v728
        %v730 = vrot.slane %v528, 2
        %v731 = vrot.slane %v529, 2
        %v732 = vsel %vm684, %v730, %v731
        %v733 = vrot.slane %v530, 2
        %v734 = vsel %vm684, %v731, %v733
        %v735 = vrot.slane %v531, 2
        %v736 = vrot.slane %v532, 2
        %v737 = vsel %vm684, %v735, %v736
        %v738 = vrot.slane %v533, 2
        %v739 = vsel %vm684, %v736, %v738
        %v740 = vrot.slane %v534, 2
        %v741 = vrot.slane %v535, 2
        %v742 = vsel %vm684, %v740, %v741
        %v743 = vrot.slane %v536, 2
        %v744 = vsel %vm684, %v741, %v743
        %v745 = vrot.slane %v537, 2
        %v746 = vrot.slane %v538, 2
        %v747 = vsel %vm684, %v745, %v746
        %v748 = vrot.slane %v539, 2
        %v749 = vsel %vm684, %v746, %v748
        %v750 = vrot.slane %v540, 2
        %v751 = vrot.slane %v541, 2
        %v752 = vsel %vm684, %v750, %v751
        %v753 = vrot.slane %v542, 2
        %v754 = vsel %vm684, %v751, %v753
        %v755 = vrot.slane %v543, 2
        %v756 = vrot.slane %v544, 2
        %v757 = vsel %vm684, %v755, %v756
        %v758 = vrot.slane %v545, 2
        %v759 = vsel %vm684, %v756, %v758
        %v760 = vrot.slane %v546, 2
        %v761 = vrot.slane %v547, 2
        %v762 = vsel %vm684, %v760, %v761
        %v763 = vrot.slane %v548, 2
        %v764 = vsel %vm684, %v761, %v763
        %v768 = vrot.slane %v549, 1
        %v769 = vrot.slane %v550, 1
        %v770 = vsel %vm603, %v768, %v769
        %v771 = vrot.slane %v551, 1
        %v772 = vsel %vm603, %v769, %v771
        %v773 = vrot.slane %v549, 2
        %v774 = vrot.slane %v550, 2
        %v775 = vsel %vm684, %v773, %v774
        %v776 = vrot.slane %v551, 2
        %v777 = vsel %vm684, %v774, %v776
        %v781 = vrot.slane %v552, 1
        %v782 = vrot.slane %v553, 1
        %v783 = vsel %vm603, %v781, %v782
        %v784 = vrot.slane %v554, 1
        %v785 = vsel %vm603, %v782, %v784
        %v786 = vrot.slane %v552, 2
        %v787 = vrot.slane %v553, 2
        %v788 = vsel %vm684, %v786, %v787
        %v789 = vrot.slane %v554, 2
        %v790 = vsel %vm684, %v787, %v789
        %791 = vrot.lane.b32.xlu0 %v606, 2
        %v792 = vpop.permute.xlu0 %791
        %793 = vrot.lane.b32.xlu0 %v608, 2
        %v794 = vpop.permute.xlu0 %793
        %795 = vrot.lane.b32.xlu0 %v611, 2
        %v796 = vpop.permute.xlu0 %795
        %797 = vrot.lane.b32.xlu0 %v613, 2
        %v798 = vpop.permute.xlu0 %797
        %799 = vrot.lane.b32.xlu0 %v616, 2
        %v800 = vpop.permute.xlu0 %799
        %801 = vrot.lane.b32.xlu0 %v618, 2
        %v802 = vpop.permute.xlu0 %801
        %803 = vrot.lane.b32.xlu0 %v621, 2
        %v804 = vpop.permute.xlu0 %803
        %805 = vrot.lane.b32.xlu0 %v623, 2
        %v806 = vpop.permute.xlu0 %805
        %807 = vrot.lane.b32.xlu0 %v626, 2
        %v808 = vpop.permute.xlu0 %807
        %809 = vrot.lane.b32.xlu0 %v628, 2
        %v810 = vpop.permute.xlu0 %809
        %811 = vrot.lane.b32.xlu0 %v631, 2
        %v812 = vpop.permute.xlu0 %811
        %813 = vrot.lane.b32.xlu0 %v633, 2
        %v814 = vpop.permute.xlu0 %813
        %815 = vrot.lane.b32.xlu0 %v636, 2
        %v816 = vpop.permute.xlu0 %815
        %817 = vrot.lane.b32.xlu0 %v638, 2
        %v818 = vpop.permute.xlu0 %817
        %819 = vrot.lane.b32.xlu0 %v641, 2
        %v820 = vpop.permute.xlu0 %819
        %821 = vrot.lane.b32.xlu0 %v643, 2
        %v822 = vpop.permute.xlu0 %821
        %823 = vrot.lane.b32.xlu0 %v646, 2
        %v824 = vpop.permute.xlu0 %823
        %825 = vrot.lane.b32.xlu0 %v648, 2
        %v826 = vpop.permute.xlu0 %825
        %827 = vrot.lane.b32.xlu0 %v651, 2
        %v828 = vpop.permute.xlu0 %827
        %829 = vrot.lane.b32.xlu0 %v653, 2
        %v830 = vpop.permute.xlu0 %829
        %831 = vrot.lane.b32.xlu0 %v656, 2
        %v832 = vpop.permute.xlu0 %831
        %833 = vrot.lane.b32.xlu0 %v658, 2
        %v834 = vpop.permute.xlu0 %833
        %835 = vrot.lane.b32.xlu0 %v661, 2
        %v836 = vpop.permute.xlu0 %835
        %837 = vrot.lane.b32.xlu0 %v663, 2
        %v838 = vpop.permute.xlu0 %837
        %839 = vrot.lane.b32.xlu0 %v666, 2
        %v840 = vpop.permute.xlu0 %839
        %841 = vrot.lane.b32.xlu0 %v668, 2
        %v842 = vpop.permute.xlu0 %841
        %843 = vrot.lane.b32.xlu0 %v671, 2
        %v844 = vpop.permute.xlu0 %843
        %845 = vrot.lane.b32.xlu0 %v673, 2
        %v846 = vpop.permute.xlu0 %845
        %847 = vrot.lane.b32.xlu0 %v676, 2
        %v848 = vpop.permute.xlu0 %847
        %849 = vrot.lane.b32.xlu0 %v678, 2
        %v850 = vpop.permute.xlu0 %849
        %851 = vrot.lane.b32.xlu0 %v681, 2
        %v852 = vpop.permute.xlu0 %851
        %853 = vrot.lane.b32.xlu0 %v683, 2
        %v854 = vpop.permute.xlu0 %853
        %887 = vrot.lane.b32.xlu0 %v687, 4
        %v888 = vpop.permute.xlu0 %887
        %889 = vrot.lane.b32.xlu0 %v689, 4
        %v890 = vpop.permute.xlu0 %889
        %891 = vrot.lane.b32.xlu0 %v692, 4
        %v892 = vpop.permute.xlu0 %891
        %893 = vrot.lane.b32.xlu0 %v694, 4
        %v894 = vpop.permute.xlu0 %893
        %895 = vrot.lane.b32.xlu0 %v697, 4
        %v896 = vpop.permute.xlu0 %895
        %897 = vrot.lane.b32.xlu0 %v699, 4
        %v898 = vpop.permute.xlu0 %897
        %899 = vrot.lane.b32.xlu0 %v702, 4
        %v900 = vpop.permute.xlu0 %899
        %901 = vrot.lane.b32.xlu0 %v704, 4
        %v902 = vpop.permute.xlu0 %901
        %903 = vrot.lane.b32.xlu0 %v707, 4
        %v904 = vpop.permute.xlu0 %903
        %905 = vrot.lane.b32.xlu0 %v709, 4
        %v906 = vpop.permute.xlu0 %905
        %907 = vrot.lane.b32.xlu0 %v712, 4
        %v908 = vpop.permute.xlu0 %907
        %909 = vrot.lane.b32.xlu0 %v714, 4
        %v910 = vpop.permute.xlu0 %909
        %911 = vrot.lane.b32.xlu0 %v717, 4
        %v912 = vpop.permute.xlu0 %911
        %913 = vrot.lane.b32.xlu0 %v719, 4
        %v914 = vpop.permute.xlu0 %913
        %915 = vrot.lane.b32.xlu0 %v722, 4
        %v916 = vpop.permute.xlu0 %915
        %917 = vrot.lane.b32.xlu0 %v724, 4
        %v918 = vpop.permute.xlu0 %917
        %919 = vrot.lane.b32.xlu0 %v727, 4
        %v920 = vpop.permute.xlu0 %919
        %921 = vrot.lane.b32.xlu0 %v729, 4
        %v922 = vpop.permute.xlu0 %921
        %923 = vrot.lane.b32.xlu0 %v732, 4
        %v924 = vpop.permute.xlu0 %923
        %925 = vrot.lane.b32.xlu0 %v734, 4
        %v926 = vpop.permute.xlu0 %925
        %927 = vrot.lane.b32.xlu0 %v737, 4
        %v928 = vpop.permute.xlu0 %927
        %929 = vrot.lane.b32.xlu0 %v739, 4
        %v930 = vpop.permute.xlu0 %929
        %931 = vrot.lane.b32.xlu0 %v742, 4
        %v932 = vpop.permute.xlu0 %931
        %933 = vrot.lane.b32.xlu0 %v744, 4
        %v934 = vpop.permute.xlu0 %933
        %935 = vrot.lane.b32.xlu0 %v747, 4
        %v936 = vpop.permute.xlu0 %935
        %937 = vrot.lane.b32.xlu0 %v749, 4
        %v938 = vpop.permute.xlu0 %937
        %939 = vrot.lane.b32.xlu0 %v752, 4
        %v940 = vpop.permute.xlu0 %939
        %941 = vrot.lane.b32.xlu0 %v754, 4
        %v942 = vpop.permute.xlu0 %941
        %943 = vrot.lane.b32.xlu0 %v757, 4
        %v944 = vpop.permute.xlu0 %943
        %945 = vrot.lane.b32.xlu0 %v759, 4
        %v946 = vpop.permute.xlu0 %945
        %947 = vrot.lane.b32.xlu0 %v762, 4
        %v948 = vpop.permute.xlu0 %947
        %949 = vrot.lane.b32.xlu0 %v764, 4
        %v950 = vpop.permute.xlu0 %949
        %983 = vrot.lane.b32.xlu0 %v504, 6
        %v984 = vpop.permute.xlu0 %983
        %985 = vrot.lane.b32.xlu0 %v505, 6
        %v986 = vpop.permute.xlu0 %985
        %987 = vrot.lane.b32.xlu0 %v507, 6
        %v988 = vpop.permute.xlu0 %987
        %989 = vrot.lane.b32.xlu0 %v508, 6
        %v990 = vpop.permute.xlu0 %989
        %991 = vrot.lane.b32.xlu0 %v510, 6
        %v992 = vpop.permute.xlu0 %991
        %993 = vrot.lane.b32.xlu0 %v511, 6
        %v994 = vpop.permute.xlu0 %993
        %995 = vrot.lane.b32.xlu0 %v513, 6
        %v996 = vpop.permute.xlu0 %995
        %997 = vrot.lane.b32.xlu0 %v514, 6
        %v998 = vpop.permute.xlu0 %997
        %999 = vrot.lane.b32.xlu0 %v516, 6
        %v1000 = vpop.permute.xlu0 %999
        %1001 = vrot.lane.b32.xlu0 %v517, 6
        %v1002 = vpop.permute.xlu0 %1001
        %1003 = vrot.lane.b32.xlu0 %v519, 6
        %v1004 = vpop.permute.xlu0 %1003
        %1005 = vrot.lane.b32.xlu0 %v520, 6
        %v1006 = vpop.permute.xlu0 %1005
        %1007 = vrot.lane.b32.xlu0 %v522, 6
        %v1008 = vpop.permute.xlu0 %1007
        %1009 = vrot.lane.b32.xlu0 %v523, 6
        %v1010 = vpop.permute.xlu0 %1009
        %1011 = vrot.lane.b32.xlu0 %v525, 6
        %v1012 = vpop.permute.xlu0 %1011
        %1013 = vrot.lane.b32.xlu0 %v526, 6
        %v1014 = vpop.permute.xlu0 %1013
        %1015 = vrot.lane.b32.xlu0 %v528, 6
        %v1016 = vpop.permute.xlu0 %1015
        %1017 = vrot.lane.b32.xlu0 %v529, 6
        %v1018 = vpop.permute.xlu0 %1017
        %1019 = vrot.lane.b32.xlu0 %v531, 6
        %v1020 = vpop.permute.xlu0 %1019
        %1021 = vrot.lane.b32.xlu0 %v532, 6
        %v1022 = vpop.permute.xlu0 %1021
        %1023 = vrot.lane.b32.xlu0 %v534, 6
        %v1024 = vpop.permute.xlu0 %1023
        %1025 = vrot.lane.b32.xlu0 %v535, 6
        %v1026 = vpop.permute.xlu0 %1025
        %1027 = vrot.lane.b32.xlu0 %v537, 6
        %v1028 = vpop.permute.xlu0 %1027
        %1029 = vrot.lane.b32.xlu0 %v538, 6
        %v1030 = vpop.permute.xlu0 %1029
        %1031 = vrot.lane.b32.xlu0 %v540, 6
        %v1032 = vpop.permute.xlu0 %1031
        %1033 = vrot.lane.b32.xlu0 %v541, 6
        %v1034 = vpop.permute.xlu0 %1033
        %1035 = vrot.lane.b32.xlu0 %v543, 6
        %v1036 = vpop.permute.xlu0 %1035
        %1037 = vrot.lane.b32.xlu0 %v544, 6
        %v1038 = vpop.permute.xlu0 %1037
        %1039 = vrot.lane.b32.xlu0 %v546, 6
        %v1040 = vpop.permute.xlu0 %1039
        %1041 = vrot.lane.b32.xlu0 %v547, 6
        %v1042 = vpop.permute.xlu0 %1041
        %1043 = vrot.lane.b32.xlu0 %v549, 6
        %v1044 = vpop.permute.xlu0 %1043
        %1045 = vrot.lane.b32.xlu0 %v550, 6
        %v1046 = vpop.permute.xlu0 %1045
        %1079 = vrot.lane.b32.xlu0 %v611, 8
        %v1080 = vpop.permute.xlu0 %1079
        %1081 = vrot.lane.b32.xlu0 %v613, 8
        %v1082 = vpop.permute.xlu0 %1081
        %1083 = vrot.lane.b32.xlu0 %v616, 8
        %v1084 = vpop.permute.xlu0 %1083
        %1085 = vrot.lane.b32.xlu0 %v618, 8
        %v1086 = vpop.permute.xlu0 %1085
        %1087 = vrot.lane.b32.xlu0 %v621, 8
        %v1088 = vpop.permute.xlu0 %1087
        %1089 = vrot.lane.b32.xlu0 %v623, 8
        %v1090 = vpop.permute.xlu0 %1089
        %1091 = vrot.lane.b32.xlu0 %v626, 8
        %v1092 = vpop.permute.xlu0 %1091
        %1093 = vrot.lane.b32.xlu0 %v628, 8
        %v1094 = vpop.permute.xlu0 %1093
        %1095 = vrot.lane.b32.xlu0 %v631, 8
        %v1096 = vpop.permute.xlu0 %1095
        %1097 = vrot.lane.b32.xlu0 %v633, 8
        %v1098 = vpop.permute.xlu0 %1097
        %1099 = vrot.lane.b32.xlu0 %v636, 8
        %v1100 = vpop.permute.xlu0 %1099
        %1101 = vrot.lane.b32.xlu0 %v638, 8
        %v1102 = vpop.permute.xlu0 %1101
        %1103 = vrot.lane.b32.xlu0 %v641, 8
        %v1104 = vpop.permute.xlu0 %1103
        %1105 = vrot.lane.b32.xlu0 %v643, 8
        %v1106 = vpop.permute.xlu0 %1105
        %1107 = vrot.lane.b32.xlu0 %v646, 8
        %v1108 = vpop.permute.xlu0 %1107
        %1109 = vrot.lane.b32.xlu0 %v648, 8
        %v1110 = vpop.permute.xlu0 %1109
        %1111 = vrot.lane.b32.xlu0 %v651, 8
        %v1112 = vpop.permute.xlu0 %1111
        %1113 = vrot.lane.b32.xlu0 %v653, 8
        %v1114 = vpop.permute.xlu0 %1113
        %1115 = vrot.lane.b32.xlu0 %v656, 8
        %v1116 = vpop.permute.xlu0 %1115
        %1117 = vrot.lane.b32.xlu0 %v658, 8
        %v1118 = vpop.permute.xlu0 %1117
        %1119 = vrot.lane.b32.xlu0 %v661, 8
        %v1120 = vpop.permute.xlu0 %1119
        %1121 = vrot.lane.b32.xlu0 %v663, 8
        %v1122 = vpop.permute.xlu0 %1121
        %1123 = vrot.lane.b32.xlu0 %v666, 8
        %v1124 = vpop.permute.xlu0 %1123
        %1125 = vrot.lane.b32.xlu0 %v668, 8
        %v1126 = vpop.permute.xlu0 %1125
        %1127 = vrot.lane.b32.xlu0 %v671, 8
        %v1128 = vpop.permute.xlu0 %1127
        %1129 = vrot.lane.b32.xlu0 %v673, 8
        %v1130 = vpop.permute.xlu0 %1129
        %1131 = vrot.lane.b32.xlu0 %v676, 8
        %v1132 = vpop.permute.xlu0 %1131
        %1133 = vrot.lane.b32.xlu0 %v678, 8
        %v1134 = vpop.permute.xlu0 %1133
        %1135 = vrot.lane.b32.xlu0 %v681, 8
        %v1136 = vpop.permute.xlu0 %1135
        %1137 = vrot.lane.b32.xlu0 %v683, 8
        %v1138 = vpop.permute.xlu0 %1137
        %1139 = vrot.lane.b32.xlu0 %v770, 8
        %v1140 = vpop.permute.xlu0 %1139
        %1141 = vrot.lane.b32.xlu0 %v772, 8
        %v1142 = vpop.permute.xlu0 %1141
        %1175 = vrot.lane.b32.xlu0 %v692, 10
        %v1176 = vpop.permute.xlu0 %1175
        %1177 = vrot.lane.b32.xlu0 %v694, 10
        %v1178 = vpop.permute.xlu0 %1177
        %1179 = vrot.lane.b32.xlu0 %v697, 10
        %v1180 = vpop.permute.xlu0 %1179
        %1181 = vrot.lane.b32.xlu0 %v699, 10
        %v1182 = vpop.permute.xlu0 %1181
        %1183 = vrot.lane.b32.xlu0 %v702, 10
        %v1184 = vpop.permute.xlu0 %1183
        %1185 = vrot.lane.b32.xlu0 %v704, 10
        %v1186 = vpop.permute.xlu0 %1185
        %1187 = vrot.lane.b32.xlu0 %v707, 10
        %v1188 = vpop.permute.xlu0 %1187
        %1189 = vrot.lane.b32.xlu0 %v709, 10
        %v1190 = vpop.permute.xlu0 %1189
        %1191 = vrot.lane.b32.xlu0 %v712, 10
        %v1192 = vpop.permute.xlu0 %1191
        %1193 = vrot.lane.b32.xlu0 %v714, 10
        %v1194 = vpop.permute.xlu0 %1193
        %1195 = vrot.lane.b32.xlu0 %v717, 10
        %v1196 = vpop.permute.xlu0 %1195
        %1197 = vrot.lane.b32.xlu0 %v719, 10
        %v1198 = vpop.permute.xlu0 %1197
        %1199 = vrot.lane.b32.xlu0 %v722, 10
        %v1200 = vpop.permute.xlu0 %1199
        %1201 = vrot.lane.b32.xlu0 %v724, 10
        %v1202 = vpop.permute.xlu0 %1201
        %1203 = vrot.lane.b32.xlu0 %v727, 10
        %v1204 = vpop.permute.xlu0 %1203
        %1205 = vrot.lane.b32.xlu0 %v729, 10
        %v1206 = vpop.permute.xlu0 %1205
        %1207 = vrot.lane.b32.xlu0 %v732, 10
        %v1208 = vpop.permute.xlu0 %1207
        %1209 = vrot.lane.b32.xlu0 %v734, 10
        %v1210 = vpop.permute.xlu0 %1209
        %1211 = vrot.lane.b32.xlu0 %v737, 10
        %v1212 = vpop.permute.xlu0 %1211
        %1213 = vrot.lane.b32.xlu0 %v739, 10
        %v1214 = vpop.permute.xlu0 %1213
        %1215 = vrot.lane.b32.xlu0 %v742, 10
        %v1216 = vpop.permute.xlu0 %1215
        %1217 = vrot.lane.b32.xlu0 %v744, 10
        %v1218 = vpop.permute.xlu0 %1217
        %1219 = vrot.lane.b32.xlu0 %v747, 10
        %v1220 = vpop.permute.xlu0 %1219
        %1221 = vrot.lane.b32.xlu0 %v749, 10
        %v1222 = vpop.permute.xlu0 %1221
        %1223 = vrot.lane.b32.xlu0 %v752, 10
        %v1224 = vpop.permute.xlu0 %1223
        %1225 = vrot.lane.b32.xlu0 %v754, 10
        %v1226 = vpop.permute.xlu0 %1225
        %1227 = vrot.lane.b32.xlu0 %v757, 10
        %v1228 = vpop.permute.xlu0 %1227
        %1229 = vrot.lane.b32.xlu0 %v759, 10
        %v1230 = vpop.permute.xlu0 %1229
        %1231 = vrot.lane.b32.xlu0 %v762, 10
        %v1232 = vpop.permute.xlu0 %1231
        %1233 = vrot.lane.b32.xlu0 %v764, 10
        %v1234 = vpop.permute.xlu0 %1233
        %1235 = vrot.lane.b32.xlu0 %v775, 10
        %v1236 = vpop.permute.xlu0 %1235
        %1237 = vrot.lane.b32.xlu0 %v777, 10
        %v1238 = vpop.permute.xlu0 %1237
        %1271 = vrot.lane.b32.xlu0 %v507, 12
        %v1272 = vpop.permute.xlu0 %1271
        %1273 = vrot.lane.b32.xlu0 %v508, 12
        %v1274 = vpop.permute.xlu0 %1273
        %1275 = vrot.lane.b32.xlu0 %v510, 12
        %v1276 = vpop.permute.xlu0 %1275
        %1277 = vrot.lane.b32.xlu0 %v511, 12
        %v1278 = vpop.permute.xlu0 %1277
        %1279 = vrot.lane.b32.xlu0 %v513, 12
        %v1280 = vpop.permute.xlu0 %1279
        %1281 = vrot.lane.b32.xlu0 %v514, 12
        %v1282 = vpop.permute.xlu0 %1281
        %1283 = vrot.lane.b32.xlu0 %v516, 12
        %v1284 = vpop.permute.xlu0 %1283
        %1285 = vrot.lane.b32.xlu0 %v517, 12
        %v1286 = vpop.permute.xlu0 %1285
        %1287 = vrot.lane.b32.xlu0 %v519, 12
        %v1288 = vpop.permute.xlu0 %1287
        %1289 = vrot.lane.b32.xlu0 %v520, 12
        %v1290 = vpop.permute.xlu0 %1289
        %1291 = vrot.lane.b32.xlu0 %v522, 12
        %v1292 = vpop.permute.xlu0 %1291
        %1293 = vrot.lane.b32.xlu0 %v523, 12
        %v1294 = vpop.permute.xlu0 %1293
        %1295 = vrot.lane.b32.xlu0 %v525, 12
        %v1296 = vpop.permute.xlu0 %1295
        %1297 = vrot.lane.b32.xlu0 %v526, 12
        %v1298 = vpop.permute.xlu0 %1297
        %1299 = vrot.lane.b32.xlu0 %v528, 12
        %v1300 = vpop.permute.xlu0 %1299
        %1301 = vrot.lane.b32.xlu0 %v529, 12
        %v1302 = vpop.permute.xlu0 %1301
        %1303 = vrot.lane.b32.xlu0 %v531, 12
        %v1304 = vpop.permute.xlu0 %1303
        %1305 = vrot.lane.b32.xlu0 %v532, 12
        %v1306 = vpop.permute.xlu0 %1305
        %1307 = vrot.lane.b32.xlu0 %v534, 12
        %v1308 = vpop.permute.xlu0 %1307
        %1309 = vrot.lane.b32.xlu0 %v535, 12
        %v1310 = vpop.permute.xlu0 %1309
        %1311 = vrot.lane.b32.xlu0 %v537, 12
        %v1312 = vpop.permute.xlu0 %1311
        %1313 = vrot.lane.b32.xlu0 %v538, 12
        %v1314 = vpop.permute.xlu0 %1313
        %1315 = vrot.lane.b32.xlu0 %v540, 12
        %v1316 = vpop.permute.xlu0 %1315
        %1317 = vrot.lane.b32.xlu0 %v541, 12
        %v1318 = vpop.permute.xlu0 %1317
        %1319 = vrot.lane.b32.xlu0 %v543, 12
        %v1320 = vpop.permute.xlu0 %1319
        %1321 = vrot.lane.b32.xlu0 %v544, 12
        %v1322 = vpop.permute.xlu0 %1321
        %1323 = vrot.lane.b32.xlu0 %v546, 12
        %v1324 = vpop.permute.xlu0 %1323
        %1325 = vrot.lane.b32.xlu0 %v547, 12
        %v1326 = vpop.permute.xlu0 %1325
        %1327 = vrot.lane.b32.xlu0 %v549, 12
        %v1328 = vpop.permute.xlu0 %1327
        %1329 = vrot.lane.b32.xlu0 %v550, 12
        %v1330 = vpop.permute.xlu0 %1329
        %1331 = vrot.lane.b32.xlu0 %v552, 12
        %v1332 = vpop.permute.xlu0 %1331
        %1333 = vrot.lane.b32.xlu0 %v553, 12
        %v1334 = vpop.permute.xlu0 %1333
        %1367 = vrot.lane.b32.xlu0 %v616, 14
        %v1368 = vpop.permute.xlu0 %1367
        %1369 = vrot.lane.b32.xlu0 %v618, 14
        %v1370 = vpop.permute.xlu0 %1369
        %1371 = vrot.lane.b32.xlu0 %v621, 14
        %v1372 = vpop.permute.xlu0 %1371
        %1373 = vrot.lane.b32.xlu0 %v623, 14
        %v1374 = vpop.permute.xlu0 %1373
        %1375 = vrot.lane.b32.xlu0 %v626, 14
        %v1376 = vpop.permute.xlu0 %1375
        %1377 = vrot.lane.b32.xlu0 %v628, 14
        %v1378 = vpop.permute.xlu0 %1377
        %1379 = vrot.lane.b32.xlu0 %v631, 14
        %v1380 = vpop.permute.xlu0 %1379
        %1381 = vrot.lane.b32.xlu0 %v633, 14
        %v1382 = vpop.permute.xlu0 %1381
        %1383 = vrot.lane.b32.xlu0 %v636, 14
        %v1384 = vpop.permute.xlu0 %1383
        %1385 = vrot.lane.b32.xlu0 %v638, 14
        %v1386 = vpop.permute.xlu0 %1385
        %1387 = vrot.lane.b32.xlu0 %v641, 14
        %v1388 = vpop.permute.xlu0 %1387
        %1389 = vrot.lane.b32.xlu0 %v643, 14
        %v1390 = vpop.permute.xlu0 %1389
        %1391 = vrot.lane.b32.xlu0 %v646, 14
        %v1392 = vpop.permute.xlu0 %1391
        %1393 = vrot.lane.b32.xlu0 %v648, 14
        %v1394 = vpop.permute.xlu0 %1393
        %1395 = vrot.lane.b32.xlu0 %v651, 14
        %v1396 = vpop.permute.xlu0 %1395
        %1397 = vrot.lane.b32.xlu0 %v653, 14
        %v1398 = vpop.permute.xlu0 %1397
        %1399 = vrot.lane.b32.xlu0 %v656, 14
        %v1400 = vpop.permute.xlu0 %1399
        %1401 = vrot.lane.b32.xlu0 %v658, 14
        %v1402 = vpop.permute.xlu0 %1401
        %1403 = vrot.lane.b32.xlu0 %v661, 14
        %v1404 = vpop.permute.xlu0 %1403
        %1405 = vrot.lane.b32.xlu0 %v663, 14
        %v1406 = vpop.permute.xlu0 %1405
        %1407 = vrot.lane.b32.xlu0 %v666, 14
        %v1408 = vpop.permute.xlu0 %1407
        %1409 = vrot.lane.b32.xlu0 %v668, 14
        %v1410 = vpop.permute.xlu0 %1409
        %1411 = vrot.lane.b32.xlu0 %v671, 14
        %v1412 = vpop.permute.xlu0 %1411
        %1413 = vrot.lane.b32.xlu0 %v673, 14
        %v1414 = vpop.permute.xlu0 %1413
        %1415 = vrot.lane.b32.xlu0 %v676, 14
        %v1416 = vpop.permute.xlu0 %1415
        %1417 = vrot.lane.b32.xlu0 %v678, 14
        %v1418 = vpop.permute.xlu0 %1417
        %1419 = vrot.lane.b32.xlu0 %v681, 14
        %v1420 = vpop.permute.xlu0 %1419
        %1421 = vrot.lane.b32.xlu0 %v683, 14
        %v1422 = vpop.permute.xlu0 %1421
        %1423 = vrot.lane.b32.xlu0 %v770, 14
        %v1424 = vpop.permute.xlu0 %1423
        %1425 = vrot.lane.b32.xlu0 %v772, 14
        %v1426 = vpop.permute.xlu0 %1425
        %1427 = vrot.lane.b32.xlu0 %v783, 14
        %v1428 = vpop.permute.xlu0 %1427
        %1429 = vrot.lane.b32.xlu0 %v785, 14
        %v1430 = vpop.permute.xlu0 %1429
        %1463 = vrot.lane.b32.xlu0 %v697, 16
        %v1464 = vpop.permute.xlu0 %1463
        %1465 = vrot.lane.b32.xlu0 %v699, 16
        %v1466 = vpop.permute.xlu0 %1465
        %1467 = vrot.lane.b32.xlu0 %v702, 16
        %v1468 = vpop.permute.xlu0 %1467
        %1469 = vrot.lane.b32.xlu0 %v704, 16
        %v1470 = vpop.permute.xlu0 %1469
        %1471 = vrot.lane.b32.xlu0 %v707, 16
        %v1472 = vpop.permute.xlu0 %1471
        %1473 = vrot.lane.b32.xlu0 %v709, 16
        %v1474 = vpop.permute.xlu0 %1473
        %1475 = vrot.lane.b32.xlu0 %v712, 16
        %v1476 = vpop.permute.xlu0 %1475
        %1477 = vrot.lane.b32.xlu0 %v714, 16
        %v1478 = vpop.permute.xlu0 %1477
        %1479 = vrot.lane.b32.xlu0 %v717, 16
        %v1480 = vpop.permute.xlu0 %1479
        %1481 = vrot.lane.b32.xlu0 %v719, 16
        %v1482 = vpop.permute.xlu0 %1481
        %1483 = vrot.lane.b32.xlu0 %v722, 16
        %v1484 = vpop.permute.xlu0 %1483
        %1485 = vrot.lane.b32.xlu0 %v724, 16
        %v1486 = vpop.permute.xlu0 %1485
        %1487 = vrot.lane.b32.xlu0 %v727, 16
        %v1488 = vpop.permute.xlu0 %1487
        %1489 = vrot.lane.b32.xlu0 %v729, 16
        %v1490 = vpop.permute.xlu0 %1489
        %1491 = vrot.lane.b32.xlu0 %v732, 16
        %v1492 = vpop.permute.xlu0 %1491
        %1493 = vrot.lane.b32.xlu0 %v734, 16
        %v1494 = vpop.permute.xlu0 %1493
        %1495 = vrot.lane.b32.xlu0 %v737, 16
        %v1496 = vpop.permute.xlu0 %1495
        %1497 = vrot.lane.b32.xlu0 %v739, 16
        %v1498 = vpop.permute.xlu0 %1497
        %1499 = vrot.lane.b32.xlu0 %v742, 16
        %v1500 = vpop.permute.xlu0 %1499
        %1501 = vrot.lane.b32.xlu0 %v744, 16
        %v1502 = vpop.permute.xlu0 %1501
        %1503 = vrot.lane.b32.xlu0 %v747, 16
        %v1504 = vpop.permute.xlu0 %1503
        %1505 = vrot.lane.b32.xlu0 %v749, 16
        %v1506 = vpop.permute.xlu0 %1505
        %1507 = vrot.lane.b32.xlu0 %v752, 16
        %v1508 = vpop.permute.xlu0 %1507
        %1509 = vrot.lane.b32.xlu0 %v754, 16
        %v1510 = vpop.permute.xlu0 %1509
        %1511 = vrot.lane.b32.xlu0 %v757, 16
        %v1512 = vpop.permute.xlu0 %1511
        %1513 = vrot.lane.b32.xlu0 %v759, 16
        %v1514 = vpop.permute.xlu0 %1513
        %1515 = vrot.lane.b32.xlu0 %v762, 16
        %v1516 = vpop.permute.xlu0 %1515
        %1517 = vrot.lane.b32.xlu0 %v764, 16
        %v1518 = vpop.permute.xlu0 %1517
        %1519 = vrot.lane.b32.xlu0 %v775, 16
        %v1520 = vpop.permute.xlu0 %1519
        %1521 = vrot.lane.b32.xlu0 %v777, 16
        %v1522 = vpop.permute.xlu0 %1521
        %1523 = vrot.lane.b32.xlu0 %v788, 16
        %v1524 = vpop.permute.xlu0 %1523
        %1525 = vrot.lane.b32.xlu0 %v790, 16
        %v1526 = vpop.permute.xlu0 %1525
        %v1559 = vsel %vm468, %v501, %v792
        %v1560 = vsel %vm468, %v502, %v794
        %v1561 = vsel %vm468, %v504, %v796
        %v1562 = vsel %vm468, %v505, %v798
        %v1563 = vsel %vm468, %v507, %v800
        %v1564 = vsel %vm468, %v508, %v802
        %v1565 = vsel %vm468, %v510, %v804
        %v1566 = vsel %vm468, %v511, %v806
        %v1567 = vsel %vm468, %v513, %v808
        %v1568 = vsel %vm468, %v514, %v810
        %v1569 = vsel %vm468, %v516, %v812
        %v1570 = vsel %vm468, %v517, %v814
        %v1571 = vsel %vm468, %v519, %v816
        %v1572 = vsel %vm468, %v520, %v818
        %v1573 = vsel %vm468, %v522, %v820
        %v1574 = vsel %vm468, %v523, %v822
        %v1575 = vsel %vm468, %v525, %v824
        %v1576 = vsel %vm468, %v526, %v826
        %v1577 = vsel %vm468, %v528, %v828
        %v1578 = vsel %vm468, %v529, %v830
        %v1579 = vsel %vm468, %v531, %v832
        %v1580 = vsel %vm468, %v532, %v834
        %v1581 = vsel %vm468, %v534, %v836
        %v1582 = vsel %vm468, %v535, %v838
        %v1583 = vsel %vm468, %v537, %v840
        %v1584 = vsel %vm468, %v538, %v842
        %v1585 = vsel %vm468, %v540, %v844
        %v1586 = vsel %vm468, %v541, %v846
        %v1587 = vsel %vm468, %v543, %v848
        %v1588 = vsel %vm468, %v544, %v850
        %v1589 = vsel %vm468, %v546, %v852
        %v1590 = vsel %vm468, %v547, %v854
        %vm1591 = vcmask 31744
        %v1592 = vsel %vm1591, %v1559, %v888
        %v1593 = vsel %vm1591, %v1560, %v890
        %v1594 = vsel %vm1591, %v1561, %v892
        %v1595 = vsel %vm1591, %v1562, %v894
        %v1596 = vsel %vm1591, %v1563, %v896
        %v1597 = vsel %vm1591, %v1564, %v898
        %v1598 = vsel %vm1591, %v1565, %v900
        %v1599 = vsel %vm1591, %v1566, %v902
        %v1600 = vsel %vm1591, %v1567, %v904
        %v1601 = vsel %vm1591, %v1568, %v906
        %v1602 = vsel %vm1591, %v1569, %v908
        %v1603 = vsel %vm1591, %v1570, %v910
        %v1604 = vsel %vm1591, %v1571, %v912
        %v1605 = vsel %vm1591, %v1572, %v914
        %v1606 = vsel %vm1591, %v1573, %v916
        %v1607 = vsel %vm1591, %v1574, %v918
        %v1608 = vsel %vm1591, %v1575, %v920
        %v1609 = vsel %vm1591, %v1576, %v922
        %v1610 = vsel %vm1591, %v1577, %v924
        %v1611 = vsel %vm1591, %v1578, %v926
        %v1612 = vsel %vm1591, %v1579, %v928
        %v1613 = vsel %vm1591, %v1580, %v930
        %v1614 = vsel %vm1591, %v1581, %v932
        %v1615 = vsel %vm1591, %v1582, %v934
        %v1616 = vsel %vm1591, %v1583, %v936
        %v1617 = vsel %vm1591, %v1584, %v938
        %v1618 = vsel %vm1591, %v1585, %v940
        %v1619 = vsel %vm1591, %v1586, %v942
        %v1620 = vsel %vm1591, %v1587, %v944
        %v1621 = vsel %vm1591, %v1588, %v946
        %v1622 = vsel %vm1591, %v1589, %v948
        %v1623 = vsel %vm1591, %v1590, %v950
        %vm1624 = vcmask 48128
        %v1625 = vsel %vm1624, %v1592, %v984
        %v1626 = vsel %vm1624, %v1593, %v986
        %v1627 = vsel %vm1624, %v1594, %v988
        %v1628 = vsel %vm1624, %v1595, %v990
        %v1629 = vsel %vm1624, %v1596, %v992
        %v1630 = vsel %vm1624, %v1597, %v994
        %v1631 = vsel %vm1624, %v1598, %v996
        %v1632 = vsel %vm1624, %v1599, %v998
        %v1633 = vsel %vm1624, %v1600, %v1000
        %v1634 = vsel %vm1624, %v1601, %v1002
        %v1635 = vsel %vm1624, %v1602, %v1004
        %v1636 = vsel %vm1624, %v1603, %v1006
        %v1637 = vsel %vm1624, %v1604, %v1008
        %v1638 = vsel %vm1624, %v1605, %v1010
        %v1639 = vsel %vm1624, %v1606, %v1012
        %v1640 = vsel %vm1624, %v1607, %v1014
        %v1641 = vsel %vm1624, %v1608, %v1016
        %v1642 = vsel %vm1624, %v1609, %v1018
        %v1643 = vsel %vm1624, %v1610, %v1020
        %v1644 = vsel %vm1624, %v1611, %v1022
        %v1645 = vsel %vm1624, %v1612, %v1024
        %v1646 = vsel %vm1624, %v1613, %v1026
        %v1647 = vsel %vm1624, %v1614, %v1028
        %v1648 = vsel %vm1624, %v1615, %v1030
        %v1649 = vsel %vm1624, %v1616, %v1032
        %v1650 = vsel %vm1624, %v1617, %v1034
        %v1651 = vsel %vm1624, %v1618, %v1036
        %v1652 = vsel %vm1624, %v1619, %v1038
        %v1653 = vsel %vm1624, %v1620, %v1040
        %v1654 = vsel %vm1624, %v1621, %v1042
        %v1655 = vsel %vm1624, %v1622, %v1044
        %v1656 = vsel %vm1624, %v1623, %v1046
        %vm1657 = vcmask 64512
        %v1658 = vsel %vm1657, %v1625, %v1080
        %v1659 = vsel %vm1657, %v1626, %v1082
        %v1660 = vsel %vm1657, %v1627, %v1084
        %v1661 = vsel %vm1657, %v1628, %v1086
        %v1662 = vsel %vm1657, %v1629, %v1088
        %v1663 = vsel %vm1657, %v1630, %v1090
        %v1664 = vsel %vm1657, %v1631, %v1092
        %v1665 = vsel %vm1657, %v1632, %v1094
        %v1666 = vsel %vm1657, %v1633, %v1096
        %v1667 = vsel %vm1657, %v1634, %v1098
        %v1668 = vsel %vm1657, %v1635, %v1100
        %v1669 = vsel %vm1657, %v1636, %v1102
        %v1670 = vsel %vm1657, %v1637, %v1104
        %v1671 = vsel %vm1657, %v1638, %v1106
        %v1672 = vsel %vm1657, %v1639, %v1108
        %v1673 = vsel %vm1657, %v1640, %v1110
        %v1674 = vsel %vm1657, %v1641, %v1112
        %v1675 = vsel %vm1657, %v1642, %v1114
        %v1676 = vsel %vm1657, %v1643, %v1116
        %v1677 = vsel %vm1657, %v1644, %v1118
        %v1678 = vsel %vm1657, %v1645, %v1120
        %v1679 = vsel %vm1657, %v1646, %v1122
        %v1680 = vsel %vm1657, %v1647, %v1124
        %v1681 = vsel %vm1657, %v1648, %v1126
        %v1682 = vsel %vm1657, %v1649, %v1128
        %v1683 = vsel %vm1657, %v1650, %v1130
        %v1684 = vsel %vm1657, %v1651, %v1132
        %v1685 = vsel %vm1657, %v1652, %v1134
        %v1686 = vsel %vm1657, %v1653, %v1136
        %v1687 = vsel %vm1657, %v1654, %v1138
        %v1688 = vsel %vm1657, %v1655, %v1140
        %v1689 = vsel %vm1657, %v1656, %v1142
        %vm1690 = vcmask 80896
        %v1691 = vsel %vm1690, %v1658, %v1176
        %v1692 = vsel %vm1690, %v1659, %v1178
        %v1693 = vsel %vm1690, %v1660, %v1180
        %v1694 = vsel %vm1690, %v1661, %v1182
        %v1695 = vsel %vm1690, %v1662, %v1184
        %v1696 = vsel %vm1690, %v1663, %v1186
        %v1697 = vsel %vm1690, %v1664, %v1188
        %v1698 = vsel %vm1690, %v1665, %v1190
        %v1699 = vsel %vm1690, %v1666, %v1192
        %v1700 = vsel %vm1690, %v1667, %v1194
        %v1701 = vsel %vm1690, %v1668, %v1196
        %v1702 = vsel %vm1690, %v1669, %v1198
        %v1703 = vsel %vm1690, %v1670, %v1200
        %v1704 = vsel %vm1690, %v1671, %v1202
        %v1705 = vsel %vm1690, %v1672, %v1204
        %v1706 = vsel %vm1690, %v1673, %v1206
        %v1707 = vsel %vm1690, %v1674, %v1208
        %v1708 = vsel %vm1690, %v1675, %v1210
        %v1709 = vsel %vm1690, %v1676, %v1212
        %v1710 = vsel %vm1690, %v1677, %v1214
        %v1711 = vsel %vm1690, %v1678, %v1216
        %v1712 = vsel %vm1690, %v1679, %v1218
        %v1713 = vsel %vm1690, %v1680, %v1220
        %v1714 = vsel %vm1690, %v1681, %v1222
        %v1715 = vsel %vm1690, %v1682, %v1224
        %v1716 = vsel %vm1690, %v1683, %v1226
        %v1717 = vsel %vm1690, %v1684, %v1228
        %v1718 = vsel %vm1690, %v1685, %v1230
        %v1719 = vsel %vm1690, %v1686, %v1232
        %v1720 = vsel %vm1690, %v1687, %v1234
        %v1721 = vsel %vm1690, %v1688, %v1236
        %v1722 = vsel %vm1690, %v1689, %v1238
        %vm1723 = vcmask 97280
        %v1724 = vsel %vm1723, %v1691, %v1272
        %v1725 = vsel %vm1723, %v1692, %v1274
        %v1726 = vsel %vm1723, %v1693, %v1276
        %v1727 = vsel %vm1723, %v1694, %v1278
        %v1728 = vsel %vm1723, %v1695, %v1280
        %v1729 = vsel %vm1723, %v1696, %v1282
        %v1730 = vsel %vm1723, %v1697, %v1284
        %v1731 = vsel %vm1723, %v1698, %v1286
        %v1732 = vsel %vm1723, %v1699, %v1288
        %v1733 = vsel %vm1723, %v1700, %v1290
        %v1734 = vsel %vm1723, %v1701, %v1292
        %v1735 = vsel %vm1723, %v1702, %v1294
        %v1736 = vsel %vm1723, %v1703, %v1296
        %v1737 = vsel %vm1723, %v1704, %v1298
        %v1738 = vsel %vm1723, %v1705, %v1300
        %v1739 = vsel %vm1723, %v1706, %v1302
        %v1740 = vsel %vm1723, %v1707, %v1304
        %v1741 = vsel %vm1723, %v1708, %v1306
        %v1742 = vsel %vm1723, %v1709, %v1308
        %v1743 = vsel %vm1723, %v1710, %v1310
        %v1744 = vsel %vm1723, %v1711, %v1312
        %v1745 = vsel %vm1723, %v1712, %v1314
        %v1746 = vsel %vm1723, %v1713, %v1316
        %v1747 = vsel %vm1723, %v1714, %v1318
        %v1748 = vsel %vm1723, %v1715, %v1320
        %v1749 = vsel %vm1723, %v1716, %v1322
        %v1750 = vsel %vm1723, %v1717, %v1324
        %v1751 = vsel %vm1723, %v1718, %v1326
        %v1752 = vsel %vm1723, %v1719, %v1328
        %v1753 = vsel %vm1723, %v1720, %v1330
        %v1754 = vsel %vm1723, %v1721, %v1332
        %v1755 = vsel %vm1723, %v1722, %v1334
        %vm1756 = vcmask 113664
        %v1757 = vsel %vm1756, %v1724, %v1368
        %v1758 = vsel %vm1756, %v1725, %v1370
        %v1759 = vsel %vm1756, %v1726, %v1372
        %v1760 = vsel %vm1756, %v1727, %v1374
        %v1761 = vsel %vm1756, %v1728, %v1376
        %v1762 = vsel %vm1756, %v1729, %v1378
        %v1763 = vsel %vm1756, %v1730, %v1380
        %v1764 = vsel %vm1756, %v1731, %v1382
        %v1765 = vsel %vm1756, %v1732, %v1384
        %v1766 = vsel %vm1756, %v1733, %v1386
        %v1767 = vsel %vm1756, %v1734, %v1388
        %v1768 = vsel %vm1756, %v1735, %v1390
        %v1769 = vsel %vm1756, %v1736, %v1392
        %v1770 = vsel %vm1756, %v1737, %v1394
        %v1771 = vsel %vm1756, %v1738, %v1396
        %v1772 = vsel %vm1756, %v1739, %v1398
        %v1773 = vsel %vm1756, %v1740, %v1400
        %v1774 = vsel %vm1756, %v1741, %v1402
        %v1775 = vsel %vm1756, %v1742, %v1404
        %v1776 = vsel %vm1756, %v1743, %v1406
        %v1777 = vsel %vm1756, %v1744, %v1408
        %v1778 = vsel %vm1756, %v1745, %v1410
        %v1779 = vsel %vm1756, %v1746, %v1412
        %v1780 = vsel %vm1756, %v1747, %v1414
        %v1781 = vsel %vm1756, %v1748, %v1416
        %v1782 = vsel %vm1756, %v1749, %v1418
        %v1783 = vsel %vm1756, %v1750, %v1420
        %v1784 = vsel %vm1756, %v1751, %v1422
        %v1785 = vsel %vm1756, %v1752, %v1424
        %v1786 = vsel %vm1756, %v1753, %v1426
        %v1787 = vsel %vm1756, %v1754, %v1428
        %v1788 = vsel %vm1756, %v1755, %v1430
        %v1789 = vsel %vm318, %v1757, %v1464
        %v1790 = vsel %vm318, %v1758, %v1466
        %v1791 = vsel %vm318, %v1759, %v1468
        %v1792 = vsel %vm318, %v1760, %v1470
        %v1793 = vsel %vm318, %v1761, %v1472
        %v1794 = vsel %vm318, %v1762, %v1474
        %v1795 = vsel %vm318, %v1763, %v1476
        %v1796 = vsel %vm318, %v1764, %v1478
        %v1797 = vsel %vm318, %v1765, %v1480
        %v1798 = vsel %vm318, %v1766, %v1482
        %v1799 = vsel %vm318, %v1767, %v1484
        %v1800 = vsel %vm318, %v1768, %v1486
        %v1801 = vsel %vm318, %v1769, %v1488
        %v1802 = vsel %vm318, %v1770, %v1490
        %v1803 = vsel %vm318, %v1771, %v1492
        %v1804 = vsel %vm318, %v1772, %v1494
        %v1805 = vsel %vm318, %v1773, %v1496
        %v1806 = vsel %vm318, %v1774, %v1498
        %v1807 = vsel %vm318, %v1775, %v1500
        %v1808 = vsel %vm318, %v1776, %v1502
        %v1809 = vsel %vm318, %v1777, %v1504
        %v1810 = vsel %vm318, %v1778, %v1506
        %v1811 = vsel %vm318, %v1779, %v1508
        %v1812 = vsel %vm318, %v1780, %v1510
        %v1813 = vsel %vm318, %v1781, %v1512
        %v1814 = vsel %vm318, %v1782, %v1514
        %v1815 = vsel %vm318, %v1783, %v1516
        %v1816 = vsel %vm318, %v1784, %v1518
        %v1817 = vsel %vm318, %v1785, %v1520
        %v1818 = vsel %vm318, %v1786, %v1522
        %v1819 = vsel %vm318, %v1787, %v1524
        %v1820 = vsel %vm318, %v1788, %v1526
        %v1821 = vld [vmem:[%s2] sm:$0xff]
        %v1822 = vld [vmem:[%s2 + $0x8] sm:$0xff]
        %v1823 = vld [vmem:[%s2 + $0x10] sm:$0x3]
        %v1824 = vld [vmem:[%s3] sm:$0x1]
        %v1826 = vlaneseq
        %v1827 = vshrl.u32 %v1826, 7
        %v1828 = vsub.s32 0, %v1827
        %v1829 = vrot.slane %v1824, %v1828
        %vm1831 = vcmask 146432
        %v1833 = vsel %vm1831, %v1789, 0
        %v1836 = vsel %vm1831, %v1790, 0
        %v1839 = vsel %vm1831, %v1791, 0
        %v1842 = vsel %vm1831, %v1792, 0
        %v1845 = vsel %vm1831, %v1793, 0
        %v1848 = vsel %vm1831, %v1794, 0
        %v1851 = vsel %vm1831, %v1795, 0
        %v1854 = vsel %vm1831, %v1796, 0
        %v1857 = vsel %vm1831, %v1797, 0
        %v1860 = vsel %vm1831, %v1798, 0
        %v1863 = vsel %vm1831, %v1799, 0
        %v1866 = vsel %vm1831, %v1800, 0
        %v1869 = vsel %vm1831, %v1801, 0
        %v1872 = vsel %vm1831, %v1802, 0
        %v1875 = vsel %vm1831, %v1803, 0
        %v1878 = vsel %vm1831, %v1804, 0
        %v1881 = vsel %vm1831, %v1805, 0
        %v1884 = vsel %vm1831, %v1806, 0
        %v1887 = vsel %vm1831, %v1807, 0
        %v1890 = vsel %vm1831, %v1808, 0
        %v1893 = vsel %vm1831, %v1809, 0
        %v1896 = vsel %vm1831, %v1810, 0
        %v1899 = vsel %vm1831, %v1811, 0
        %v1902 = vsel %vm1831, %v1812, 0
        %v1905 = vsel %vm1831, %v1813, 0
        %v1908 = vsel %vm1831, %v1814, 0
        %v1911 = vsel %vm1831, %v1815, 0
        %v1914 = vsel %vm1831, %v1816, 0
        %v1917 = vsel %vm1831, %v1817, 0
        %v1920 = vsel %vm1831, %v1818, 0
        %v1923 = vsel %vm1831, %v1819, 0
        %v1926 = vsel %vm1831, %v1820, 0
        %vm1928 = vcmask 1041408
        %v1930 = vsel %vm1928, %v1823, 0
        %1932 = vmatprep.subr.mxu0 0.0
        %1933 = vmatpush1.msra.mxu0 %v1821
        %1934 = vmatprep.subr.mxu0 0.0
        %1935 = vmatpush1.msra.mxu0 %v1822
        %1936 = vmatprep.subr.mxu0 0.0
        %1937 = vmatpush1.msra.mxu0 %v1930
        %1938 = vmatprep.subr.mxu0 0.0
        %1939 = vmatpush1.msra.mxu0 0.0
        %1940 = vmatprep.subr.mxu0 0.0
        %1941 = vmatpush1.msra.mxu0 0.0
        %1942 = vmatprep.subr.mxu0 0.0
        %1943 = vmatpush1.msra.mxu0 0.0
        %1944 = vmatprep.subr.mxu0 0.0
        %1945 = vmatpush1.msra.mxu0 0.0
        %1946 = vmatprep.subr.mxu0 0.0
        %1947 = vmatpush1.msra.mxu0 0.0
        %1948 = vmatprep.subr.mxu0 0.0
        %1949 = vmatpush1.msra.mxu0 0.0
        %1950 = vmatprep.subr.mxu0 0.0
        %1951 = vmatpush1.msra.mxu0 0.0
        %1952 = vmatprep.subr.mxu0 0.0
        %1953 = vmatpush1.msra.mxu0 0.0
        %1954 = vmatprep.subr.mxu0 0.0
        %1955 = vmatpush1.msra.mxu0 0.0
        %1956 = vmatprep.subr.mxu0 0.0
        %1957 = vmatpush1.msra.mxu0 0.0
        %1958 = vmatprep.subr.mxu0 0.0
        %1959 = vmatpush1.msra.mxu0 0.0
        %1960 = vmatprep.subr.mxu0 0.0
        %1961 = vmatpush1.msra.mxu0 0.0
        %1962 = vmatprep.subr.mxu0 0.0
        %1963 = vmatpush1.msra.mxu0 0.0
        %1964 = vmatprep.subr.mxu0 0.0
        %1965 = vmatpush1.msra.mxu0 0.0
        %1966 = vmatprep.subr.mxu0 0.0
        %1967 = vmatpush1.msra.mxu0 0.0
        %1968 = vmatprep.subr.mxu0 0.0
        %1969 = vmatpush1.msra.mxu0 0.0
        %1970 = vmatprep.subr.mxu0 0.0
        %1971 = vmatpush1.msra.mxu0 0.0
        %1972 = vmatprep.subr.mxu0 0.0
        %1973 = vmatpush1.msra.mxu0 0.0
        %1974 = vmatprep.subr.mxu0 0.0
        %1975 = vmatpush1.msra.mxu0 0.0
        %1976 = vmatprep.subr.mxu0 0.0
        %1977 = vmatpush1.msra.mxu0 0.0
        %1978 = vmatprep.subr.mxu0 0.0
        %1979 = vmatpush1.msra.mxu0 0.0
        %1980 = vmatprep.subr.mxu0 0.0
        %1981 = vmatpush1.msra.mxu0 0.0
        %1982 = vmatprep.subr.mxu0 0.0
        %1983 = vmatpush1.msra.mxu0 0.0
        %1984 = vmatprep.subr.mxu0 0.0
        %1985 = vmatpush1.msra.mxu0 0.0
        %1986 = vmatprep.subr.mxu0 0.0
        %1987 = vmatpush1.msra.mxu0 0.0
        %1988 = vmatprep.subr.mxu0 0.0
        %1989 = vmatpush1.msra.mxu0 0.0
        %1990 = vmatprep.subr.mxu0 0.0
        %1991 = vmatpush1.msra.mxu0 0.0
        %1992 = vmatprep.subr.mxu0 0.0
        %1993 = vmatpush1.msra.mxu0 0.0
        %1994 = vmatprep.subr.mxu0 0.0
        %1995 = vmatpush1.msra.mxu0 0.0
        %1996 = vmatprep.mubr.f32.mxu0 0.0
        %1997 = vmatmul.mubr.f32.gmra.mrb[0].mxu0 %v1833
        %v1998 = vpop.f32.mrb[0].mxu0
        %v1999 = vadd.f32 %v1829, %v1998
        %v2000 = vpop.f32.mrb[0].mxu0
        %2001 = vmatprep.mubr.f32.mxu0 0.0
        %2002 = vmatmul.mubr.f32.gmra.mrb[0].mxu0 %v1836
        %v2003 = vpop.f32.mrb[0].mxu0
        %v2004 = vadd.f32 %v1829, %v2003
        %v2005 = vpop.f32.mrb[0].mxu0
        %2006 = vmatprep.mubr.f32.mxu0 0.0
        %2007 = vmatmul.mubr.f32.gmra.mrb[0].mxu0 %v1839
        %v2008 = vpop.f32.mrb[0].mxu0
        %v2009 = vadd.f32 %v1829, %v2008
        %v2010 = vpop.f32.mrb[0].mxu0
        %2011 = vmatprep.mubr.f32.mxu0 0.0
        %2012 = vmatmul.mubr.f32.gmra.mrb[0].mxu0 %v1842
        %v2013 = vpop.f32.mrb[0].mxu0
        %v2014 = vadd.f32 %v1829, %v2013
        %v2015 = vpop.f32.mrb[0].mxu0
        %2016 = vmatprep.mubr.f32.mxu0 0.0
        %2017 = vmatmul.mubr.f32.gmra.mrb[0].mxu0 %v1845
        %v2018 = vpop.f32.mrb[0].mxu0
        %v2019 = vadd.f32 %v1829, %v2018
        %v2020 = vpop.f32.mrb[0].mxu0
        %2021 = vmatprep.mubr.f32.mxu0 0.0
        %2022 = vmatmul.mubr.f32.gmra.mrb[0].mxu0 %v1848
        %v2023 = vpop.f32.mrb[0].mxu0
        %v2024 = vadd.f32 %v1829, %v2023
        %v2025 = vpop.f32.mrb[0].mxu0
        %2026 = vmatprep.mubr.f32.mxu0 0.0
        %2027 = vmatmul.mubr.f32.gmra.mrb[0].mxu0 %v1851
        %v2028 = vpop.f32.mrb[0].mxu0
        %v2029 = vadd.f32 %v1829, %v2028
        %v2030 = vpop.f32.mrb[0].mxu0
        %2031 = vmatprep.mubr.f32.mxu0 0.0
        %2032 = vmatmul.mubr.f32.gmra.mrb[0].mxu0 %v1854
        %v2033 = vpop.f32.mrb[0].mxu0
        %v2034 = vadd.f32 %v1829, %v2033
        %v2035 = vpop.f32.mrb[0].mxu0
        %2036 = vmatprep.mubr.f32.mxu0 0.0
        %2037 = vmatmul.mubr.f32.gmra.mrb[0].mxu0 %v1857
        %v2038 = vpop.f32.mrb[0].mxu0
        %v2039 = vadd.f32 %v1829, %v2038
        %v2040 = vpop.f32.mrb[0].mxu0
        %2041 = vmatprep.mubr.f32.mxu0 0.0
        %2042 = vmatmul.mubr.f32.gmra.mrb[0].mxu0 %v1860
        %v2043 = vpop.f32.mrb[0].mxu0
        %v2044 = vadd.f32 %v1829, %v2043
        %v2045 = vpop.f32.mrb[0].mxu0
        %2046 = vmatprep.mubr.f32.mxu0 0.0
        %2047 = vmatmul.mubr.f32.gmra.mrb[0].mxu0 %v1863
        %v2048 = vpop.f32.mrb[0].mxu0
        %v2049 = vadd.f32 %v1829, %v2048
        %v2050 = vpop.f32.mrb[0].mxu0
        %2051 = vmatprep.mubr.f32.mxu0 0.0
        %2052 = vmatmul.mubr.f32.gmra.mrb[0].mxu0 %v1866
        %v2053 = vpop.f32.mrb[0].mxu0
        %v2054 = vadd.f32 %v1829, %v2053
        %v2055 = vpop.f32.mrb[0].mxu0
        %2056 = vmatprep.mubr.f32.mxu0 0.0
        %2057 = vmatmul.mubr.f32.gmra.mrb[0].mxu0 %v1869
        %v2058 = vpop.f32.mrb[0].mxu0
        %v2059 = vadd.f32 %v1829, %v2058
        %v2060 = vpop.f32.mrb[0].mxu0
        %2061 = vmatprep.mubr.f32.mxu0 0.0
        %2062 = vmatmul.mubr.f32.gmra.mrb[0].mxu0 %v1872
        %v2063 = vpop.f32.mrb[0].mxu0
        %v2064 = vadd.f32 %v1829, %v2063
        %v2065 = vpop.f32.mrb[0].mxu0
        %2066 = vmatprep.mubr.f32.mxu0 0.0
        %2067 = vmatmul.mubr.f32.gmra.mrb[0].mxu0 %v1875
        %v2068 = vpop.f32.mrb[0].mxu0
        %v2069 = vadd.f32 %v1829, %v2068
        %v2070 = vpop.f32.mrb[0].mxu0
        %2071 = vmatprep.mubr.f32.mxu0 0.0
        %2072 = vmatmul.mubr.f32.gmra.mrb[0].mxu0 %v1878
        %v2073 = vpop.f32.mrb[0].mxu0
        %v2074 = vadd.f32 %v1829, %v2073
        %v2075 = vpop.f32.mrb[0].mxu0
        %2076 = vmatprep.mubr.f32.mxu0 0.0
        %2077 = vmatmul.mubr.f32.gmra.mrb[0].mxu0 %v1881
        %v2078 = vpop.f32.mrb[0].mxu0
        %v2079 = vadd.f32 %v1829, %v2078
        %v2080 = vpop.f32.mrb[0].mxu0
        %2081 = vmatprep.mubr.f32.mxu0 0.0
        %2082 = vmatmul.mubr.f32.gmra.mrb[0].mxu0 %v1884
        %v2083 = vpop.f32.mrb[0].mxu0
        %v2084 = vadd.f32 %v1829, %v2083
        %v2085 = vpop.f32.mrb[0].mxu0
        %2086 = vmatprep.mubr.f32.mxu0 0.0
        %2087 = vmatmul.mubr.f32.gmra.mrb[0].mxu0 %v1887
        %v2088 = vpop.f32.mrb[0].mxu0
        %v2089 = vadd.f32 %v1829, %v2088
        %v2090 = vpop.f32.mrb[0].mxu0
        %2091 = vmatprep.mubr.f32.mxu0 0.0
        %2092 = vmatmul.mubr.f32.gmra.mrb[0].mxu0 %v1890
        %v2093 = vpop.f32.mrb[0].mxu0
        %v2094 = vadd.f32 %v1829, %v2093
        %v2095 = vpop.f32.mrb[0].mxu0
        %2096 = vmatprep.mubr.f32.mxu0 0.0
        %2097 = vmatmul.mubr.f32.gmra.mrb[0].mxu0 %v1893
        %v2098 = vpop.f32.mrb[0].mxu0
        %v2099 = vadd.f32 %v1829, %v2098
        %v2100 = vpop.f32.mrb[0].mxu0
        %2101 = vmatprep.mubr.f32.mxu0 0.0
        %2102 = vmatmul.mubr.f32.gmra.mrb[0].mxu0 %v1896
        %v2103 = vpop.f32.mrb[0].mxu0
        %v2104 = vadd.f32 %v1829, %v2103
        %v2105 = vpop.f32.mrb[0].mxu0
        %2106 = vmatprep.mubr.f32.mxu0 0.0
        %2107 = vmatmul.mubr.f32.gmra.mrb[0].mxu0 %v1899
        %v2108 = vpop.f32.mrb[0].mxu0
        %v2109 = vadd.f32 %v1829, %v2108
        %v2110 = vpop.f32.mrb[0].mxu0
        %2111 = vmatprep.mubr.f32.mxu0 0.0
        %2112 = vmatmul.mubr.f32.gmra.mrb[0].mxu0 %v1902
        %v2113 = vpop.f32.mrb[0].mxu0
        %v2114 = vadd.f32 %v1829, %v2113
        %v2115 = vpop.f32.mrb[0].mxu0
        %2116 = vmatprep.mubr.f32.mxu0 0.0
        %2117 = vmatmul.mubr.f32.gmra.mrb[0].mxu0 %v1905
        %v2118 = vpop.f32.mrb[0].mxu0
        %v2119 = vadd.f32 %v1829, %v2118
        %v2120 = vpop.f32.mrb[0].mxu0
        %2121 = vmatprep.mubr.f32.mxu0 0.0
        %2122 = vmatmul.mubr.f32.gmra.mrb[0].mxu0 %v1908
        %v2123 = vpop.f32.mrb[0].mxu0
        %v2124 = vadd.f32 %v1829, %v2123
        %v2125 = vpop.f32.mrb[0].mxu0
        %2126 = vmatprep.mubr.f32.mxu0 0.0
        %2127 = vmatmul.mubr.f32.gmra.mrb[0].mxu0 %v1911
        %v2128 = vpop.f32.mrb[0].mxu0
        %v2129 = vadd.f32 %v1829, %v2128
        %v2130 = vpop.f32.mrb[0].mxu0
        %2131 = vmatprep.mubr.f32.mxu0 0.0
        %2132 = vmatmul.mubr.f32.gmra.mrb[0].mxu0 %v1914
        %v2133 = vpop.f32.mrb[0].mxu0
        %v2134 = vadd.f32 %v1829, %v2133
        %v2135 = vpop.f32.mrb[0].mxu0
        %2136 = vmatprep.mubr.f32.mxu0 0.0
        %2137 = vmatmul.mubr.f32.gmra.mrb[0].mxu0 %v1917
        %v2138 = vpop.f32.mrb[0].mxu0
        %v2139 = vadd.f32 %v1829, %v2138
        %v2140 = vpop.f32.mrb[0].mxu0
        %2141 = vmatprep.mubr.f32.mxu0 0.0
        %2142 = vmatmul.mubr.f32.gmra.mrb[0].mxu0 %v1920
        %v2143 = vpop.f32.mrb[0].mxu0
        %v2144 = vadd.f32 %v1829, %v2143
        %v2145 = vpop.f32.mrb[0].mxu0
        %2146 = vmatprep.mubr.f32.mxu0 0.0
        %2147 = vmatmul.mubr.f32.gmra.mrb[0].mxu0 %v1923
        %v2148 = vpop.f32.mrb[0].mxu0
        %v2149 = vadd.f32 %v1829, %v2148
        %v2150 = vpop.f32.mrb[0].mxu0
        %2151 = vmatprep.mubr.f32.mxu0 0.0
        %2152 = vmatmul.mubr.f32.gmra.mrb[0].mxu0 %v1926
        %v2153 = vpop.f32.mrb[0].mxu0
        %v2154 = vadd.f32 %v1829, %v2153
        %v2155 = vpop.f32.mrb[0].mxu0
        %2156 = vdwg.mxu0
        %vm2157 = vcmp.gt.f32.partialorder %v1999, 0.0
        %vm2158 = vcmp.gt.f32.partialorder %v2004, 0.0
        %vm2159 = vcmp.gt.f32.partialorder %v2009, 0.0
        %vm2160 = vcmp.gt.f32.partialorder %v2014, 0.0
        %vm2161 = vcmp.gt.f32.partialorder %v2019, 0.0
        %vm2162 = vcmp.gt.f32.partialorder %v2024, 0.0
        %vm2163 = vcmp.gt.f32.partialorder %v2029, 0.0
        %vm2164 = vcmp.gt.f32.partialorder %v2034, 0.0
        %vm2165 = vcmp.gt.f32.partialorder %v2039, 0.0
        %vm2166 = vcmp.gt.f32.partialorder %v2044, 0.0
        %vm2167 = vcmp.gt.f32.partialorder %v2049, 0.0
        %vm2168 = vcmp.gt.f32.partialorder %v2054, 0.0
        %vm2169 = vcmp.gt.f32.partialorder %v2059, 0.0
        %vm2170 = vcmp.gt.f32.partialorder %v2064, 0.0
        %vm2171 = vcmp.gt.f32.partialorder %v2069, 0.0
        %vm2172 = vcmp.gt.f32.partialorder %v2074, 0.0
        %vm2173 = vcmp.gt.f32.partialorder %v2079, 0.0
        %vm2174 = vcmp.gt.f32.partialorder %v2084, 0.0
        %vm2175 = vcmp.gt.f32.partialorder %v2089, 0.0
        %vm2176 = vcmp.gt.f32.partialorder %v2094, 0.0
        %vm2177 = vcmp.gt.f32.partialorder %v2099, 0.0
        %vm2178 = vcmp.gt.f32.partialorder %v2104, 0.0
        %vm2179 = vcmp.gt.f32.partialorder %v2109, 0.0
        %vm2180 = vcmp.gt.f32.partialorder %v2114, 0.0
        %vm2181 = vcmp.gt.f32.partialorder %v2119, 0.0
        %vm2182 = vcmp.gt.f32.partialorder %v2124, 0.0
        %vm2183 = vcmp.gt.f32.partialorder %v2129, 0.0
        %vm2184 = vcmp.gt.f32.partialorder %v2134, 0.0
        %vm2185 = vcmp.gt.f32.partialorder %v2139, 0.0
        %vm2186 = vcmp.gt.f32.partialorder %v2144, 0.0
        %vm2187 = vcmp.gt.f32.partialorder %v2149, 0.0
        %vm2188 = vcmp.gt.f32.partialorder %v2154, 0.0
        %v2189 = vmul.f32 %v1999, 0.1
        %v2190 = vmul.f32 %v2004, 0.1
        %v2191 = vmul.f32 %v2009, 0.1
        %v2192 = vmul.f32 %v2014, 0.1
        %v2193 = vmul.f32 %v2019, 0.1
        %v2194 = vmul.f32 %v2024, 0.1
        %v2195 = vmul.f32 %v2029, 0.1
        %v2196 = vmul.f32 %v2034, 0.1
        %v2197 = vmul.f32 %v2039, 0.1
        %v2198 = vmul.f32 %v2044, 0.1
        %v2199 = vmul.f32 %v2049, 0.1
        %v2200 = vmul.f32 %v2054, 0.1
        %v2201 = vmul.f32 %v2059, 0.1
        %v2202 = vmul.f32 %v2064, 0.1
        %v2203 = vmul.f32 %v2069, 0.1
        %v2204 = vmul.f32 %v2074, 0.1
        %v2205 = vmul.f32 %v2079, 0.1
        %v2206 = vmul.f32 %v2084, 0.1
        %v2207 = vmul.f32 %v2089, 0.1
        %v2208 = vmul.f32 %v2094, 0.1
        %v2209 = vmul.f32 %v2099, 0.1
        %v2210 = vmul.f32 %v2104, 0.1
        %v2211 = vmul.f32 %v2109, 0.1
        %v2212 = vmul.f32 %v2114, 0.1
        %v2213 = vmul.f32 %v2119, 0.1
        %v2214 = vmul.f32 %v2124, 0.1
        %v2215 = vmul.f32 %v2129, 0.1
        %v2216 = vmul.f32 %v2134, 0.1
        %v2217 = vmul.f32 %v2139, 0.1
        %v2218 = vmul.f32 %v2144, 0.1
        %v2219 = vmul.f32 %v2149, 0.1
        %v2220 = vmul.f32 %v2154, 0.1
        %v2221 = vsel %vm2157, %v1999, %v2189
        %v2222 = vsel %vm2158, %v2004, %v2190
        %v2223 = vsel %vm2159, %v2009, %v2191
        %v2224 = vsel %vm2160, %v2014, %v2192
        %v2225 = vsel %vm2161, %v2019, %v2193
        %v2226 = vsel %vm2162, %v2024, %v2194
        %v2227 = vsel %vm2163, %v2029, %v2195
        %v2228 = vsel %vm2164, %v2034, %v2196
        %v2229 = vsel %vm2165, %v2039, %v2197
        %v2230 = vsel %vm2166, %v2044, %v2198
        %v2231 = vsel %vm2167, %v2049, %v2199
        %v2232 = vsel %vm2168, %v2054, %v2200
        %v2233 = vsel %vm2169, %v2059, %v2201
        %v2234 = vsel %vm2170, %v2064, %v2202
        %v2235 = vsel %vm2171, %v2069, %v2203
        %v2236 = vsel %vm2172, %v2074, %v2204
        %v2237 = vsel %vm2173, %v2079, %v2205
        %v2238 = vsel %vm2174, %v2084, %v2206
        %v2239 = vsel %vm2175, %v2089, %v2207
        %v2240 = vsel %vm2176, %v2094, %v2208
        %v2241 = vsel %vm2177, %v2099, %v2209
        %v2242 = vsel %vm2178, %v2104, %v2210
        %v2243 = vsel %vm2179, %v2109, %v2211
        %v2244 = vsel %vm2180, %v2114, %v2212
        %v2245 = vsel %vm2181, %v2119, %v2213
        %v2246 = vsel %vm2182, %v2124, %v2214
        %v2247 = vsel %vm2183, %v2129, %v2215
        %v2248 = vsel %vm2184, %v2134, %v2216
        %v2249 = vsel %vm2185, %v2139, %v2217
        %v2250 = vsel %vm2186, %v2144, %v2218
        %v2251 = vsel %vm2187, %v2149, %v2219
        %v2252 = vsel %vm2188, %v2154, %v2220
        %2253 = vst.msk [vmem:[%s467 + $0x1] sm:$0xff] %vm318, %v2221
        %2254 = vst.msk [vmem:[%s467 + $0x9] sm:$0xff] %vm318, %v2222
        %2255 = vst.msk [vmem:[%s467 + $0x19] sm:$0xff] %vm318, %v2223
        %2256 = vst.msk [vmem:[%s467 + $0x21] sm:$0xff] %vm318, %v2224
        %2257 = vst.msk [vmem:[%s467 + $0x31] sm:$0xff] %vm318, %v2225
        %2258 = vst.msk [vmem:[%s467 + $0x39] sm:$0xff] %vm318, %v2226
        %2259 = vst.msk [vmem:[%s467 + $0x49] sm:$0xff] %vm318, %v2227
        %2260 = vst.msk [vmem:[%s467 + $0x51] sm:$0xff] %vm318, %v2228
        %2261 = vst.msk [vmem:[%s467 + $0x61] sm:$0xff] %vm318, %v2229
        %2262 = vst.msk [vmem:[%s467 + $0x69] sm:$0xff] %vm318, %v2230
        %2263 = vst.msk [vmem:[%s467 + $0x79] sm:$0xff] %vm318, %v2231
        %2264 = vst.msk [vmem:[%s467 + $0x81] sm:$0xff] %vm318, %v2232
        %2265 = vst.msk [vmem:[%s467 + $0x91] sm:$0xff] %vm318, %v2233
        %2266 = vst.msk [vmem:[%s467 + $0x99] sm:$0xff] %vm318, %v2234
        %2267 = vst.msk [vmem:[%s467 + $0xa9] sm:$0xff] %vm318, %v2235
        %2268 = vst.msk [vmem:[%s467 + $0xb1] sm:$0xff] %vm318, %v2236
        %2269 = vst.msk [vmem:[%s467 + $0xc1] sm:$0xff] %vm318, %v2237
        %2270 = vst.msk [vmem:[%s467 + $0xc9] sm:$0xff] %vm318, %v2238
        %2271 = vst.msk [vmem:[%s467 + $0xd9] sm:$0xff] %vm318, %v2239
        %2272 = vst.msk [vmem:[%s467 + $0xe1] sm:$0xff] %vm318, %v2240
        %2273 = vst.msk [vmem:[%s467 + $0xf1] sm:$0xff] %vm318, %v2241
        %2274 = vst.msk [vmem:[%s467 + $0xf9] sm:$0xff] %vm318, %v2242
        %2275 = vst.msk [vmem:[%s467 + $0x109] sm:$0xff] %vm318, %v2243
        %2276 = vst.msk [vmem:[%s467 + $0x111] sm:$0xff] %vm318, %v2244
        %2277 = vst.msk [vmem:[%s467 + $0x121] sm:$0xff] %vm318, %v2245
        %2278 = vst.msk [vmem:[%s467 + $0x129] sm:$0xff] %vm318, %v2246
        %2279 = vst.msk [vmem:[%s467 + $0x139] sm:$0xff] %vm318, %v2247
        %2280 = vst.msk [vmem:[%s467 + $0x141] sm:$0xff] %vm318, %v2248
        %2281 = vst.msk [vmem:[%s467 + $0x151] sm:$0xff] %vm318, %v2249
        %2282 = vst.msk [vmem:[%s467 + $0x159] sm:$0xff] %vm318, %v2250
        %2283 = vst.msk [vmem:[%s467 + $0x169] sm:$0xff] %vm318, %v2251
        %2284 = vst.msk [vmem:[%s467 + $0x171] sm:$0xff] %vm318, %v2252
        %v2285 = vld [vmem:[#allocation2] sm:$0xff]
        %v2286 = vld [vmem:[#allocation2 + $0x8] sm:$0xff]
        %v2287 = vld [vmem:[#allocation2 + $0x10] sm:$0x3]
        %v2288 = vld [vmem:[#allocation2 + $0x18] sm:$0xff]
        %v2289 = vld [vmem:[#allocation2 + $0x20] sm:$0xff]
        %v2290 = vld [vmem:[#allocation2 + $0x28] sm:$0x3]
        %v2291 = vld [vmem:[#allocation2 + $0x30] sm:$0xff]
        %v2292 = vld [vmem:[#allocation2 + $0x38] sm:$0xff]
        %v2293 = vld [vmem:[#allocation2 + $0x40] sm:$0x3]
        %v2294 = vld [vmem:[#allocation2 + $0x48] sm:$0xff]
        %v2295 = vld [vmem:[#allocation2 + $0x50] sm:$0xff]
        %v2296 = vld [vmem:[#allocation2 + $0x58] sm:$0x3]
        %v2297 = vld [vmem:[#allocation2 + $0x60] sm:$0xff]
        %v2298 = vld [vmem:[#allocation2 + $0x68] sm:$0xff]
        %v2299 = vld [vmem:[#allocation2 + $0x70] sm:$0x3]
        %v2300 = vld [vmem:[#allocation2 + $0x78] sm:$0xff]
        %v2301 = vld [vmem:[#allocation2 + $0x80] sm:$0xff]
        %v2302 = vld [vmem:[#allocation2 + $0x88] sm:$0x3]
        %v2303 = vld [vmem:[#allocation2 + $0x90] sm:$0xff]
        %v2304 = vld [vmem:[#allocation2 + $0x98] sm:$0xff]
        %v2305 = vld [vmem:[#allocation2 + $0xa0] sm:$0x3]
        %v2306 = vld [vmem:[#allocation2 + $0xa8] sm:$0xff]
        %v2307 = vld [vmem:[#allocation2 + $0xb0] sm:$0xff]
        %v2308 = vld [vmem:[#allocation2 + $0xb8] sm:$0x3]
        %v2309 = vld [vmem:[#allocation2 + $0xc0] sm:$0xff]
        %v2310 = vld [vmem:[#allocation2 + $0xc8] sm:$0xff]
        %v2311 = vld [vmem:[#allocation2 + $0xd0] sm:$0x3]
        %v2312 = vld [vmem:[#allocation2 + $0xd8] sm:$0xff]
        %v2313 = vld [vmem:[#allocation2 + $0xe0] sm:$0xff]
        %v2314 = vld [vmem:[#allocation2 + $0xe8] sm:$0x3]
        %v2315 = vld [vmem:[#allocation2 + $0xf0] sm:$0xff]
        %v2316 = vld [vmem:[#allocation2 + $0xf8] sm:$0xff]
        %v2317 = vld [vmem:[#allocation2 + $0x100] sm:$0x3]
        %v2318 = vld [vmem:[#allocation2 + $0x108] sm:$0xff]
        %v2319 = vld [vmem:[#allocation2 + $0x110] sm:$0xff]
        %v2320 = vld [vmem:[#allocation2 + $0x118] sm:$0x3]
        %v2321 = vld [vmem:[#allocation2 + $0x120] sm:$0xff]
        %v2322 = vld [vmem:[#allocation2 + $0x128] sm:$0xff]
        %v2323 = vld [vmem:[#allocation2 + $0x130] sm:$0x3]
        %v2324 = vld [vmem:[#allocation2 + $0x138] sm:$0xff]
        %v2325 = vld [vmem:[#allocation2 + $0x140] sm:$0xff]
        %v2326 = vld [vmem:[#allocation2 + $0x148] sm:$0x3]
        %v2327 = vld [vmem:[#allocation2 + $0x150] sm:$0xff]
        %v2328 = vld [vmem:[#allocation2 + $0x158] sm:$0xff]
        %v2329 = vld [vmem:[#allocation2 + $0x160] sm:$0x3]
        %v2330 = vld [vmem:[#allocation2 + $0x168] sm:$0xff]
        %v2331 = vld [vmem:[#allocation2 + $0x170] sm:$0xff]
        %v2332 = vld [vmem:[#allocation2 + $0x178] sm:$0x3]
        %v2333 = vld [vmem:[#allocation2 + $0x180] sm:$0xff]
        %v2334 = vld [vmem:[#allocation2 + $0x188] sm:$0xff]
        %v2335 = vld [vmem:[#allocation2 + $0x190] sm:$0x3]
        %v2336 = vld [vmem:[#allocation2 + $0x198] sm:$0xff]
        %v2337 = vld [vmem:[#allocation2 + $0x1a0] sm:$0xff]
        %v2338 = vld [vmem:[#allocation2 + $0x1a8] sm:$0x3]
        %v2387 = vrot.slane %v2285, 1
        %v2388 = vrot.slane %v2286, 1
        %v2389 = vsel %vm603, %v2387, %v2388
        %v2390 = vrot.slane %v2287, 1
        %v2391 = vsel %vm603, %v2388, %v2390
        %v2392 = vrot.slane %v2288, 1
        %v2393 = vrot.slane %v2289, 1
        %v2394 = vsel %vm603, %v2392, %v2393
        %v2395 = vrot.slane %v2290, 1
        %v2396 = vsel %vm603, %v2393, %v2395
        %v2397 = vrot.slane %v2291, 1
        %v2398 = vrot.slane %v2292, 1
        %v2399 = vsel %vm603, %v2397, %v2398
        %v2400 = vrot.slane %v2293, 1
        %v2401 = vsel %vm603, %v2398, %v2400
        %v2402 = vrot.slane %v2294, 1
        %v2403 = vrot.slane %v2295, 1
        %v2404 = vsel %vm603, %v2402, %v2403
        %v2405 = vrot.slane %v2296, 1
        %v2406 = vsel %vm603, %v2403, %v2405
        %v2407 = vrot.slane %v2297, 1
        %v2408 = vrot.slane %v2298, 1
        %v2409 = vsel %vm603, %v2407, %v2408
        %v2410 = vrot.slane %v2299, 1
        %v2411 = vsel %vm603, %v2408, %v2410
        %v2412 = vrot.slane %v2300, 1
        %v2413 = vrot.slane %v2301, 1
        %v2414 = vsel %vm603, %v2412, %v2413
        %v2415 = vrot.slane %v2302, 1
        %v2416 = vsel %vm603, %v2413, %v2415
        %v2417 = vrot.slane %v2303, 1
        %v2418 = vrot.slane %v2304, 1
        %v2419 = vsel %vm603, %v2417, %v2418
        %v2420 = vrot.slane %v2305, 1
        %v2421 = vsel %vm603, %v2418, %v2420
        %v2422 = vrot.slane %v2306, 1
        %v2423 = vrot.slane %v2307, 1
        %v2424 = vsel %vm603, %v2422, %v2423
        %v2425 = vrot.slane %v2308, 1
        %v2426 = vsel %vm603, %v2423, %v2425
        %v2427 = vrot.slane %v2309, 1
        %v2428 = vrot.slane %v2310, 1
        %v2429 = vsel %vm603, %v2427, %v2428
        %v2430 = vrot.slane %v2311, 1
        %v2431 = vsel %vm603, %v2428, %v2430
        %v2432 = vrot.slane %v2312, 1
        %v2433 = vrot.slane %v2313, 1
        %v2434 = vsel %vm603, %v2432, %v2433
        %v2435 = vrot.slane %v2314, 1
        %v2436 = vsel %vm603, %v2433, %v2435
        %v2437 = vrot.slane %v2315, 1
        %v2438 = vrot.slane %v2316, 1
        %v2439 = vsel %vm603, %v2437, %v2438
        %v2440 = vrot.slane %v2317, 1
        %v2441 = vsel %vm603, %v2438, %v2440
        %v2442 = vrot.slane %v2318, 1
        %v2443 = vrot.slane %v2319, 1
        %v2444 = vsel %vm603, %v2442, %v2443
        %v2445 = vrot.slane %v2320, 1
        %v2446 = vsel %vm603, %v2443, %v2445
        %v2447 = vrot.slane %v2321, 1
        %v2448 = vrot.slane %v2322, 1
        %v2449 = vsel %vm603, %v2447, %v2448
        %v2450 = vrot.slane %v2323, 1
        %v2451 = vsel %vm603, %v2448, %v2450
        %v2452 = vrot.slane %v2324, 1
        %v2453 = vrot.slane %v2325, 1
        %v2454 = vsel %vm603, %v2452, %v2453
        %v2455 = vrot.slane %v2326, 1
        %v2456 = vsel %vm603, %v2453, %v2455
        %v2457 = vrot.slane %v2327, 1
        %v2458 = vrot.slane %v2328, 1
        %v2459 = vsel %vm603, %v2457, %v2458
        %v2460 = vrot.slane %v2329, 1
        %v2461 = vsel %vm603, %v2458, %v2460
        %v2462 = vrot.slane %v2330, 1
        %v2463 = vrot.slane %v2331, 1
        %v2464 = vsel %vm603, %v2462, %v2463
        %v2465 = vrot.slane %v2332, 1
        %v2466 = vsel %vm603, %v2463, %v2465
        %v2467 = vrot.slane %v2285, 2
        %v2468 = vrot.slane %v2286, 2
        %v2469 = vsel %vm684, %v2467, %v2468
        %v2470 = vrot.slane %v2287, 2
        %v2471 = vsel %vm684, %v2468, %v2470
        %v2472 = vrot.slane %v2288, 2
        %v2473 = vrot.slane %v2289, 2
        %v2474 = vsel %vm684, %v2472, %v2473
        %v2475 = vrot.slane %v2290, 2
        %v2476 = vsel %vm684, %v2473, %v2475
        %v2477 = vrot.slane %v2291, 2
        %v2478 = vrot.slane %v2292, 2
        %v2479 = vsel %vm684, %v2477, %v2478
        %v2480 = vrot.slane %v2293, 2
        %v2481 = vsel %vm684, %v2478, %v2480
        %v2482 = vrot.slane %v2294, 2
        %v2483 = vrot.slane %v2295, 2
        %v2484 = vsel %vm684, %v2482, %v2483
        %v2485 = vrot.slane %v2296, 2
        %v2486 = vsel %vm684, %v2483, %v2485
        %v2487 = vrot.slane %v2297, 2
        %v2488 = vrot.slane %v2298, 2
        %v2489 = vsel %vm684, %v2487, %v2488
        %v2490 = vrot.slane %v2299, 2
        %v2491 = vsel %vm684, %v2488, %v2490
        %v2492 = vrot.slane %v2300, 2
        %v2493 = vrot.slane %v2301, 2
        %v2494 = vsel %vm684, %v2492, %v2493
        %v2495 = vrot.slane %v2302, 2
        %v2496 = vsel %vm684, %v2493, %v2495
        %v2497 = vrot.slane %v2303, 2
        %v2498 = vrot.slane %v2304, 2
        %v2499 = vsel %vm684, %v2497, %v2498
        %v2500 = vrot.slane %v2305, 2
        %v2501 = vsel %vm684, %v2498, %v2500
        %v2502 = vrot.slane %v2306, 2
        %v2503 = vrot.slane %v2307, 2
        %v2504 = vsel %vm684, %v2502, %v2503
        %v2505 = vrot.slane %v2308, 2
        %v2506 = vsel %vm684, %v2503, %v2505
        %v2507 = vrot.slane %v2309, 2
        %v2508 = vrot.slane %v2310, 2
        %v2509 = vsel %vm684, %v2507, %v2508
        %v2510 = vrot.slane %v2311, 2
        %v2511 = vsel %vm684, %v2508, %v2510
        %v2512 = vrot.slane %v2312, 2
        %v2513 = vrot.slane %v2313, 2
        %v2514 = vsel %vm684, %v2512, %v2513
        %v2515 = vrot.slane %v2314, 2
        %v2516 = vsel %vm684, %v2513, %v2515
        %v2517 = vrot.slane %v2315, 2
        %v2518 = vrot.slane %v2316, 2
        %v2519 = vsel %vm684, %v2517, %v2518
        %v2520 = vrot.slane %v2317, 2
        %v2521 = vsel %vm684, %v2518, %v2520
        %v2522 = vrot.slane %v2318, 2
        %v2523 = vrot.slane %v2319, 2
        %v2524 = vsel %vm684, %v2522, %v2523
        %v2525 = vrot.slane %v2320, 2
        %v2526 = vsel %vm684, %v2523, %v2525
        %v2527 = vrot.slane %v2321, 2
        %v2528 = vrot.slane %v2322, 2
        %v2529 = vsel %vm684, %v2527, %v2528
        %v2530 = vrot.slane %v2323, 2
        %v2531 = vsel %vm684, %v2528, %v2530
        %v2532 = vrot.slane %v2324, 2
        %v2533 = vrot.slane %v2325, 2
        %v2534 = vsel %vm684, %v2532, %v2533
        %v2535 = vrot.slane %v2326, 2
        %v2536 = vsel %vm684, %v2533, %v2535
        %v2537 = vrot.slane %v2327, 2
        %v2538 = vrot.slane %v2328, 2
        %v2539 = vsel %vm684, %v2537, %v2538
        %v2540 = vrot.slane %v2329, 2
        %v2541 = vsel %vm684, %v2538, %v2540
        %v2542 = vrot.slane %v2330, 2
        %v2543 = vrot.slane %v2331, 2
        %v2544 = vsel %vm684, %v2542, %v2543
        %v2545 = vrot.slane %v2332, 2
        %v2546 = vsel %vm684, %v2543, %v2545
        %v2550 = vrot.slane %v2333, 1
        %v2551 = vrot.slane %v2334, 1
        %v2552 = vsel %vm603, %v2550, %v2551
        %v2553 = vrot.slane %v2335, 1
        %v2554 = vsel %vm603, %v2551, %v2553
        %v2555 = vrot.slane %v2333, 2
        %v2556 = vrot.slane %v2334, 2
        %v2557 = vsel %vm684, %v2555, %v2556
        %v2558 = vrot.slane %v2335, 2
        %v2559 = vsel %vm684, %v2556, %v2558
        %v2563 = vrot.slane %v2336, 1
        %v2564 = vrot.slane %v2337, 1
        %v2565 = vsel %vm603, %v2563, %v2564
        %v2566 = vrot.slane %v2338, 1
        %v2567 = vsel %vm603, %v2564, %v2566
        %v2568 = vrot.slane %v2336, 2
        %v2569 = vrot.slane %v2337, 2
        %v2570 = vsel %vm684, %v2568, %v2569
        %v2571 = vrot.slane %v2338, 2
        %v2572 = vsel %vm684, %v2569, %v2571
        %2573 = vrot.lane.b32.xlu0 %v2389, 16
        %v2574 = vpop.permute.xlu0 %2573
        %2575 = vrot.lane.b32.xlu0 %v2391, 16
        %v2576 = vpop.permute.xlu0 %2575
        %2577 = vrot.lane.b32.xlu0 %v2394, 16
        %v2578 = vpop.permute.xlu0 %2577
        %2579 = vrot.lane.b32.xlu0 %v2396, 16
        %v2580 = vpop.permute.xlu0 %2579
        %2581 = vrot.lane.b32.xlu0 %v2399, 16
        %v2582 = vpop.permute.xlu0 %2581
        %2583 = vrot.lane.b32.xlu0 %v2401, 16
        %v2584 = vpop.permute.xlu0 %2583
        %2585 = vrot.lane.b32.xlu0 %v2404, 16
        %v2586 = vpop.permute.xlu0 %2585
        %2587 = vrot.lane.b32.xlu0 %v2406, 16
        %v2588 = vpop.permute.xlu0 %2587
        %2589 = vrot.lane.b32.xlu0 %v2409, 16
        %v2590 = vpop.permute.xlu0 %2589
        %2591 = vrot.lane.b32.xlu0 %v2411, 16
        %v2592 = vpop.permute.xlu0 %2591
        %2593 = vrot.lane.b32.xlu0 %v2414, 16
        %v2594 = vpop.permute.xlu0 %2593
        %2595 = vrot.lane.b32.xlu0 %v2416, 16
        %v2596 = vpop.permute.xlu0 %2595
        %2597 = vrot.lane.b32.xlu0 %v2419, 16
        %v2598 = vpop.permute.xlu0 %2597
        %2599 = vrot.lane.b32.xlu0 %v2421, 16
        %v2600 = vpop.permute.xlu0 %2599
        %2601 = vrot.lane.b32.xlu0 %v2424, 16
        %v2602 = vpop.permute.xlu0 %2601
        %2603 = vrot.lane.b32.xlu0 %v2426, 16
        %v2604 = vpop.permute.xlu0 %2603
        %2605 = vrot.lane.b32.xlu0 %v2429, 16
        %v2606 = vpop.permute.xlu0 %2605
        %2607 = vrot.lane.b32.xlu0 %v2431, 16
        %v2608 = vpop.permute.xlu0 %2607
        %2609 = vrot.lane.b32.xlu0 %v2434, 16
        %v2610 = vpop.permute.xlu0 %2609
        %2611 = vrot.lane.b32.xlu0 %v2436, 16
        %v2612 = vpop.permute.xlu0 %2611
        %2613 = vrot.lane.b32.xlu0 %v2439, 16
        %v2614 = vpop.permute.xlu0 %2613
        %2615 = vrot.lane.b32.xlu0 %v2441, 16
        %v2616 = vpop.permute.xlu0 %2615
        %2617 = vrot.lane.b32.xlu0 %v2444, 16
        %v2618 = vpop.permute.xlu0 %2617
        %2619 = vrot.lane.b32.xlu0 %v2446, 16
        %v2620 = vpop.permute.xlu0 %2619
        %2621 = vrot.lane.b32.xlu0 %v2449, 16
        %v2622 = vpop.permute.xlu0 %2621
        %2623 = vrot.lane.b32.xlu0 %v2451, 16
        %v2624 = vpop.permute.xlu0 %2623
        %2625 = vrot.lane.b32.xlu0 %v2454, 16
        %v2626 = vpop.permute.xlu0 %2625
        %2627 = vrot.lane.b32.xlu0 %v2456, 16
        %v2628 = vpop.permute.xlu0 %2627
        %2629 = vrot.lane.b32.xlu0 %v2459, 16
        %v2630 = vpop.permute.xlu0 %2629
        %2631 = vrot.lane.b32.xlu0 %v2461, 16
        %v2632 = vpop.permute.xlu0 %2631
        %2633 = vrot.lane.b32.xlu0 %v2464, 16
        %v2634 = vpop.permute.xlu0 %2633
        %2635 = vrot.lane.b32.xlu0 %v2466, 16
        %v2636 = vpop.permute.xlu0 %2635
        %2669 = vrot.lane.b32.xlu0 %v2469, 32
        %v2670 = vpop.permute.xlu0 %2669
        %2671 = vrot.lane.b32.xlu0 %v2471, 32
        %v2672 = vpop.permute.xlu0 %2671
        %2673 = vrot.lane.b32.xlu0 %v2474, 32
        %v2674 = vpop.permute.xlu0 %2673
        %2675 = vrot.lane.b32.xlu0 %v2476, 32
        %v2676 = vpop.permute.xlu0 %2675
        %2677 = vrot.lane.b32.xlu0 %v2479, 32
        %v2678 = vpop.permute.xlu0 %2677
        %2679 = vrot.lane.b32.xlu0 %v2481, 32
        %v2680 = vpop.permute.xlu0 %2679
        %2681 = vrot.lane.b32.xlu0 %v2484, 32
        %v2682 = vpop.permute.xlu0 %2681
        %2683 = vrot.lane.b32.xlu0 %v2486, 32
        %v2684 = vpop.permute.xlu0 %2683
        %2685 = vrot.lane.b32.xlu0 %v2489, 32
        %v2686 = vpop.permute.xlu0 %2685
        %2687 = vrot.lane.b32.xlu0 %v2491, 32
        %v2688 = vpop.permute.xlu0 %2687
        %2689 = vrot.lane.b32.xlu0 %v2494, 32
        %v2690 = vpop.permute.xlu0 %2689
        %2691 = vrot.lane.b32.xlu0 %v2496, 32
        %v2692 = vpop.permute.xlu0 %2691
        %2693 = vrot.lane.b32.xlu0 %v2499, 32
        %v2694 = vpop.permute.xlu0 %2693
        %2695 = vrot.lane.b32.xlu0 %v2501, 32
        %v2696 = vpop.permute.xlu0 %2695
        %2697 = vrot.lane.b32.xlu0 %v2504, 32
        %v2698 = vpop.permute.xlu0 %2697
        %2699 = vrot.lane.b32.xlu0 %v2506, 32
        %v2700 = vpop.permute.xlu0 %2699
        %2701 = vrot.lane.b32.xlu0 %v2509, 32
        %v2702 = vpop.permute.xlu0 %2701
        %2703 = vrot.lane.b32.xlu0 %v2511, 32
        %v2704 = vpop.permute.xlu0 %2703
        %2705 = vrot.lane.b32.xlu0 %v2514, 32
        %v2706 = vpop.permute.xlu0 %2705
        %2707 = vrot.lane.b32.xlu0 %v2516, 32
        %v2708 = vpop.permute.xlu0 %2707
        %2709 = vrot.lane.b32.xlu0 %v2519, 32
        %v2710 = vpop.permute.xlu0 %2709
        %2711 = vrot.lane.b32.xlu0 %v2521, 32
        %v2712 = vpop.permute.xlu0 %2711
        %2713 = vrot.lane.b32.xlu0 %v2524, 32
        %v2714 = vpop.permute.xlu0 %2713
        %2715 = vrot.lane.b32.xlu0 %v2526, 32
        %v2716 = vpop.permute.xlu0 %2715
        %2717 = vrot.lane.b32.xlu0 %v2529, 32
        %v2718 = vpop.permute.xlu0 %2717
        %2719 = vrot.lane.b32.xlu0 %v2531, 32
        %v2720 = vpop.permute.xlu0 %2719
        %2721 = vrot.lane.b32.xlu0 %v2534, 32
        %v2722 = vpop.permute.xlu0 %2721
        %2723 = vrot.lane.b32.xlu0 %v2536, 32
        %v2724 = vpop.permute.xlu0 %2723
        %2725 = vrot.lane.b32.xlu0 %v2539, 32
        %v2726 = vpop.permute.xlu0 %2725
        %2727 = vrot.lane.b32.xlu0 %v2541, 32
        %v2728 = vpop.permute.xlu0 %2727
        %2729 = vrot.lane.b32.xlu0 %v2544, 32
        %v2730 = vpop.permute.xlu0 %2729
        %2731 = vrot.lane.b32.xlu0 %v2546, 32
        %v2732 = vpop.permute.xlu0 %2731
        %2765 = vrot.lane.b32.xlu0 %v2288, 48
        %v2766 = vpop.permute.xlu0 %2765
        %2767 = vrot.lane.b32.xlu0 %v2289, 48
        %v2768 = vpop.permute.xlu0 %2767
        %2769 = vrot.lane.b32.xlu0 %v2291, 48
        %v2770 = vpop.permute.xlu0 %2769
        %2771 = vrot.lane.b32.xlu0 %v2292, 48
        %v2772 = vpop.permute.xlu0 %2771
        %2773 = vrot.lane.b32.xlu0 %v2294, 48
        %v2774 = vpop.permute.xlu0 %2773
        %2775 = vrot.lane.b32.xlu0 %v2295, 48
        %v2776 = vpop.permute.xlu0 %2775
        %2777 = vrot.lane.b32.xlu0 %v2297, 48
        %v2778 = vpop.permute.xlu0 %2777
        %2779 = vrot.lane.b32.xlu0 %v2298, 48
        %v2780 = vpop.permute.xlu0 %2779
        %2781 = vrot.lane.b32.xlu0 %v2300, 48
        %v2782 = vpop.permute.xlu0 %2781
        %2783 = vrot.lane.b32.xlu0 %v2301, 48
        %v2784 = vpop.permute.xlu0 %2783
        %2785 = vrot.lane.b32.xlu0 %v2303, 48
        %v2786 = vpop.permute.xlu0 %2785
        %2787 = vrot.lane.b32.xlu0 %v2304, 48
        %v2788 = vpop.permute.xlu0 %2787
        %2789 = vrot.lane.b32.xlu0 %v2306, 48
        %v2790 = vpop.permute.xlu0 %2789
        %2791 = vrot.lane.b32.xlu0 %v2307, 48
        %v2792 = vpop.permute.xlu0 %2791
        %2793 = vrot.lane.b32.xlu0 %v2309, 48
        %v2794 = vpop.permute.xlu0 %2793
        %2795 = vrot.lane.b32.xlu0 %v2310, 48
        %v2796 = vpop.permute.xlu0 %2795
        %2797 = vrot.lane.b32.xlu0 %v2312, 48
        %v2798 = vpop.permute.xlu0 %2797
        %2799 = vrot.lane.b32.xlu0 %v2313, 48
        %v2800 = vpop.permute.xlu0 %2799
        %2801 = vrot.lane.b32.xlu0 %v2315, 48
        %v2802 = vpop.permute.xlu0 %2801
        %2803 = vrot.lane.b32.xlu0 %v2316, 48
        %v2804 = vpop.permute.xlu0 %2803
        %2805 = vrot.lane.b32.xlu0 %v2318, 48
        %v2806 = vpop.permute.xlu0 %2805
        %2807 = vrot.lane.b32.xlu0 %v2319, 48
        %v2808 = vpop.permute.xlu0 %2807
        %2809 = vrot.lane.b32.xlu0 %v2321, 48
        %v2810 = vpop.permute.xlu0 %2809
        %2811 = vrot.lane.b32.xlu0 %v2322, 48
        %v2812 = vpop.permute.xlu0 %2811
        %2813 = vrot.lane.b32.xlu0 %v2324, 48
        %v2814 = vpop.permute.xlu0 %2813
        %2815 = vrot.lane.b32.xlu0 %v2325, 48
        %v2816 = vpop.permute.xlu0 %2815
        %2817 = vrot.lane.b32.xlu0 %v2327, 48
        %v2818 = vpop.permute.xlu0 %2817
        %2819 = vrot.lane.b32.xlu0 %v2328, 48
        %v2820 = vpop.permute.xlu0 %2819
        %2821 = vrot.lane.b32.xlu0 %v2330, 48
        %v2822 = vpop.permute.xlu0 %2821
        %2823 = vrot.lane.b32.xlu0 %v2331, 48
        %v2824 = vpop.permute.xlu0 %2823
        %2825 = vrot.lane.b32.xlu0 %v2333, 48
        %v2826 = vpop.permute.xlu0 %2825
        %2827 = vrot.lane.b32.xlu0 %v2334, 48
        %v2828 = vpop.permute.xlu0 %2827
        %2861 = vrot.lane.b32.xlu0 %v2394, 64
        %v2862 = vpop.permute.xlu0 %2861
        %2863 = vrot.lane.b32.xlu0 %v2396, 64
        %v2864 = vpop.permute.xlu0 %2863
        %2865 = vrot.lane.b32.xlu0 %v2399, 64
        %v2866 = vpop.permute.xlu0 %2865
        %2867 = vrot.lane.b32.xlu0 %v2401, 64
        %v2868 = vpop.permute.xlu0 %2867
        %2869 = vrot.lane.b32.xlu0 %v2404, 64
        %v2870 = vpop.permute.xlu0 %2869
        %2871 = vrot.lane.b32.xlu0 %v2406, 64
        %v2872 = vpop.permute.xlu0 %2871
        %2873 = vrot.lane.b32.xlu0 %v2409, 64
        %v2874 = vpop.permute.xlu0 %2873
        %2875 = vrot.lane.b32.xlu0 %v2411, 64
        %v2876 = vpop.permute.xlu0 %2875
        %2877 = vrot.lane.b32.xlu0 %v2414, 64
        %v2878 = vpop.permute.xlu0 %2877
        %2879 = vrot.lane.b32.xlu0 %v2416, 64
        %v2880 = vpop.permute.xlu0 %2879
        %2881 = vrot.lane.b32.xlu0 %v2419, 64
        %v2882 = vpop.permute.xlu0 %2881
        %2883 = vrot.lane.b32.xlu0 %v2421, 64
        %v2884 = vpop.permute.xlu0 %2883
        %2885 = vrot.lane.b32.xlu0 %v2424, 64
        %v2886 = vpop.permute.xlu0 %2885
        %2887 = vrot.lane.b32.xlu0 %v2426, 64
        %v2888 = vpop.permute.xlu0 %2887
        %2889 = vrot.lane.b32.xlu0 %v2429, 64
        %v2890 = vpop.permute.xlu0 %2889
        %2891 = vrot.lane.b32.xlu0 %v2431, 64
        %v2892 = vpop.permute.xlu0 %2891
        %2893 = vrot.lane.b32.xlu0 %v2434, 64
        %v2894 = vpop.permute.xlu0 %2893
        %2895 = vrot.lane.b32.xlu0 %v2436, 64
        %v2896 = vpop.permute.xlu0 %2895
        %2897 = vrot.lane.b32.xlu0 %v2439, 64
        %v2898 = vpop.permute.xlu0 %2897
        %2899 = vrot.lane.b32.xlu0 %v2441, 64
        %v2900 = vpop.permute.xlu0 %2899
        %2901 = vrot.lane.b32.xlu0 %v2444, 64
        %v2902 = vpop.permute.xlu0 %2901
        %2903 = vrot.lane.b32.xlu0 %v2446, 64
        %v2904 = vpop.permute.xlu0 %2903
        %2905 = vrot.lane.b32.xlu0 %v2449, 64
        %v2906 = vpop.permute.xlu0 %2905
        %2907 = vrot.lane.b32.xlu0 %v2451, 64
        %v2908 = vpop.permute.xlu0 %2907
        %2909 = vrot.lane.b32.xlu0 %v2454, 64
        %v2910 = vpop.permute.xlu0 %2909
        %2911 = vrot.lane.b32.xlu0 %v2456, 64
        %v2912 = vpop.permute.xlu0 %2911
        %2913 = vrot.lane.b32.xlu0 %v2459, 64
        %v2914 = vpop.permute.xlu0 %2913
        %2915 = vrot.lane.b32.xlu0 %v2461, 64
        %v2916 = vpop.permute.xlu0 %2915
        %2917 = vrot.lane.b32.xlu0 %v2464, 64
        %v2918 = vpop.permute.xlu0 %2917
        %2919 = vrot.lane.b32.xlu0 %v2466, 64
        %v2920 = vpop.permute.xlu0 %2919
        %2921 = vrot.lane.b32.xlu0 %v2552, 64
        %v2922 = vpop.permute.xlu0 %2921
        %2923 = vrot.lane.b32.xlu0 %v2554, 64
        %v2924 = vpop.permute.xlu0 %2923
        %2957 = vrot.lane.b32.xlu0 %v2474, 80
        %v2958 = vpop.permute.xlu0 %2957
        %2959 = vrot.lane.b32.xlu0 %v2476, 80
        %v2960 = vpop.permute.xlu0 %2959
        %2961 = vrot.lane.b32.xlu0 %v2479, 80
        %v2962 = vpop.permute.xlu0 %2961
        %2963 = vrot.lane.b32.xlu0 %v2481, 80
        %v2964 = vpop.permute.xlu0 %2963
        %2965 = vrot.lane.b32.xlu0 %v2484, 80
        %v2966 = vpop.permute.xlu0 %2965
        %2967 = vrot.lane.b32.xlu0 %v2486, 80
        %v2968 = vpop.permute.xlu0 %2967
        %2969 = vrot.lane.b32.xlu0 %v2489, 80
        %v2970 = vpop.permute.xlu0 %2969
        %2971 = vrot.lane.b32.xlu0 %v2491, 80
        %v2972 = vpop.permute.xlu0 %2971
        %2973 = vrot.lane.b32.xlu0 %v2494, 80
        %v2974 = vpop.permute.xlu0 %2973
        %2975 = vrot.lane.b32.xlu0 %v2496, 80
        %v2976 = vpop.permute.xlu0 %2975
        %2977 = vrot.lane.b32.xlu0 %v2499, 80
        %v2978 = vpop.permute.xlu0 %2977
        %2979 = vrot.lane.b32.xlu0 %v2501, 80
        %v2980 = vpop.permute.xlu0 %2979
        %2981 = vrot.lane.b32.xlu0 %v2504, 80
        %v2982 = vpop.permute.xlu0 %2981
        %2983 = vrot.lane.b32.xlu0 %v2506, 80
        %v2984 = vpop.permute.xlu0 %2983
        %2985 = vrot.lane.b32.xlu0 %v2509, 80
        %v2986 = vpop.permute.xlu0 %2985
        %2987 = vrot.lane.b32.xlu0 %v2511, 80
        %v2988 = vpop.permute.xlu0 %2987
        %2989 = vrot.lane.b32.xlu0 %v2514, 80
        %v2990 = vpop.permute.xlu0 %2989
        %2991 = vrot.lane.b32.xlu0 %v2516, 80
        %v2992 = vpop.permute.xlu0 %2991
        %2993 = vrot.lane.b32.xlu0 %v2519, 80
        %v2994 = vpop.permute.xlu0 %2993
        %2995 = vrot.lane.b32.xlu0 %v2521, 80
        %v2996 = vpop.permute.xlu0 %2995
        %2997 = vrot.lane.b32.xlu0 %v2524, 80
        %v2998 = vpop.permute.xlu0 %2997
        %2999 = vrot.lane.b32.xlu0 %v2526, 80
        %v3000 = vpop.permute.xlu0 %2999
        %3001 = vrot.lane.b32.xlu0 %v2529, 80
        %v3002 = vpop.permute.xlu0 %3001
        %3003 = vrot.lane.b32.xlu0 %v2531, 80
        %v3004 = vpop.permute.xlu0 %3003
        %3005 = vrot.lane.b32.xlu0 %v2534, 80
        %v3006 = vpop.permute.xlu0 %3005
        %3007 = vrot.lane.b32.xlu0 %v2536, 80
        %v3008 = vpop.permute.xlu0 %3007
        %3009 = vrot.lane.b32.xlu0 %v2539, 80
        %v3010 = vpop.permute.xlu0 %3009
        %3011 = vrot.lane.b32.xlu0 %v2541, 80
        %v3012 = vpop.permute.xlu0 %3011
        %3013 = vrot.lane.b32.xlu0 %v2544, 80
        %v3014 = vpop.permute.xlu0 %3013
        %3015 = vrot.lane.b32.xlu0 %v2546, 80
        %v3016 = vpop.permute.xlu0 %3015
        %3017 = vrot.lane.b32.xlu0 %v2557, 80
        %v3018 = vpop.permute.xlu0 %3017
        %3019 = vrot.lane.b32.xlu0 %v2559, 80
        %v3020 = vpop.permute.xlu0 %3019
        %3053 = vrot.lane.b32.xlu0 %v2291, 96
        %v3054 = vpop.permute.xlu0 %3053
        %3055 = vrot.lane.b32.xlu0 %v2292, 96
        %v3056 = vpop.permute.xlu0 %3055
        %3057 = vrot.lane.b32.xlu0 %v2294, 96
        %v3058 = vpop.permute.xlu0 %3057
        %3059 = vrot.lane.b32.xlu0 %v2295, 96
        %v3060 = vpop.permute.xlu0 %3059
        %3061 = vrot.lane.b32.xlu0 %v2297, 96
        %v3062 = vpop.permute.xlu0 %3061
        %3063 = vrot.lane.b32.xlu0 %v2298, 96
        %v3064 = vpop.permute.xlu0 %3063
        %3065 = vrot.lane.b32.xlu0 %v2300, 96
        %v3066 = vpop.permute.xlu0 %3065
        %3067 = vrot.lane.b32.xlu0 %v2301, 96
        %v3068 = vpop.permute.xlu0 %3067
        %3069 = vrot.lane.b32.xlu0 %v2303, 96
        %v3070 = vpop.permute.xlu0 %3069
        %3071 = vrot.lane.b32.xlu0 %v2304, 96
        %v3072 = vpop.permute.xlu0 %3071
        %3073 = vrot.lane.b32.xlu0 %v2306, 96
        %v3074 = vpop.permute.xlu0 %3073
        %3075 = vrot.lane.b32.xlu0 %v2307, 96
        %v3076 = vpop.permute.xlu0 %3075
        %3077 = vrot.lane.b32.xlu0 %v2309, 96
        %v3078 = vpop.permute.xlu0 %3077
        %3079 = vrot.lane.b32.xlu0 %v2310, 96
        %v3080 = vpop.permute.xlu0 %3079
        %3081 = vrot.lane.b32.xlu0 %v2312, 96
        %v3082 = vpop.permute.xlu0 %3081
        %3083 = vrot.lane.b32.xlu0 %v2313, 96
        %v3084 = vpop.permute.xlu0 %3083
        %3085 = vrot.lane.b32.xlu0 %v2315, 96
        %v3086 = vpop.permute.xlu0 %3085
        %3087 = vrot.lane.b32.xlu0 %v2316, 96
        %v3088 = vpop.permute.xlu0 %3087
        %3089 = vrot.lane.b32.xlu0 %v2318, 96
        %v3090 = vpop.permute.xlu0 %3089
        %3091 = vrot.lane.b32.xlu0 %v2319, 96
        %v3092 = vpop.permute.xlu0 %3091
        %3093 = vrot.lane.b32.xlu0 %v2321, 96
        %v3094 = vpop.permute.xlu0 %3093
        %3095 = vrot.lane.b32.xlu0 %v2322, 96
        %v3096 = vpop.permute.xlu0 %3095
        %3097 = vrot.lane.b32.xlu0 %v2324, 96
        %v3098 = vpop.permute.xlu0 %3097
        %3099 = vrot.lane.b32.xlu0 %v2325, 96
        %v3100 = vpop.permute.xlu0 %3099
        %3101 = vrot.lane.b32.xlu0 %v2327, 96
        %v3102 = vpop.permute.xlu0 %3101
        %3103 = vrot.lane.b32.xlu0 %v2328, 96
        %v3104 = vpop.permute.xlu0 %3103
        %3105 = vrot.lane.b32.xlu0 %v2330, 96
        %v3106 = vpop.permute.xlu0 %3105
        %3107 = vrot.lane.b32.xlu0 %v2331, 96
        %v3108 = vpop.permute.xlu0 %3107
        %3109 = vrot.lane.b32.xlu0 %v2333, 96
        %v3110 = vpop.permute.xlu0 %3109
        %3111 = vrot.lane.b32.xlu0 %v2334, 96
        %v3112 = vpop.permute.xlu0 %3111
        %3113 = vrot.lane.b32.xlu0 %v2336, 96
        %v3114 = vpop.permute.xlu0 %3113
        %3115 = vrot.lane.b32.xlu0 %v2337, 96
        %v3116 = vpop.permute.xlu0 %3115
        %3149 = vrot.lane.b32.xlu0 %v2399, 112
        %v3150 = vpop.permute.xlu0 %3149
        %3151 = vrot.lane.b32.xlu0 %v2401, 112
        %v3152 = vpop.permute.xlu0 %3151
        %3153 = vrot.lane.b32.xlu0 %v2404, 112
        %v3154 = vpop.permute.xlu0 %3153
        %3155 = vrot.lane.b32.xlu0 %v2406, 112
        %v3156 = vpop.permute.xlu0 %3155
        %3157 = vrot.lane.b32.xlu0 %v2409, 112
        %v3158 = vpop.permute.xlu0 %3157
        %3159 = vrot.lane.b32.xlu0 %v2411, 112
        %v3160 = vpop.permute.xlu0 %3159
        %3161 = vrot.lane.b32.xlu0 %v2414, 112
        %v3162 = vpop.permute.xlu0 %3161
        %3163 = vrot.lane.b32.xlu0 %v2416, 112
        %v3164 = vpop.permute.xlu0 %3163
        %3165 = vrot.lane.b32.xlu0 %v2419, 112
        %v3166 = vpop.permute.xlu0 %3165
        %3167 = vrot.lane.b32.xlu0 %v2421, 112
        %v3168 = vpop.permute.xlu0 %3167
        %3169 = vrot.lane.b32.xlu0 %v2424, 112
        %v3170 = vpop.permute.xlu0 %3169
        %3171 = vrot.lane.b32.xlu0 %v2426, 112
        %v3172 = vpop.permute.xlu0 %3171
        %3173 = vrot.lane.b32.xlu0 %v2429, 112
        %v3174 = vpop.permute.xlu0 %3173
        %3175 = vrot.lane.b32.xlu0 %v2431, 112
        %v3176 = vpop.permute.xlu0 %3175
        %3177 = vrot.lane.b32.xlu0 %v2434, 112
        %v3178 = vpop.permute.xlu0 %3177
        %3179 = vrot.lane.b32.xlu0 %v2436, 112
        %v3180 = vpop.permute.xlu0 %3179
        %3181 = vrot.lane.b32.xlu0 %v2439, 112
        %v3182 = vpop.permute.xlu0 %3181
        %3183 = vrot.lane.b32.xlu0 %v2441, 112
        %v3184 = vpop.permute.xlu0 %3183
        %3185 = vrot.lane.b32.xlu0 %v2444, 112
        %v3186 = vpop.permute.xlu0 %3185
        %3187 = vrot.lane.b32.xlu0 %v2446, 112
        %v3188 = vpop.permute.xlu0 %3187
        %3189 = vrot.lane.b32.xlu0 %v2449, 112
        %v3190 = vpop.permute.xlu0 %3189
        %3191 = vrot.lane.b32.xlu0 %v2451, 112
        %v3192 = vpop.permute.xlu0 %3191
        %3193 = vrot.lane.b32.xlu0 %v2454, 112
        %v3194 = vpop.permute.xlu0 %3193
        %3195 = vrot.lane.b32.xlu0 %v2456, 112
        %v3196 = vpop.permute.xlu0 %3195
        %3197 = vrot.lane.b32.xlu0 %v2459, 112
        %v3198 = vpop.permute.xlu0 %3197
        %3199 = vrot.lane.b32.xlu0 %v2461, 112
        %v3200 = vpop.permute.xlu0 %3199
        %3201 = vrot.lane.b32.xlu0 %v2464, 112
        %v3202 = vpop.permute.xlu0 %3201
        %3203 = vrot.lane.b32.xlu0 %v2466, 112
        %v3204 = vpop.permute.xlu0 %3203
        %3205 = vrot.lane.b32.xlu0 %v2552, 112
        %v3206 = vpop.permute.xlu0 %3205
        %3207 = vrot.lane.b32.xlu0 %v2554, 112
        %v3208 = vpop.permute.xlu0 %3207
        %3209 = vrot.lane.b32.xlu0 %v2565, 112
        %v3210 = vpop.permute.xlu0 %3209
        %3211 = vrot.lane.b32.xlu0 %v2567, 112
        %v3212 = vpop.permute.xlu0 %3211
        %v3245 = vsel %vm318, %v2285, %v2574
        %v3246 = vsel %vm318, %v2286, %v2576
        %v3247 = vsel %vm318, %v2288, %v2578
        %v3248 = vsel %vm318, %v2289, %v2580
        %v3249 = vsel %vm318, %v2291, %v2582
        %v3250 = vsel %vm318, %v2292, %v2584
        %v3251 = vsel %vm318, %v2294, %v2586
        %v3252 = vsel %vm318, %v2295, %v2588
        %v3253 = vsel %vm318, %v2297, %v2590
        %v3254 = vsel %vm318, %v2298, %v2592
        %v3255 = vsel %vm318, %v2300, %v2594
        %v3256 = vsel %vm318, %v2301, %v2596
        %v3257 = vsel %vm318, %v2303, %v2598
        %v3258 = vsel %vm318, %v2304, %v2600
        %v3259 = vsel %vm318, %v2306, %v2602
        %v3260 = vsel %vm318, %v2307, %v2604
        %v3261 = vsel %vm318, %v2309, %v2606
        %v3262 = vsel %vm318, %v2310, %v2608
        %v3263 = vsel %vm318, %v2312, %v2610
        %v3264 = vsel %vm318, %v2313, %v2612
        %v3265 = vsel %vm318, %v2315, %v2614
        %v3266 = vsel %vm318, %v2316, %v2616
        %v3267 = vsel %vm318, %v2318, %v2618
        %v3268 = vsel %vm318, %v2319, %v2620
        %v3269 = vsel %vm318, %v2321, %v2622
        %v3270 = vsel %vm318, %v2322, %v2624
        %v3271 = vsel %vm318, %v2324, %v2626
        %v3272 = vsel %vm318, %v2325, %v2628
        %v3273 = vsel %vm318, %v2327, %v2630
        %v3274 = vsel %vm318, %v2328, %v2632
        %v3275 = vsel %vm318, %v2330, %v2634
        %v3276 = vsel %vm318, %v2331, %v2636
        %vm3277 = vcmask 261120
        %v3278 = vsel %vm3277, %v3245, %v2670
        %v3279 = vsel %vm3277, %v3246, %v2672
        %v3280 = vsel %vm3277, %v3247, %v2674
        %v3281 = vsel %vm3277, %v3248, %v2676
        %v3282 = vsel %vm3277, %v3249, %v2678
        %v3283 = vsel %vm3277, %v3250, %v2680
        %v3284 = vsel %vm3277, %v3251, %v2682
        %v3285 = vsel %vm3277, %v3252, %v2684
        %v3286 = vsel %vm3277, %v3253, %v2686
        %v3287 = vsel %vm3277, %v3254, %v2688
        %v3288 = vsel %vm3277, %v3255, %v2690
        %v3289 = vsel %vm3277, %v3256, %v2692
        %v3290 = vsel %vm3277, %v3257, %v2694
        %v3291 = vsel %vm3277, %v3258, %v2696
        %v3292 = vsel %vm3277, %v3259, %v2698
        %v3293 = vsel %vm3277, %v3260, %v2700
        %v3294 = vsel %vm3277, %v3261, %v2702
        %v3295 = vsel %vm3277, %v3262, %v2704
        %v3296 = vsel %vm3277, %v3263, %v2706
        %v3297 = vsel %vm3277, %v3264, %v2708
        %v3298 = vsel %vm3277, %v3265, %v2710
        %v3299 = vsel %vm3277, %v3266, %v2712
        %v3300 = vsel %vm3277, %v3267, %v2714
        %v3301 = vsel %vm3277, %v3268, %v2716
        %v3302 = vsel %vm3277, %v3269, %v2718
        %v3303 = vsel %vm3277, %v3270, %v2720
        %v3304 = vsel %vm3277, %v3271, %v2722
        %v3305 = vsel %vm3277, %v3272, %v2724
        %v3306 = vsel %vm3277, %v3273, %v2726
        %v3307 = vsel %vm3277, %v3274, %v2728
        %v3308 = vsel %vm3277, %v3275, %v2730
        %v3309 = vsel %vm3277, %v3276, %v2732
        %vm3310 = vcmask 392192
        %v3311 = vsel %vm3310, %v3278, %v2766
        %v3312 = vsel %vm3310, %v3279, %v2768
        %v3313 = vsel %vm3310, %v3280, %v2770
        %v3314 = vsel %vm3310, %v3281, %v2772
        %v3315 = vsel %vm3310, %v3282, %v2774
        %v3316 = vsel %vm3310, %v3283, %v2776
        %v3317 = vsel %vm3310, %v3284, %v2778
        %v3318 = vsel %vm3310, %v3285, %v2780
        %v3319 = vsel %vm3310, %v3286, %v2782
        %v3320 = vsel %vm3310, %v3287, %v2784
        %v3321 = vsel %vm3310, %v3288, %v2786
        %v3322 = vsel %vm3310, %v3289, %v2788
        %v3323 = vsel %vm3310, %v3290, %v2790
        %v3324 = vsel %vm3310, %v3291, %v2792
        %v3325 = vsel %vm3310, %v3292, %v2794
        %v3326 = vsel %vm3310, %v3293, %v2796
        %v3327 = vsel %vm3310, %v3294, %v2798
        %v3328 = vsel %vm3310, %v3295, %v2800
        %v3329 = vsel %vm3310, %v3296, %v2802
        %v3330 = vsel %vm3310, %v3297, %v2804
        %v3331 = vsel %vm3310, %v3298, %v2806
        %v3332 = vsel %vm3310, %v3299, %v2808
        %v3333 = vsel %vm3310, %v3300, %v2810
        %v3334 = vsel %vm3310, %v3301, %v2812
        %v3335 = vsel %vm3310, %v3302, %v2814
        %v3336 = vsel %vm3310, %v3303, %v2816
        %v3337 = vsel %vm3310, %v3304, %v2818
        %v3338 = vsel %vm3310, %v3305, %v2820
        %v3339 = vsel %vm3310, %v3306, %v2822
        %v3340 = vsel %vm3310, %v3307, %v2824
        %v3341 = vsel %vm3310, %v3308, %v2826
        %v3342 = vsel %vm3310, %v3309, %v2828
        %vm3343 = vcmask 523264
        %v3344 = vsel %vm3343, %v3311, %v2862
        %v3345 = vsel %vm3343, %v3312, %v2864
        %v3346 = vsel %vm3343, %v3313, %v2866
        %v3347 = vsel %vm3343, %v3314, %v2868
        %v3348 = vsel %vm3343, %v3315, %v2870
        %v3349 = vsel %vm3343, %v3316, %v2872
        %v3350 = vsel %vm3343, %v3317, %v2874
        %v3351 = vsel %vm3343, %v3318, %v2876
        %v3352 = vsel %vm3343, %v3319, %v2878
        %v3353 = vsel %vm3343, %v3320, %v2880
        %v3354 = vsel %vm3343, %v3321, %v2882
        %v3355 = vsel %vm3343, %v3322, %v2884
        %v3356 = vsel %vm3343, %v3323, %v2886
        %v3357 = vsel %vm3343, %v3324, %v2888
        %v3358 = vsel %vm3343, %v3325, %v2890
        %v3359 = vsel %vm3343, %v3326, %v2892
        %v3360 = vsel %vm3343, %v3327, %v2894
        %v3361 = vsel %vm3343, %v3328, %v2896
        %v3362 = vsel %vm3343, %v3329, %v2898
        %v3363 = vsel %vm3343, %v3330, %v2900
        %v3364 = vsel %vm3343, %v3331, %v2902
        %v3365 = vsel %vm3343, %v3332, %v2904
        %v3366 = vsel %vm3343, %v3333, %v2906
        %v3367 = vsel %vm3343, %v3334, %v2908
        %v3368 = vsel %vm3343, %v3335, %v2910
        %v3369 = vsel %vm3343, %v3336, %v2912
        %v3370 = vsel %vm3343, %v3337, %v2914
        %v3371 = vsel %vm3343, %v3338, %v2916
        %v3372 = vsel %vm3343, %v3339, %v2918
        %v3373 = vsel %vm3343, %v3340, %v2920
        %v3374 = vsel %vm3343, %v3341, %v2922
        %v3375 = vsel %vm3343, %v3342, %v2924
        %vm3376 = vcmask 654336
        %v3377 = vsel %vm3376, %v3344, %v2958
        %v3378 = vsel %vm3376, %v3345, %v2960
        %v3379 = vsel %vm3376, %v3346, %v2962
        %v3380 = vsel %vm3376, %v3347, %v2964
        %v3381 = vsel %vm3376, %v3348, %v2966
        %v3382 = vsel %vm3376, %v3349, %v2968
        %v3383 = vsel %vm3376, %v3350, %v2970
        %v3384 = vsel %vm3376, %v3351, %v2972
        %v3385 = vsel %vm3376, %v3352, %v2974
        %v3386 = vsel %vm3376, %v3353, %v2976
        %v3387 = vsel %vm3376, %v3354, %v2978
        %v3388 = vsel %vm3376, %v3355, %v2980
        %v3389 = vsel %vm3376, %v3356, %v2982
        %v3390 = vsel %vm3376, %v3357, %v2984
        %v3391 = vsel %vm3376, %v3358, %v2986
        %v3392 = vsel %vm3376, %v3359, %v2988
        %v3393 = vsel %vm3376, %v3360, %v2990
        %v3394 = vsel %vm3376, %v3361, %v2992
        %v3395 = vsel %vm3376, %v3362, %v2994
        %v3396 = vsel %vm3376, %v3363, %v2996
        %v3397 = vsel %vm3376, %v3364, %v2998
        %v3398 = vsel %vm3376, %v3365, %v3000
        %v3399 = vsel %vm3376, %v3366, %v3002
        %v3400 = vsel %vm3376, %v3367, %v3004
        %v3401 = vsel %vm3376, %v3368, %v3006
        %v3402 = vsel %vm3376, %v3369, %v3008
        %v3403 = vsel %vm3376, %v3370, %v3010
        %v3404 = vsel %vm3376, %v3371, %v3012
        %v3405 = vsel %vm3376, %v3372, %v3014
        %v3406 = vsel %vm3376, %v3373, %v3016
        %v3407 = vsel %vm3376, %v3374, %v3018
        %v3408 = vsel %vm3376, %v3375, %v3020
        %vm3409 = vcmask 785408
        %v3410 = vsel %vm3409, %v3377, %v3054
        %v3411 = vsel %vm3409, %v3378, %v3056
        %v3412 = vsel %vm3409, %v3379, %v3058
        %v3413 = vsel %vm3409, %v3380, %v3060
        %v3414 = vsel %vm3409, %v3381, %v3062
        %v3415 = vsel %vm3409, %v3382, %v3064
        %v3416 = vsel %vm3409, %v3383, %v3066
        %v3417 = vsel %vm3409, %v3384, %v3068
        %v3418 = vsel %vm3409, %v3385, %v3070
        %v3419 = vsel %vm3409, %v3386, %v3072
        %v3420 = vsel %vm3409, %v3387, %v3074
        %v3421 = vsel %vm3409, %v3388, %v3076
        %v3422 = vsel %vm3409, %v3389, %v3078
        %v3423 = vsel %vm3409, %v3390, %v3080
        %v3424 = vsel %vm3409, %v3391, %v3082
        %v3425 = vsel %vm3409, %v3392, %v3084
        %v3426 = vsel %vm3409, %v3393, %v3086
        %v3427 = vsel %vm3409, %v3394, %v3088
        %v3428 = vsel %vm3409, %v3395, %v3090
        %v3429 = vsel %vm3409, %v3396, %v3092
        %v3430 = vsel %vm3409, %v3397, %v3094
        %v3431 = vsel %vm3409, %v3398, %v3096
        %v3432 = vsel %vm3409, %v3399, %v3098
        %v3433 = vsel %vm3409, %v3400, %v3100
        %v3434 = vsel %vm3409, %v3401, %v3102
        %v3435 = vsel %vm3409, %v3402, %v3104
        %v3436 = vsel %vm3409, %v3403, %v3106
        %v3437 = vsel %vm3409, %v3404, %v3108
        %v3438 = vsel %vm3409, %v3405, %v3110
        %v3439 = vsel %vm3409, %v3406, %v3112
        %v3440 = vsel %vm3409, %v3407, %v3114
        %v3441 = vsel %vm3409, %v3408, %v3116
        %vm3442 = vcmask 916480
        %v3443 = vsel %vm3442, %v3410, %v3150
        %v3444 = vsel %vm3442, %v3411, %v3152
        %v3445 = vsel %vm3442, %v3412, %v3154
        %v3446 = vsel %vm3442, %v3413, %v3156
        %v3447 = vsel %vm3442, %v3414, %v3158
        %v3448 = vsel %vm3442, %v3415, %v3160
        %v3449 = vsel %vm3442, %v3416, %v3162
        %v3450 = vsel %vm3442, %v3417, %v3164
        %v3451 = vsel %vm3442, %v3418, %v3166
        %v3452 = vsel %vm3442, %v3419, %v3168
        %v3453 = vsel %vm3442, %v3420, %v3170
        %v3454 = vsel %vm3442, %v3421, %v3172
        %v3455 = vsel %vm3442, %v3422, %v3174
        %v3456 = vsel %vm3442, %v3423, %v3176
        %v3457 = vsel %vm3442, %v3424, %v3178
        %v3458 = vsel %vm3442, %v3425, %v3180
        %v3459 = vsel %vm3442, %v3426, %v3182
        %v3460 = vsel %vm3442, %v3427, %v3184
        %v3461 = vsel %vm3442, %v3428, %v3186
        %v3462 = vsel %vm3442, %v3429, %v3188
        %v3463 = vsel %vm3442, %v3430, %v3190
        %v3464 = vsel %vm3442, %v3431, %v3192
        %v3465 = vsel %vm3442, %v3432, %v3194
        %v3466 = vsel %vm3442, %v3433, %v3196
        %v3467 = vsel %vm3442, %v3434, %v3198
        %v3468 = vsel %vm3442, %v3435, %v3200
        %v3469 = vsel %vm3442, %v3436, %v3202
        %v3470 = vsel %vm3442, %v3437, %v3204
        %v3471 = vsel %vm3442, %v3438, %v3206
        %v3472 = vsel %vm3442, %v3439, %v3208
        %v3473 = vsel %vm3442, %v3440, %v3210
        %v3474 = vsel %vm3442, %v3441, %v3212
        %v3475 = vld [vmem:[%s4] sm:$0xff]
        %v3476 = vld [vmem:[%s4 + $0x8] sm:$0xff]
        %v3477 = vld [vmem:[%s4 + $0x10] sm:$0xff]
        %v3478 = vld [vmem:[%s4 + $0x18] sm:$0xff]
        %v3479 = vld [vmem:[%s4 + $0x20] sm:$0xff]
        %v3480 = vld [vmem:[%s4 + $0x28] sm:$0xff]
        %v3481 = vld [vmem:[%s4 + $0x30] sm:$0xff]
        %v3482 = vld [vmem:[%s4 + $0x38] sm:$0xff]
        %v3483 = vld [vmem:[%s4 + $0x40] sm:$0xff]
        %v3484 = vld [vmem:[%s4 + $0x48] sm:$0xff]
        %v3485 = vld [vmem:[%s4 + $0x50] sm:$0xff]
        %v3486 = vld [vmem:[%s4 + $0x58] sm:$0xff]
        %v3487 = vld [vmem:[%s4 + $0x60] sm:$0xff]
        %v3488 = vld [vmem:[%s4 + $0x68] sm:$0xff]
        %v3489 = vld [vmem:[%s4 + $0x70] sm:$0xff]
        %v3490 = vld [vmem:[%s4 + $0x78] sm:$0xff]
        %v3491 = vld [vmem:[%s4 + $0x80] sm:$0xff]
        %v3492 = vld [vmem:[%s4 + $0x88] sm:$0xff]
        %v3493 = vld [vmem:[%s5] sm:$0x1]
        %v3495 = vlaneseq
        %v3496 = vshrl.u32 %v3495, 7
        %v3497 = vsub.s32 0, %v3496
        %v3498 = vrot.slane %v3493, %v3497
        %v3500 = vsel %vm318, %v2479, 0
        %v3502 = vsel %vm318, %v2481, 0
        %v3504 = vsel %vm318, %v2484, 0
        %v3506 = vsel %vm318, %v2486, 0
        %v3508 = vsel %vm318, %v2489, 0
        %v3510 = vsel %vm318, %v2491, 0
        %v3512 = vsel %vm318, %v2494, 0
        %v3514 = vsel %vm318, %v2496, 0
        %v3516 = vsel %vm318, %v2499, 0
        %v3518 = vsel %vm318, %v2501, 0
        %v3520 = vsel %vm318, %v2504, 0
        %v3522 = vsel %vm318, %v2506, 0
        %v3524 = vsel %vm318, %v2509, 0
        %v3526 = vsel %vm318, %v2511, 0
        %v3528 = vsel %vm318, %v2514, 0
        %v3530 = vsel %vm318, %v2516, 0
        %v3532 = vsel %vm318, %v2519, 0
        %v3534 = vsel %vm318, %v2521, 0
        %v3536 = vsel %vm318, %v2524, 0
        %v3538 = vsel %vm318, %v2526, 0
        %v3540 = vsel %vm318, %v2529, 0
        %v3542 = vsel %vm318, %v2531, 0
        %v3544 = vsel %vm318, %v2534, 0
        %v3546 = vsel %vm318, %v2536, 0
        %v3548 = vsel %vm318, %v2539, 0
        %v3550 = vsel %vm318, %v2541, 0
        %v3552 = vsel %vm318, %v2544, 0
        %v3554 = vsel %vm318, %v2546, 0
        %v3556 = vsel %vm318, %v2557, 0
        %v3558 = vsel %vm318, %v2559, 0
        %v3560 = vsel %vm318, %v2570, 0
        %v3562 = vsel %vm318, %v2572, 0
        %3564 = vmatprep.subr.mxu0 0.0
        %3565 = vmatpush1.msra.mxu0 %v3475
        %3566 = vmatprep.subr.mxu0 0.0
        %3567 = vmatpush1.msra.mxu0 %v3476
        %3568 = vmatprep.subr.mxu0 0.0
        %3569 = vmatpush1.msra.mxu0 %v3477
        %3570 = vmatprep.subr.mxu0 0.0
        %3571 = vmatpush1.msra.mxu0 %v3478
        %3572 = vmatprep.subr.mxu0 0.0
        %3573 = vmatpush1.msra.mxu0 %v3479
        %3574 = vmatprep.subr.mxu0 0.0
        %3575 = vmatpush1.msra.mxu0 %v3480
        %3576 = vmatprep.subr.mxu0 0.0
        %3577 = vmatpush1.msra.mxu0 %v3481
        %3578 = vmatprep.subr.mxu0 0.0
        %3579 = vmatpush1.msra.mxu0 %v3482
        %3580 = vmatprep.subr.mxu0 0.0
        %3581 = vmatpush1.msra.mxu0 %v3483
        %3582 = vmatprep.subr.mxu0 0.0
        %3583 = vmatpush1.msra.mxu0 %v3484
        %3584 = vmatprep.subr.mxu0 0.0
        %3585 = vmatpush1.msra.mxu0 %v3485
        %3586 = vmatprep.subr.mxu0 0.0
        %3587 = vmatpush1.msra.mxu0 %v3486
        %3588 = vmatprep.subr.mxu0 0.0
        %3589 = vmatpush1.msra.mxu0 %v3487
        %3590 = vmatprep.subr.mxu0 0.0
        %3591 = vmatpush1.msra.mxu0 %v3488
        %3592 = vmatprep.subr.mxu0 0.0
        %3593 = vmatpush1.msra.mxu0 %v3489
        %3594 = vmatprep.subr.mxu0 0.0
        %3595 = vmatpush1.msra.mxu0 %v3490
        %3596 = vmatprep.subr.mxu0 0.0
        %3597 = vmatpush1.msra.mxu0 %v3491
        %3598 = vmatprep.subr.mxu0 0.0
        %3599 = vmatpush1.msra.mxu0 %v3492
        %3600 = vmatprep.subr.mxu0 0.0
        %3601 = vmatpush1.msra.mxu0 0.0
        %3602 = vmatprep.subr.mxu0 0.0
        %3603 = vmatpush1.msra.mxu0 0.0
        %3604 = vmatprep.subr.mxu0 0.0
        %3605 = vmatpush1.msra.mxu0 0.0
        %3606 = vmatprep.subr.mxu0 0.0
        %3607 = vmatpush1.msra.mxu0 0.0
        %3608 = vmatprep.subr.mxu0 0.0
        %3609 = vmatpush1.msra.mxu0 0.0
        %3610 = vmatprep.subr.mxu0 0.0
        %3611 = vmatpush1.msra.mxu0 0.0
        %3612 = vmatprep.subr.mxu0 0.0
        %3613 = vmatpush1.msra.mxu0 0.0
        %3614 = vmatprep.subr.mxu0 0.0
        %3615 = vmatpush1.msra.mxu0 0.0
        %3616 = vmatprep.subr.mxu0 0.0
        %3617 = vmatpush1.msra.mxu0 0.0
        %3618 = vmatprep.subr.mxu0 0.0
        %3619 = vmatpush1.msra.mxu0 0.0
        %3620 = vmatprep.subr.mxu0 0.0
        %3621 = vmatpush1.msra.mxu0 0.0
        %3622 = vmatprep.subr.mxu0 0.0
        %3623 = vmatpush1.msra.mxu0 0.0
        %3624 = vmatprep.subr.mxu0 0.0
        %3625 = vmatpush1.msra.mxu0 0.0
        %3626 = vmatprep.subr.mxu0 0.0
        %3627 = vmatpush1.msra.mxu0 0.0
        %3628 = vmatprep.mubr.f32.mxu0 %v3500
        %3629 = vmatmul.mubr.f32.gmra.mrb[0].mxu0 %v3443
        %v3630 = vpop.f32.mrb[0].mxu0
        %v3631 = vadd.f32 %v3498, %v3630
        %v3632 = vpop.f32.mrb[0].mxu0
        %3633 = vmatprep.mubr.f32.mxu0 %v3502
        %3634 = vmatmul.mubr.f32.gmra.mrb[0].mxu0 %v3444
        %v3635 = vpop.f32.mrb[0].mxu0
        %v3636 = vadd.f32 %v3498, %v3635
        %v3637 = vpop.f32.mrb[0].mxu0
        %3638 = vmatprep.mubr.f32.mxu0 %v3504
        %3639 = vmatmul.mubr.f32.gmra.mrb[0].mxu0 %v3445
        %v3640 = vpop.f32.mrb[0].mxu0
        %v3641 = vadd.f32 %v3498, %v3640
        %v3642 = vpop.f32.mrb[0].mxu0
        %3643 = vmatprep.mubr.f32.mxu0 %v3506
        %3644 = vmatmul.mubr.f32.gmra.mrb[0].mxu0 %v3446
        %v3645 = vpop.f32.mrb[0].mxu0
        %v3646 = vadd.f32 %v3498, %v3645
        %v3647 = vpop.f32.mrb[0].mxu0
        %3648 = vmatprep.mubr.f32.mxu0 %v3508
        %3649 = vmatmul.mubr.f32.gmra.mrb[0].mxu0 %v3447
        %v3650 = vpop.f32.mrb[0].mxu0
        %v3651 = vadd.f32 %v3498, %v3650
        %v3652 = vpop.f32.mrb[0].mxu0
        %3653 = vmatprep.mubr.f32.mxu0 %v3510
        %3654 = vmatmul.mubr.f32.gmra.mrb[0].mxu0 %v3448
        %v3655 = vpop.f32.mrb[0].mxu0
        %v3656 = vadd.f32 %v3498, %v3655
        %v3657 = vpop.f32.mrb[0].mxu0
        %3658 = vmatprep.mubr.f32.mxu0 %v3512
        %3659 = vmatmul.mubr.f32.gmra.mrb[0].mxu0 %v3449
        %v3660 = vpop.f32.mrb[0].mxu0
        %v3661 = vadd.f32 %v3498, %v3660
        %v3662 = vpop.f32.mrb[0].mxu0
        %3663 = vmatprep.mubr.f32.mxu0 %v3514
        %3664 = vmatmul.mubr.f32.gmra.mrb[0].mxu0 %v3450
        %v3665 = vpop.f32.mrb[0].mxu0
        %v3666 = vadd.f32 %v3498, %v3665
        %v3667 = vpop.f32.mrb[0].mxu0
        %3668 = vmatprep.mubr.f32.mxu0 %v3516
        %3669 = vmatmul.mubr.f32.gmra.mrb[0].mxu0 %v3451
        %v3670 = vpop.f32.mrb[0].mxu0
        %v3671 = vadd.f32 %v3498, %v3670
        %v3672 = vpop.f32.mrb[0].mxu0
        %3673 = vmatprep.mubr.f32.mxu0 %v3518
        %3674 = vmatmul.mubr.f32.gmra.mrb[0].mxu0 %v3452
        %v3675 = vpop.f32.mrb[0].mxu0
        %v3676 = vadd.f32 %v3498, %v3675
        %v3677 = vpop.f32.mrb[0].mxu0
        %3678 = vmatprep.mubr.f32.mxu0 %v3520
        %3679 = vmatmul.mubr.f32.gmra.mrb[0].mxu0 %v3453
        %v3680 = vpop.f32.mrb[0].mxu0
        %v3681 = vadd.f32 %v3498, %v3680
        %v3682 = vpop.f32.mrb[0].mxu0
        %3683 = vmatprep.mubr.f32.mxu0 %v3522
        %3684 = vmatmul.mubr.f32.gmra.mrb[0].mxu0 %v3454
        %v3685 = vpop.f32.mrb[0].mxu0
        %v3686 = vadd.f32 %v3498, %v3685
        %v3687 = vpop.f32.mrb[0].mxu0
        %3688 = vmatprep.mubr.f32.mxu0 %v3524
        %3689 = vmatmul.mubr.f32.gmra.mrb[0].mxu0 %v3455
        %v3690 = vpop.f32.mrb[0].mxu0
        %v3691 = vadd.f32 %v3498, %v3690
        %v3692 = vpop.f32.mrb[0].mxu0
        %3693 = vmatprep.mubr.f32.mxu0 %v3526
        %3694 = vmatmul.mubr.f32.gmra.mrb[0].mxu0 %v3456
        %v3695 = vpop.f32.mrb[0].mxu0
        %v3696 = vadd.f32 %v3498, %v3695
        %v3697 = vpop.f32.mrb[0].mxu0
        %3698 = vmatprep.mubr.f32.mxu0 %v3528
        %3699 = vmatmul.mubr.f32.gmra.mrb[0].mxu0 %v3457
        %v3700 = vpop.f32.mrb[0].mxu0
        %v3701 = vadd.f32 %v3498, %v3700
        %v3702 = vpop.f32.mrb[0].mxu0
        %3703 = vmatprep.mubr.f32.mxu0 %v3530
        %3704 = vmatmul.mubr.f32.gmra.mrb[0].mxu0 %v3458
        %v3705 = vpop.f32.mrb[0].mxu0
        %v3706 = vadd.f32 %v3498, %v3705
        %v3707 = vpop.f32.mrb[0].mxu0
        %3708 = vmatprep.mubr.f32.mxu0 %v3532
        %3709 = vmatmul.mubr.f32.gmra.mrb[0].mxu0 %v3459
        %v3710 = vpop.f32.mrb[0].mxu0
        %v3711 = vadd.f32 %v3498, %v3710
        %v3712 = vpop.f32.mrb[0].mxu0
        %3713 = vmatprep.mubr.f32.mxu0 %v3534
        %3714 = vmatmul.mubr.f32.gmra.mrb[0].mxu0 %v3460
        %v3715 = vpop.f32.mrb[0].mxu0
        %v3716 = vadd.f32 %v3498, %v3715
        %v3717 = vpop.f32.mrb[0].mxu0
        %3718 = vmatprep.mubr.f32.mxu0 %v3536
        %3719 = vmatmul.mubr.f32.gmra.mrb[0].mxu0 %v3461
        %v3720 = vpop.f32.mrb[0].mxu0
        %v3721 = vadd.f32 %v3498, %v3720
        %v3722 = vpop.f32.mrb[0].mxu0
        %3723 = vmatprep.mubr.f32.mxu0 %v3538
        %3724 = vmatmul.mubr.f32.gmra.mrb[0].mxu0 %v3462
        %v3725 = vpop.f32.mrb[0].mxu0
        %v3726 = vadd.f32 %v3498, %v3725
        %v3727 = vpop.f32.mrb[0].mxu0
        %3728 = vmatprep.mubr.f32.mxu0 %v3540
        %3729 = vmatmul.mubr.f32.gmra.mrb[0].mxu0 %v3463
        %v3730 = vpop.f32.mrb[0].mxu0
        %v3731 = vadd.f32 %v3498, %v3730
        %v3732 = vpop.f32.mrb[0].mxu0
        %3733 = vmatprep.mubr.f32.mxu0 %v3542
        %3734 = vmatmul.mubr.f32.gmra.mrb[0].mxu0 %v3464
        %v3735 = vpop.f32.mrb[0].mxu0
        %v3736 = vadd.f32 %v3498, %v3735
        %v3737 = vpop.f32.mrb[0].mxu0
        %3738 = vmatprep.mubr.f32.mxu0 %v3544
        %3739 = vmatmul.mubr.f32.gmra.mrb[0].mxu0 %v3465
        %v3740 = vpop.f32.mrb[0].mxu0
        %v3741 = vadd.f32 %v3498, %v3740
        %v3742 = vpop.f32.mrb[0].mxu0
        %3743 = vmatprep.mubr.f32.mxu0 %v3546
        %3744 = vmatmul.mubr.f32.gmra.mrb[0].mxu0 %v3466
        %v3745 = vpop.f32.mrb[0].mxu0
        %v3746 = vadd.f32 %v3498, %v3745
        %v3747 = vpop.f32.mrb[0].mxu0
        %3748 = vmatprep.mubr.f32.mxu0 %v3548
        %3749 = vmatmul.mubr.f32.gmra.mrb[0].mxu0 %v3467
        %v3750 = vpop.f32.mrb[0].mxu0
        %v3751 = vadd.f32 %v3498, %v3750
        %v3752 = vpop.f32.mrb[0].mxu0
        %3753 = vmatprep.mubr.f32.mxu0 %v3550
        %3754 = vmatmul.mubr.f32.gmra.mrb[0].mxu0 %v3468
        %v3755 = vpop.f32.mrb[0].mxu0
        %v3756 = vadd.f32 %v3498, %v3755
        %v3757 = vpop.f32.mrb[0].mxu0
        %3758 = vmatprep.mubr.f32.mxu0 %v3552
        %3759 = vmatmul.mubr.f32.gmra.mrb[0].mxu0 %v3469
        %v3760 = vpop.f32.mrb[0].mxu0
        %v3761 = vadd.f32 %v3498, %v3760
        %v3762 = vpop.f32.mrb[0].mxu0
        %3763 = vmatprep.mubr.f32.mxu0 %v3554
        %3764 = vmatmul.mubr.f32.gmra.mrb[0].mxu0 %v3470
        %v3765 = vpop.f32.mrb[0].mxu0
        %v3766 = vadd.f32 %v3498, %v3765
        %v3767 = vpop.f32.mrb[0].mxu0
        %3768 = vmatprep.mubr.f32.mxu0 %v3556
        %3769 = vmatmul.mubr.f32.gmra.mrb[0].mxu0 %v3471
        %v3770 = vpop.f32.mrb[0].mxu0
        %v3771 = vadd.f32 %v3498, %v3770
        %v3772 = vpop.f32.mrb[0].mxu0
        %3773 = vmatprep.mubr.f32.mxu0 %v3558
        %3774 = vmatmul.mubr.f32.gmra.mrb[0].mxu0 %v3472
        %v3775 = vpop.f32.mrb[0].mxu0
        %v3776 = vadd.f32 %v3498, %v3775
        %v3777 = vpop.f32.mrb[0].mxu0
        %3778 = vmatprep.mubr.f32.mxu0 %v3560
        %3779 = vmatmul.mubr.f32.gmra.mrb[0].mxu0 %v3473
        %v3780 = vpop.f32.mrb[0].mxu0
        %v3781 = vadd.f32 %v3498, %v3780
        %v3782 = vpop.f32.mrb[0].mxu0
        %3783 = vmatprep.mubr.f32.mxu0 %v3562
        %3784 = vmatmul.mubr.f32.gmra.mrb[0].mxu0 %v3474
        %v3785 = vpop.f32.mrb[0].mxu0
        %v3786 = vadd.f32 %v3498, %v3785
        %v3787 = vpop.f32.mrb[0].mxu0
        %3788 = vdwg.mxu0
        %vm3789 = vcmp.gt.f32.partialorder %v3631, 0.0
        %vm3790 = vcmp.gt.f32.partialorder %v3636, 0.0
        %vm3791 = vcmp.gt.f32.partialorder %v3641, 0.0
        %vm3792 = vcmp.gt.f32.partialorder %v3646, 0.0
        %vm3793 = vcmp.gt.f32.partialorder %v3651, 0.0
        %vm3794 = vcmp.gt.f32.partialorder %v3656, 0.0
        %vm3795 = vcmp.gt.f32.partialorder %v3661, 0.0
        %vm3796 = vcmp.gt.f32.partialorder %v3666, 0.0
        %vm3797 = vcmp.gt.f32.partialorder %v3671, 0.0
        %vm3798 = vcmp.gt.f32.partialorder %v3676, 0.0
        %vm3799 = vcmp.gt.f32.partialorder %v3681, 0.0
        %vm3800 = vcmp.gt.f32.partialorder %v3686, 0.0
        %vm3801 = vcmp.gt.f32.partialorder %v3691, 0.0
        %vm3802 = vcmp.gt.f32.partialorder %v3696, 0.0
        %vm3803 = vcmp.gt.f32.partialorder %v3701, 0.0
        %vm3804 = vcmp.gt.f32.partialorder %v3706, 0.0
        %vm3805 = vcmp.gt.f32.partialorder %v3711, 0.0
        %vm3806 = vcmp.gt.f32.partialorder %v3716, 0.0
        %vm3807 = vcmp.gt.f32.partialorder %v3721, 0.0
        %vm3808 = vcmp.gt.f32.partialorder %v3726, 0.0
        %vm3809 = vcmp.gt.f32.partialorder %v3731, 0.0
        %vm3810 = vcmp.gt.f32.partialorder %v3736, 0.0
        %vm3811 = vcmp.gt.f32.partialorder %v3741, 0.0
        %vm3812 = vcmp.gt.f32.partialorder %v3746, 0.0
        %vm3813 = vcmp.gt.f32.partialorder %v3751, 0.0
        %vm3814 = vcmp.gt.f32.partialorder %v3756, 0.0
        %vm3815 = vcmp.gt.f32.partialorder %v3761, 0.0
        %vm3816 = vcmp.gt.f32.partialorder %v3766, 0.0
        %vm3817 = vcmp.gt.f32.partialorder %v3771, 0.0
        %vm3818 = vcmp.gt.f32.partialorder %v3776, 0.0
        %vm3819 = vcmp.gt.f32.partialorder %v3781, 0.0
        %vm3820 = vcmp.gt.f32.partialorder %v3786, 0.0
        %v3821 = vmul.f32 %v3631, 0.1
        %v3822 = vmul.f32 %v3636, 0.1
        %v3823 = vmul.f32 %v3641, 0.1
        %v3824 = vmul.f32 %v3646, 0.1
        %v3825 = vmul.f32 %v3651, 0.1
        %v3826 = vmul.f32 %v3656, 0.1
        %v3827 = vmul.f32 %v3661, 0.1
        %v3828 = vmul.f32 %v3666, 0.1
        %v3829 = vmul.f32 %v3671, 0.1
        %v3830 = vmul.f32 %v3676, 0.1
        %v3831 = vmul.f32 %v3681, 0.1
        %v3832 = vmul.f32 %v3686, 0.1
        %v3833 = vmul.f32 %v3691, 0.1
        %v3834 = vmul.f32 %v3696, 0.1
        %v3835 = vmul.f32 %v3701, 0.1
        %v3836 = vmul.f32 %v3706, 0.1
        %v3837 = vmul.f32 %v3711, 0.1
        %v3838 = vmul.f32 %v3716, 0.1
        %v3839 = vmul.f32 %v3721, 0.1
        %v3840 = vmul.f32 %v3726, 0.1
        %v3841 = vmul.f32 %v3731, 0.1
        %v3842 = vmul.f32 %v3736, 0.1
        %v3843 = vmul.f32 %v3741, 0.1
        %v3844 = vmul.f32 %v3746, 0.1
        %v3845 = vmul.f32 %v3751, 0.1
        %v3846 = vmul.f32 %v3756, 0.1
        %v3847 = vmul.f32 %v3761, 0.1
        %v3848 = vmul.f32 %v3766, 0.1
        %v3849 = vmul.f32 %v3771, 0.1
        %v3850 = vmul.f32 %v3776, 0.1
        %v3851 = vmul.f32 %v3781, 0.1
        %v3852 = vmul.f32 %v3786, 0.1
        %v3853 = vsel %vm3789, %v3631, %v3821
        %v3854 = vsel %vm3790, %v3636, %v3822
        %v3855 = vsel %vm3791, %v3641, %v3823
        %v3856 = vsel %vm3792, %v3646, %v3824
        %v3857 = vsel %vm3793, %v3651, %v3825
        %v3858 = vsel %vm3794, %v3656, %v3826
        %v3859 = vsel %vm3795, %v3661, %v3827
        %v3860 = vsel %vm3796, %v3666, %v3828
        %v3861 = vsel %vm3797, %v3671, %v3829
        %v3862 = vsel %vm3798, %v3676, %v3830
        %v3863 = vsel %vm3799, %v3681, %v3831
        %v3864 = vsel %vm3800, %v3686, %v3832
        %v3865 = vsel %vm3801, %v3691, %v3833
        %v3866 = vsel %vm3802, %v3696, %v3834
        %v3867 = vsel %vm3803, %v3701, %v3835
        %v3868 = vsel %vm3804, %v3706, %v3836
        %v3869 = vsel %vm3805, %v3711, %v3837
        %v3870 = vsel %vm3806, %v3716, %v3838
        %v3871 = vsel %vm3807, %v3721, %v3839
        %v3872 = vsel %vm3808, %v3726, %v3840
        %v3873 = vsel %vm3809, %v3731, %v3841
        %v3874 = vsel %vm3810, %v3736, %v3842
        %v3875 = vsel %vm3811, %v3741, %v3843
        %v3876 = vsel %vm3812, %v3746, %v3844
        %v3877 = vsel %vm3813, %v3751, %v3845
        %v3878 = vsel %vm3814, %v3756, %v3846
        %v3879 = vsel %vm3815, %v3761, %v3847
        %v3880 = vsel %vm3816, %v3766, %v3848
        %v3881 = vsel %vm3817, %v3771, %v3849
        %v3882 = vsel %vm3818, %v3776, %v3850
        %v3883 = vsel %vm3819, %v3781, %v3851
        %v3884 = vsel %vm3820, %v3786, %v3852
        %3885 = vst.msk [vmem:[%s467 + $0x1] sm:$0xff] %vm318, %v3853
        %3886 = vst.msk [vmem:[%s467 + $0x9] sm:$0xff] %vm318, %v3854
        %3887 = vst.msk [vmem:[%s467 + $0x19] sm:$0xff] %vm318, %v3855
        %3888 = vst.msk [vmem:[%s467 + $0x21] sm:$0xff] %vm318, %v3856
        %3889 = vst.msk [vmem:[%s467 + $0x31] sm:$0xff] %vm318, %v3857
        %3890 = vst.msk [vmem:[%s467 + $0x39] sm:$0xff] %vm318, %v3858
        %3891 = vst.msk [vmem:[%s467 + $0x49] sm:$0xff] %vm318, %v3859
        %3892 = vst.msk [vmem:[%s467 + $0x51] sm:$0xff] %vm318, %v3860
        %3893 = vst.msk [vmem:[%s467 + $0x61] sm:$0xff] %vm318, %v3861
        %3894 = vst.msk [vmem:[%s467 + $0x69] sm:$0xff] %vm318, %v3862
        %3895 = vst.msk [vmem:[%s467 + $0x79] sm:$0xff] %vm318, %v3863
        %3896 = vst.msk [vmem:[%s467 + $0x81] sm:$0xff] %vm318, %v3864
        %3897 = vst.msk [vmem:[%s467 + $0x91] sm:$0xff] %vm318, %v3865
        %3898 = vst.msk [vmem:[%s467 + $0x99] sm:$0xff] %vm318, %v3866
        %3899 = vst.msk [vmem:[%s467 + $0xa9] sm:$0xff] %vm318, %v3867
        %3900 = vst.msk [vmem:[%s467 + $0xb1] sm:$0xff] %vm318, %v3868
        %3901 = vst.msk [vmem:[%s467 + $0xc1] sm:$0xff] %vm318, %v3869
        %3902 = vst.msk [vmem:[%s467 + $0xc9] sm:$0xff] %vm318, %v3870
        %3903 = vst.msk [vmem:[%s467 + $0xd9] sm:$0xff] %vm318, %v3871
        %3904 = vst.msk [vmem:[%s467 + $0xe1] sm:$0xff] %vm318, %v3872
        %3905 = vst.msk [vmem:[%s467 + $0xf1] sm:$0xff] %vm318, %v3873
        %3906 = vst.msk [vmem:[%s467 + $0xf9] sm:$0xff] %vm318, %v3874
        %3907 = vst.msk [vmem:[%s467 + $0x109] sm:$0xff] %vm318, %v3875
        %3908 = vst.msk [vmem:[%s467 + $0x111] sm:$0xff] %vm318, %v3876
        %3909 = vst.msk [vmem:[%s467 + $0x121] sm:$0xff] %vm318, %v3877
        %3910 = vst.msk [vmem:[%s467 + $0x129] sm:$0xff] %vm318, %v3878
        %3911 = vst.msk [vmem:[%s467 + $0x139] sm:$0xff] %vm318, %v3879
        %3912 = vst.msk [vmem:[%s467 + $0x141] sm:$0xff] %vm318, %v3880
        %3913 = vst.msk [vmem:[%s467 + $0x151] sm:$0xff] %vm318, %v3881
        %3914 = vst.msk [vmem:[%s467 + $0x159] sm:$0xff] %vm318, %v3882
        %3915 = vst.msk [vmem:[%s467 + $0x169] sm:$0xff] %vm318, %v3883
        %3916 = vst.msk [vmem:[%s467 + $0x171] sm:$0xff] %vm318, %v3884
        %v3917 = vld [vmem:[#allocation2] sm:$0xff]
        %v3918 = vld [vmem:[#allocation2 + $0x8] sm:$0xff]
        %v3919 = vld [vmem:[#allocation2 + $0x10] sm:$0x3]
        %v3920 = vld [vmem:[#allocation2 + $0x18] sm:$0xff]
        %v3921 = vld [vmem:[#allocation2 + $0x20] sm:$0xff]
        %v3922 = vld [vmem:[#allocation2 + $0x28] sm:$0x3]
        %v3923 = vld [vmem:[#allocation2 + $0x30] sm:$0xff]
        %v3924 = vld [vmem:[#allocation2 + $0x38] sm:$0xff]
        %v3925 = vld [vmem:[#allocation2 + $0x40] sm:$0x3]
        %v3926 = vld [vmem:[#allocation2 + $0x48] sm:$0xff]
        %v3927 = vld [vmem:[#allocation2 + $0x50] sm:$0xff]
        %v3928 = vld [vmem:[#allocation2 + $0x58] sm:$0x3]
        %v3929 = vld [vmem:[#allocation2 + $0x60] sm:$0xff]
        %v3930 = vld [vmem:[#allocation2 + $0x68] sm:$0xff]
        %v3931 = vld [vmem:[#allocation2 + $0x70] sm:$0x3]
        %v3932 = vld [vmem:[#allocation2 + $0x78] sm:$0xff]
        %v3933 = vld [vmem:[#allocation2 + $0x80] sm:$0xff]
        %v3934 = vld [vmem:[#allocation2 + $0x88] sm:$0x3]
        %v3935 = vld [vmem:[#allocation2 + $0x90] sm:$0xff]
        %v3936 = vld [vmem:[#allocation2 + $0x98] sm:$0xff]
        %v3937 = vld [vmem:[#allocation2 + $0xa0] sm:$0x3]
        %v3938 = vld [vmem:[#allocation2 + $0xa8] sm:$0xff]
        %v3939 = vld [vmem:[#allocation2 + $0xb0] sm:$0xff]
        %v3940 = vld [vmem:[#allocation2 + $0xb8] sm:$0x3]
        %v3941 = vld [vmem:[#allocation2 + $0xc0] sm:$0xff]
        %v3942 = vld [vmem:[#allocation2 + $0xc8] sm:$0xff]
        %v3943 = vld [vmem:[#allocation2 + $0xd0] sm:$0x3]
        %v3944 = vld [vmem:[#allocation2 + $0xd8] sm:$0xff]
        %v3945 = vld [vmem:[#allocation2 + $0xe0] sm:$0xff]
        %v3946 = vld [vmem:[#allocation2 + $0xe8] sm:$0x3]
        %v3947 = vld [vmem:[#allocation2 + $0xf0] sm:$0xff]
        %v3948 = vld [vmem:[#allocation2 + $0xf8] sm:$0xff]
        %v3949 = vld [vmem:[#allocation2 + $0x100] sm:$0x3]
        %v3950 = vld [vmem:[#allocation2 + $0x108] sm:$0xff]
        %v3951 = vld [vmem:[#allocation2 + $0x110] sm:$0xff]
        %v3952 = vld [vmem:[#allocation2 + $0x118] sm:$0x3]
        %v3953 = vld [vmem:[#allocation2 + $0x120] sm:$0xff]
        %v3954 = vld [vmem:[#allocation2 + $0x128] sm:$0xff]
        %v3955 = vld [vmem:[#allocation2 + $0x130] sm:$0x3]
        %v3956 = vld [vmem:[#allocation2 + $0x138] sm:$0xff]
        %v3957 = vld [vmem:[#allocation2 + $0x140] sm:$0xff]
        %v3958 = vld [vmem:[#allocation2 + $0x148] sm:$0x3]
        %v3959 = vld [vmem:[#allocation2 + $0x150] sm:$0xff]
        %v3960 = vld [vmem:[#allocation2 + $0x158] sm:$0xff]
        %v3961 = vld [vmem:[#allocation2 + $0x160] sm:$0x3]
        %v3962 = vld [vmem:[#allocation2 + $0x168] sm:$0xff]
        %v3963 = vld [vmem:[#allocation2 + $0x170] sm:$0xff]
        %v3964 = vld [vmem:[#allocation2 + $0x178] sm:$0x3]
        %v3965 = vld [vmem:[#allocation2 + $0x180] sm:$0xff]
        %v3966 = vld [vmem:[#allocation2 + $0x188] sm:$0xff]
        %v3967 = vld [vmem:[#allocation2 + $0x190] sm:$0x3]
        %v3968 = vld [vmem:[#allocation2 + $0x198] sm:$0xff]
        %v3969 = vld [vmem:[#allocation2 + $0x1a0] sm:$0xff]
        %v3970 = vld [vmem:[#allocation2 + $0x1a8] sm:$0x3]
        %v4019 = vrot.slane %v3917, 1
        %v4020 = vrot.slane %v3918, 1
        %v4021 = vsel %vm603, %v4019, %v4020
        %v4022 = vrot.slane %v3919, 1
        %v4023 = vsel %vm603, %v4020, %v4022
        %v4024 = vrot.slane %v3920, 1
        %v4025 = vrot.slane %v3921, 1
        %v4026 = vsel %vm603, %v4024, %v4025
        %v4027 = vrot.slane %v3922, 1
        %v4028 = vsel %vm603, %v4025, %v4027
        %v4029 = vrot.slane %v3923, 1
        %v4030 = vrot.slane %v3924, 1
        %v4031 = vsel %vm603, %v4029, %v4030
        %v4032 = vrot.slane %v3925, 1
        %v4033 = vsel %vm603, %v4030, %v4032
        %v4034 = vrot.slane %v3926, 1
        %v4035 = vrot.slane %v3927, 1
        %v4036 = vsel %vm603, %v4034, %v4035
        %v4037 = vrot.slane %v3928, 1
        %v4038 = vsel %vm603, %v4035, %v4037
        %v4039 = vrot.slane %v3929, 1
        %v4040 = vrot.slane %v3930, 1
        %v4041 = vsel %vm603, %v4039, %v4040
        %v4042 = vrot.slane %v3931, 1
        %v4043 = vsel %vm603, %v4040, %v4042
        %v4044 = vrot.slane %v3932, 1
        %v4045 = vrot.slane %v3933, 1
        %v4046 = vsel %vm603, %v4044, %v4045
        %v4047 = vrot.slane %v3934, 1
        %v4048 = vsel %vm603, %v4045, %v4047
        %v4049 = vrot.slane %v3935, 1
        %v4050 = vrot.slane %v3936, 1
        %v4051 = vsel %vm603, %v4049, %v4050
        %v4052 = vrot.slane %v3937, 1
        %v4053 = vsel %vm603, %v4050, %v4052
        %v4054 = vrot.slane %v3938, 1
        %v4055 = vrot.slane %v3939, 1
        %v4056 = vsel %vm603, %v4054, %v4055
        %v4057 = vrot.slane %v3940, 1
        %v4058 = vsel %vm603, %v4055, %v4057
        %v4059 = vrot.slane %v3941, 1
        %v4060 = vrot.slane %v3942, 1
        %v4061 = vsel %vm603, %v4059, %v4060
        %v4062 = vrot.slane %v3943, 1
        %v4063 = vsel %vm603, %v4060, %v4062
        %v4064 = vrot.slane %v3944, 1
        %v4065 = vrot.slane %v3945, 1
        %v4066 = vsel %vm603, %v4064, %v4065
        %v4067 = vrot.slane %v3946, 1
        %v4068 = vsel %vm603, %v4065, %v4067
        %v4069 = vrot.slane %v3947, 1
        %v4070 = vrot.slane %v3948, 1
        %v4071 = vsel %vm603, %v4069, %v4070
        %v4072 = vrot.slane %v3949, 1
        %v4073 = vsel %vm603, %v4070, %v4072
        %v4074 = vrot.slane %v3950, 1
        %v4075 = vrot.slane %v3951, 1
        %v4076 = vsel %vm603, %v4074, %v4075
        %v4077 = vrot.slane %v3952, 1
        %v4078 = vsel %vm603, %v4075, %v4077
        %v4079 = vrot.slane %v3953, 1
        %v4080 = vrot.slane %v3954, 1
        %v4081 = vsel %vm603, %v4079, %v4080
        %v4082 = vrot.slane %v3955, 1
        %v4083 = vsel %vm603, %v4080, %v4082
        %v4084 = vrot.slane %v3956, 1
        %v4085 = vrot.slane %v3957, 1
        %v4086 = vsel %vm603, %v4084, %v4085
        %v4087 = vrot.slane %v3958, 1
        %v4088 = vsel %vm603, %v4085, %v4087
        %v4089 = vrot.slane %v3959, 1
        %v4090 = vrot.slane %v3960, 1
        %v4091 = vsel %vm603, %v4089, %v4090
        %v4092 = vrot.slane %v3961, 1
        %v4093 = vsel %vm603, %v4090, %v4092
        %v4094 = vrot.slane %v3962, 1
        %v4095 = vrot.slane %v3963, 1
        %v4096 = vsel %vm603, %v4094, %v4095
        %v4097 = vrot.slane %v3964, 1
        %v4098 = vsel %vm603, %v4095, %v4097
        %v4099 = vrot.slane %v3917, 2
        %v4100 = vrot.slane %v3918, 2
        %v4101 = vsel %vm684, %v4099, %v4100
        %v4102 = vrot.slane %v3919, 2
        %v4103 = vsel %vm684, %v4100, %v4102
        %v4104 = vrot.slane %v3920, 2
        %v4105 = vrot.slane %v3921, 2
        %v4106 = vsel %vm684, %v4104, %v4105
        %v4107 = vrot.slane %v3922, 2
        %v4108 = vsel %vm684, %v4105, %v4107
        %v4109 = vrot.slane %v3923, 2
        %v4110 = vrot.slane %v3924, 2
        %v4111 = vsel %vm684, %v4109, %v4110
        %v4112 = vrot.slane %v3925, 2
        %v4113 = vsel %vm684, %v4110, %v4112
        %v4114 = vrot.slane %v3926, 2
        %v4115 = vrot.slane %v3927, 2
        %v4116 = vsel %vm684, %v4114, %v4115
        %v4117 = vrot.slane %v3928, 2
        %v4118 = vsel %vm684, %v4115, %v4117
        %v4119 = vrot.slane %v3929, 2
        %v4120 = vrot.slane %v3930, 2
        %v4121 = vsel %vm684, %v4119, %v4120
        %v4122 = vrot.slane %v3931, 2
        %v4123 = vsel %vm684, %v4120, %v4122
        %v4124 = vrot.slane %v3932, 2
        %v4125 = vrot.slane %v3933, 2
        %v4126 = vsel %vm684, %v4124, %v4125
        %v4127 = vrot.slane %v3934, 2
        %v4128 = vsel %vm684, %v4125, %v4127
        %v4129 = vrot.slane %v3935, 2
        %v4130 = vrot.slane %v3936, 2
        %v4131 = vsel %vm684, %v4129, %v4130
        %v4132 = vrot.slane %v3937, 2
        %v4133 = vsel %vm684, %v4130, %v4132
        %v4134 = vrot.slane %v3938, 2
        %v4135 = vrot.slane %v3939, 2
        %v4136 = vsel %vm684, %v4134, %v4135
        %v4137 = vrot.slane %v3940, 2
        %v4138 = vsel %vm684, %v4135, %v4137
        %v4139 = vrot.slane %v3941, 2
        %v4140 = vrot.slane %v3942, 2
        %v4141 = vsel %vm684, %v4139, %v4140
        %v4142 = vrot.slane %v3943, 2
        %v4143 = vsel %vm684, %v4140, %v4142
        %v4144 = vrot.slane %v3944, 2
        %v4145 = vrot.slane %v3945, 2
        %v4146 = vsel %vm684, %v4144, %v4145
        %v4147 = vrot.slane %v3946, 2
        %v4148 = vsel %vm684, %v4145, %v4147
        %v4149 = vrot.slane %v3947, 2
        %v4150 = vrot.slane %v3948, 2
        %v4151 = vsel %vm684, %v4149, %v4150
        %v4152 = vrot.slane %v3949, 2
        %v4153 = vsel %vm684, %v4150, %v4152
        %v4154 = vrot.slane %v3950, 2
        %v4155 = vrot.slane %v3951, 2
        %v4156 = vsel %vm684, %v4154, %v4155
        %v4157 = vrot.slane %v3952, 2
        %v4158 = vsel %vm684, %v4155, %v4157
        %v4159 = vrot.slane %v3953, 2
        %v4160 = vrot.slane %v3954, 2
        %v4161 = vsel %vm684, %v4159, %v4160
        %v4162 = vrot.slane %v3955, 2
        %v4163 = vsel %vm684, %v4160, %v4162
        %v4164 = vrot.slane %v3956, 2
        %v4165 = vrot.slane %v3957, 2
        %v4166 = vsel %vm684, %v4164, %v4165
        %v4167 = vrot.slane %v3958, 2
        %v4168 = vsel %vm684, %v4165, %v4167
        %v4169 = vrot.slane %v3959, 2
        %v4170 = vrot.slane %v3960, 2
        %v4171 = vsel %vm684, %v4169, %v4170
        %v4172 = vrot.slane %v3961, 2
        %v4173 = vsel %vm684, %v4170, %v4172
        %v4174 = vrot.slane %v3962, 2
        %v4175 = vrot.slane %v3963, 2
        %v4176 = vsel %vm684, %v4174, %v4175
        %v4177 = vrot.slane %v3964, 2
        %v4178 = vsel %vm684, %v4175, %v4177
        %v4182 = vrot.slane %v3965, 1
        %v4183 = vrot.slane %v3966, 1
        %v4184 = vsel %vm603, %v4182, %v4183
        %v4185 = vrot.slane %v3967, 1
        %v4186 = vsel %vm603, %v4183, %v4185
        %v4187 = vrot.slane %v3965, 2
        %v4188 = vrot.slane %v3966, 2
        %v4189 = vsel %vm684, %v4187, %v4188
        %v4190 = vrot.slane %v3967, 2
        %v4191 = vsel %vm684, %v4188, %v4190
        %v4195 = vrot.slane %v3968, 1
        %v4196 = vrot.slane %v3969, 1
        %v4197 = vsel %vm603, %v4195, %v4196
        %v4198 = vrot.slane %v3970, 1
        %v4199 = vsel %vm603, %v4196, %v4198
        %v4200 = vrot.slane %v3968, 2
        %v4201 = vrot.slane %v3969, 2
        %v4202 = vsel %vm684, %v4200, %v4201
        %v4203 = vrot.slane %v3970, 2
        %v4204 = vsel %vm684, %v4201, %v4203
        %4205 = vrot.lane.b32.xlu0 %v4021, 16
        %v4206 = vpop.permute.xlu0 %4205
        %4207 = vrot.lane.b32.xlu0 %v4023, 16
        %v4208 = vpop.permute.xlu0 %4207
        %4209 = vrot.lane.b32.xlu0 %v4026, 16
        %v4210 = vpop.permute.xlu0 %4209
        %4211 = vrot.lane.b32.xlu0 %v4028, 16
        %v4212 = vpop.permute.xlu0 %4211
        %4213 = vrot.lane.b32.xlu0 %v4031, 16
        %v4214 = vpop.permute.xlu0 %4213
        %4215 = vrot.lane.b32.xlu0 %v4033, 16
        %v4216 = vpop.permute.xlu0 %4215
        %4217 = vrot.lane.b32.xlu0 %v4036, 16
        %v4218 = vpop.permute.xlu0 %4217
        %4219 = vrot.lane.b32.xlu0 %v4038, 16
        %v4220 = vpop.permute.xlu0 %4219
        %4221 = vrot.lane.b32.xlu0 %v4041, 16
        %v4222 = vpop.permute.xlu0 %4221
        %4223 = vrot.lane.b32.xlu0 %v4043, 16
        %v4224 = vpop.permute.xlu0 %4223
        %4225 = vrot.lane.b32.xlu0 %v4046, 16
        %v4226 = vpop.permute.xlu0 %4225
        %4227 = vrot.lane.b32.xlu0 %v4048, 16
        %v4228 = vpop.permute.xlu0 %4227
        %4229 = vrot.lane.b32.xlu0 %v4051, 16
        %v4230 = vpop.permute.xlu0 %4229
        %4231 = vrot.lane.b32.xlu0 %v4053, 16
        %v4232 = vpop.permute.xlu0 %4231
        %4233 = vrot.lane.b32.xlu0 %v4056, 16
        %v4234 = vpop.permute.xlu0 %4233
        %4235 = vrot.lane.b32.xlu0 %v4058, 16
        %v4236 = vpop.permute.xlu0 %4235
        %4237 = vrot.lane.b32.xlu0 %v4061, 16
        %v4238 = vpop.permute.xlu0 %4237
        %4239 = vrot.lane.b32.xlu0 %v4063, 16
        %v4240 = vpop.permute.xlu0 %4239
        %4241 = vrot.lane.b32.xlu0 %v4066, 16
        %v4242 = vpop.permute.xlu0 %4241
        %4243 = vrot.lane.b32.xlu0 %v4068, 16
        %v4244 = vpop.permute.xlu0 %4243
        %4245 = vrot.lane.b32.xlu0 %v4071, 16
        %v4246 = vpop.permute.xlu0 %4245
        %4247 = vrot.lane.b32.xlu0 %v4073, 16
        %v4248 = vpop.permute.xlu0 %4247
        %4249 = vrot.lane.b32.xlu0 %v4076, 16
        %v4250 = vpop.permute.xlu0 %4249
        %4251 = vrot.lane.b32.xlu0 %v4078, 16
        %v4252 = vpop.permute.xlu0 %4251
        %4253 = vrot.lane.b32.xlu0 %v4081, 16
        %v4254 = vpop.permute.xlu0 %4253
        %4255 = vrot.lane.b32.xlu0 %v4083, 16
        %v4256 = vpop.permute.xlu0 %4255
        %4257 = vrot.lane.b32.xlu0 %v4086, 16
        %v4258 = vpop.permute.xlu0 %4257
        %4259 = vrot.lane.b32.xlu0 %v4088, 16
        %v4260 = vpop.permute.xlu0 %4259
        %4261 = vrot.lane.b32.xlu0 %v4091, 16
        %v4262 = vpop.permute.xlu0 %4261
        %4263 = vrot.lane.b32.xlu0 %v4093, 16
        %v4264 = vpop.permute.xlu0 %4263
        %4265 = vrot.lane.b32.xlu0 %v4096, 16
        %v4266 = vpop.permute.xlu0 %4265
        %4267 = vrot.lane.b32.xlu0 %v4098, 16
        %v4268 = vpop.permute.xlu0 %4267
        %4301 = vrot.lane.b32.xlu0 %v4101, 32
        %v4302 = vpop.permute.xlu0 %4301
        %4303 = vrot.lane.b32.xlu0 %v4103, 32
        %v4304 = vpop.permute.xlu0 %4303
        %4305 = vrot.lane.b32.xlu0 %v4106, 32
        %v4306 = vpop.permute.xlu0 %4305
        %4307 = vrot.lane.b32.xlu0 %v4108, 32
        %v4308 = vpop.permute.xlu0 %4307
        %4309 = vrot.lane.b32.xlu0 %v4111, 32
        %v4310 = vpop.permute.xlu0 %4309
        %4311 = vrot.lane.b32.xlu0 %v4113, 32
        %v4312 = vpop.permute.xlu0 %4311
        %4313 = vrot.lane.b32.xlu0 %v4116, 32
        %v4314 = vpop.permute.xlu0 %4313
        %4315 = vrot.lane.b32.xlu0 %v4118, 32
        %v4316 = vpop.permute.xlu0 %4315
        %4317 = vrot.lane.b32.xlu0 %v4121, 32
        %v4318 = vpop.permute.xlu0 %4317
        %4319 = vrot.lane.b32.xlu0 %v4123, 32
        %v4320 = vpop.permute.xlu0 %4319
        %4321 = vrot.lane.b32.xlu0 %v4126, 32
        %v4322 = vpop.permute.xlu0 %4321
        %4323 = vrot.lane.b32.xlu0 %v4128, 32
        %v4324 = vpop.permute.xlu0 %4323
        %4325 = vrot.lane.b32.xlu0 %v4131, 32
        %v4326 = vpop.permute.xlu0 %4325
        %4327 = vrot.lane.b32.xlu0 %v4133, 32
        %v4328 = vpop.permute.xlu0 %4327
        %4329 = vrot.lane.b32.xlu0 %v4136, 32
        %v4330 = vpop.permute.xlu0 %4329
        %4331 = vrot.lane.b32.xlu0 %v4138, 32
        %v4332 = vpop.permute.xlu0 %4331
        %4333 = vrot.lane.b32.xlu0 %v4141, 32
        %v4334 = vpop.permute.xlu0 %4333
        %4335 = vrot.lane.b32.xlu0 %v4143, 32
        %v4336 = vpop.permute.xlu0 %4335
        %4337 = vrot.lane.b32.xlu0 %v4146, 32
        %v4338 = vpop.permute.xlu0 %4337
        %4339 = vrot.lane.b32.xlu0 %v4148, 32
        %v4340 = vpop.permute.xlu0 %4339
        %4341 = vrot.lane.b32.xlu0 %v4151, 32
        %v4342 = vpop.permute.xlu0 %4341
        %4343 = vrot.lane.b32.xlu0 %v4153, 32
        %v4344 = vpop.permute.xlu0 %4343
        %4345 = vrot.lane.b32.xlu0 %v4156, 32
        %v4346 = vpop.permute.xlu0 %4345
        %4347 = vrot.lane.b32.xlu0 %v4158, 32
        %v4348 = vpop.permute.xlu0 %4347
        %4349 = vrot.lane.b32.xlu0 %v4161, 32
        %v4350 = vpop.permute.xlu0 %4349
        %4351 = vrot.lane.b32.xlu0 %v4163, 32
        %v4352 = vpop.permute.xlu0 %4351
        %4353 = vrot.lane.b32.xlu0 %v4166, 32
        %v4354 = vpop.permute.xlu0 %4353
        %4355 = vrot.lane.b32.xlu0 %v4168, 32
        %v4356 = vpop.permute.xlu0 %4355
        %4357 = vrot.lane.b32.xlu0 %v4171, 32
        %v4358 = vpop.permute.xlu0 %4357
        %4359 = vrot.lane.b32.xlu0 %v4173, 32
        %v4360 = vpop.permute.xlu0 %4359
        %4361 = vrot.lane.b32.xlu0 %v4176, 32
        %v4362 = vpop.permute.xlu0 %4361
        %4363 = vrot.lane.b32.xlu0 %v4178, 32
        %v4364 = vpop.permute.xlu0 %4363
        %4397 = vrot.lane.b32.xlu0 %v3920, 48
        %v4398 = vpop.permute.xlu0 %4397
        %4399 = vrot.lane.b32.xlu0 %v3921, 48
        %v4400 = vpop.permute.xlu0 %4399
        %4401 = vrot.lane.b32.xlu0 %v3923, 48
        %v4402 = vpop.permute.xlu0 %4401
        %4403 = vrot.lane.b32.xlu0 %v3924, 48
        %v4404 = vpop.permute.xlu0 %4403
        %4405 = vrot.lane.b32.xlu0 %v3926, 48
        %v4406 = vpop.permute.xlu0 %4405
        %4407 = vrot.lane.b32.xlu0 %v3927, 48
        %v4408 = vpop.permute.xlu0 %4407
        %4409 = vrot.lane.b32.xlu0 %v3929, 48
        %v4410 = vpop.permute.xlu0 %4409
        %4411 = vrot.lane.b32.xlu0 %v3930, 48
        %v4412 = vpop.permute.xlu0 %4411
        %4413 = vrot.lane.b32.xlu0 %v3932, 48
        %v4414 = vpop.permute.xlu0 %4413
        %4415 = vrot.lane.b32.xlu0 %v3933, 48
        %v4416 = vpop.permute.xlu0 %4415
        %4417 = vrot.lane.b32.xlu0 %v3935, 48
        %v4418 = vpop.permute.xlu0 %4417
        %4419 = vrot.lane.b32.xlu0 %v3936, 48
        %v4420 = vpop.permute.xlu0 %4419
        %4421 = vrot.lane.b32.xlu0 %v3938, 48
        %v4422 = vpop.permute.xlu0 %4421
        %4423 = vrot.lane.b32.xlu0 %v3939, 48
        %v4424 = vpop.permute.xlu0 %4423
        %4425 = vrot.lane.b32.xlu0 %v3941, 48
        %v4426 = vpop.permute.xlu0 %4425
        %4427 = vrot.lane.b32.xlu0 %v3942, 48
        %v4428 = vpop.permute.xlu0 %4427
        %4429 = vrot.lane.b32.xlu0 %v3944, 48
        %v4430 = vpop.permute.xlu0 %4429
        %4431 = vrot.lane.b32.xlu0 %v3945, 48
        %v4432 = vpop.permute.xlu0 %4431
        %4433 = vrot.lane.b32.xlu0 %v3947, 48
        %v4434 = vpop.permute.xlu0 %4433
        %4435 = vrot.lane.b32.xlu0 %v3948, 48
        %v4436 = vpop.permute.xlu0 %4435
        %4437 = vrot.lane.b32.xlu0 %v3950, 48
        %v4438 = vpop.permute.xlu0 %4437
        %4439 = vrot.lane.b32.xlu0 %v3951, 48
        %v4440 = vpop.permute.xlu0 %4439
        %4441 = vrot.lane.b32.xlu0 %v3953, 48
        %v4442 = vpop.permute.xlu0 %4441
        %4443 = vrot.lane.b32.xlu0 %v3954, 48
        %v4444 = vpop.permute.xlu0 %4443
        %4445 = vrot.lane.b32.xlu0 %v3956, 48
        %v4446 = vpop.permute.xlu0 %4445
        %4447 = vrot.lane.b32.xlu0 %v3957, 48
        %v4448 = vpop.permute.xlu0 %4447
        %4449 = vrot.lane.b32.xlu0 %v3959, 48
        %v4450 = vpop.permute.xlu0 %4449
        %4451 = vrot.lane.b32.xlu0 %v3960, 48
        %v4452 = vpop.permute.xlu0 %4451
        %4453 = vrot.lane.b32.xlu0 %v3962, 48
        %v4454 = vpop.permute.xlu0 %4453
        %4455 = vrot.lane.b32.xlu0 %v3963, 48
        %v4456 = vpop.permute.xlu0 %4455
        %4457 = vrot.lane.b32.xlu0 %v3965, 48
        %v4458 = vpop.permute.xlu0 %4457
        %4459 = vrot.lane.b32.xlu0 %v3966, 48
        %v4460 = vpop.permute.xlu0 %4459
        %4493 = vrot.lane.b32.xlu0 %v4026, 64
        %v4494 = vpop.permute.xlu0 %4493
        %4495 = vrot.lane.b32.xlu0 %v4028, 64
        %v4496 = vpop.permute.xlu0 %4495
        %4497 = vrot.lane.b32.xlu0 %v4031, 64
        %v4498 = vpop.permute.xlu0 %4497
        %4499 = vrot.lane.b32.xlu0 %v4033, 64
        %v4500 = vpop.permute.xlu0 %4499
        %4501 = vrot.lane.b32.xlu0 %v4036, 64
        %v4502 = vpop.permute.xlu0 %4501
        %4503 = vrot.lane.b32.xlu0 %v4038, 64
        %v4504 = vpop.permute.xlu0 %4503
        %4505 = vrot.lane.b32.xlu0 %v4041, 64
        %v4506 = vpop.permute.xlu0 %4505
        %4507 = vrot.lane.b32.xlu0 %v4043, 64
        %v4508 = vpop.permute.xlu0 %4507
        %4509 = vrot.lane.b32.xlu0 %v4046, 64
        %v4510 = vpop.permute.xlu0 %4509
        %4511 = vrot.lane.b32.xlu0 %v4048, 64
        %v4512 = vpop.permute.xlu0 %4511
        %4513 = vrot.lane.b32.xlu0 %v4051, 64
        %v4514 = vpop.permute.xlu0 %4513
        %4515 = vrot.lane.b32.xlu0 %v4053, 64
        %v4516 = vpop.permute.xlu0 %4515
        %4517 = vrot.lane.b32.xlu0 %v4056, 64
        %v4518 = vpop.permute.xlu0 %4517
        %4519 = vrot.lane.b32.xlu0 %v4058, 64
        %v4520 = vpop.permute.xlu0 %4519
        %4521 = vrot.lane.b32.xlu0 %v4061, 64
        %v4522 = vpop.permute.xlu0 %4521
        %4523 = vrot.lane.b32.xlu0 %v4063, 64
        %v4524 = vpop.permute.xlu0 %4523
        %4525 = vrot.lane.b32.xlu0 %v4066, 64
        %v4526 = vpop.permute.xlu0 %4525
        %4527 = vrot.lane.b32.xlu0 %v4068, 64
        %v4528 = vpop.permute.xlu0 %4527
        %4529 = vrot.lane.b32.xlu0 %v4071, 64
        %v4530 = vpop.permute.xlu0 %4529
        %4531 = vrot.lane.b32.xlu0 %v4073, 64
        %v4532 = vpop.permute.xlu0 %4531
        %4533 = vrot.lane.b32.xlu0 %v4076, 64
        %v4534 = vpop.permute.xlu0 %4533
        %4535 = vrot.lane.b32.xlu0 %v4078, 64
        %v4536 = vpop.permute.xlu0 %4535
        %4537 = vrot.lane.b32.xlu0 %v4081, 64
        %v4538 = vpop.permute.xlu0 %4537
        %4539 = vrot.lane.b32.xlu0 %v4083, 64
        %v4540 = vpop.permute.xlu0 %4539
        %4541 = vrot.lane.b32.xlu0 %v4086, 64
        %v4542 = vpop.permute.xlu0 %4541
        %4543 = vrot.lane.b32.xlu0 %v4088, 64
        %v4544 = vpop.permute.xlu0 %4543
        %4545 = vrot.lane.b32.xlu0 %v4091, 64
        %v4546 = vpop.permute.xlu0 %4545
        %4547 = vrot.lane.b32.xlu0 %v4093, 64
        %v4548 = vpop.permute.xlu0 %4547
        %4549 = vrot.lane.b32.xlu0 %v4096, 64
        %v4550 = vpop.permute.xlu0 %4549
        %4551 = vrot.lane.b32.xlu0 %v4098, 64
        %v4552 = vpop.permute.xlu0 %4551
        %4553 = vrot.lane.b32.xlu0 %v4184, 64
        %v4554 = vpop.permute.xlu0 %4553
        %4555 = vrot.lane.b32.xlu0 %v4186, 64
        %v4556 = vpop.permute.xlu0 %4555
        %4589 = vrot.lane.b32.xlu0 %v4106, 80
        %v4590 = vpop.permute.xlu0 %4589
        %4591 = vrot.lane.b32.xlu0 %v4108, 80
        %v4592 = vpop.permute.xlu0 %4591
        %4593 = vrot.lane.b32.xlu0 %v4111, 80
        %v4594 = vpop.permute.xlu0 %4593
        %4595 = vrot.lane.b32.xlu0 %v4113, 80
        %v4596 = vpop.permute.xlu0 %4595
        %4597 = vrot.lane.b32.xlu0 %v4116, 80
        %v4598 = vpop.permute.xlu0 %4597
        %4599 = vrot.lane.b32.xlu0 %v4118, 80
        %v4600 = vpop.permute.xlu0 %4599
        %4601 = vrot.lane.b32.xlu0 %v4121, 80
        %v4602 = vpop.permute.xlu0 %4601
        %4603 = vrot.lane.b32.xlu0 %v4123, 80
        %v4604 = vpop.permute.xlu0 %4603
        %4605 = vrot.lane.b32.xlu0 %v4126, 80
        %v4606 = vpop.permute.xlu0 %4605
        %4607 = vrot.lane.b32.xlu0 %v4128, 80
        %v4608 = vpop.permute.xlu0 %4607
        %4609 = vrot.lane.b32.xlu0 %v4131, 80
        %v4610 = vpop.permute.xlu0 %4609
        %4611 = vrot.lane.b32.xlu0 %v4133, 80
        %v4612 = vpop.permute.xlu0 %4611
        %4613 = vrot.lane.b32.xlu0 %v4136, 80
        %v4614 = vpop.permute.xlu0 %4613
        %4615 = vrot.lane.b32.xlu0 %v4138, 80
        %v4616 = vpop.permute.xlu0 %4615
        %4617 = vrot.lane.b32.xlu0 %v4141, 80
        %v4618 = vpop.permute.xlu0 %4617
        %4619 = vrot.lane.b32.xlu0 %v4143, 80
        %v4620 = vpop.permute.xlu0 %4619
        %4621 = vrot.lane.b32.xlu0 %v4146, 80
        %v4622 = vpop.permute.xlu0 %4621
        %4623 = vrot.lane.b32.xlu0 %v4148, 80
        %v4624 = vpop.permute.xlu0 %4623
        %4625 = vrot.lane.b32.xlu0 %v4151, 80
        %v4626 = vpop.permute.xlu0 %4625
        %4627 = vrot.lane.b32.xlu0 %v4153, 80
        %v4628 = vpop.permute.xlu0 %4627
        %4629 = vrot.lane.b32.xlu0 %v4156, 80
        %v4630 = vpop.permute.xlu0 %4629
        %4631 = vrot.lane.b32.xlu0 %v4158, 80
        %v4632 = vpop.permute.xlu0 %4631
        %4633 = vrot.lane.b32.xlu0 %v4161, 80
        %v4634 = vpop.permute.xlu0 %4633
        %4635 = vrot.lane.b32.xlu0 %v4163, 80
        %v4636 = vpop.permute.xlu0 %4635
        %4637 = vrot.lane.b32.xlu0 %v4166, 80
        %v4638 = vpop.permute.xlu0 %4637
        %4639 = vrot.lane.b32.xlu0 %v4168, 80
        %v4640 = vpop.permute.xlu0 %4639
        %4641 = vrot.lane.b32.xlu0 %v4171, 80
        %v4642 = vpop.permute.xlu0 %4641
        %4643 = vrot.lane.b32.xlu0 %v4173, 80
        %v4644 = vpop.permute.xlu0 %4643
        %4645 = vrot.lane.b32.xlu0 %v4176, 80
        %v4646 = vpop.permute.xlu0 %4645
        %4647 = vrot.lane.b32.xlu0 %v4178, 80
        %v4648 = vpop.permute.xlu0 %4647
        %4649 = vrot.lane.b32.xlu0 %v4189, 80
        %v4650 = vpop.permute.xlu0 %4649
        %4651 = vrot.lane.b32.xlu0 %v4191, 80
        %v4652 = vpop.permute.xlu0 %4651
        %4685 = vrot.lane.b32.xlu0 %v3923, 96
        %v4686 = vpop.permute.xlu0 %4685
        %4687 = vrot.lane.b32.xlu0 %v3924, 96
        %v4688 = vpop.permute.xlu0 %4687
        %4689 = vrot.lane.b32.xlu0 %v3926, 96
        %v4690 = vpop.permute.xlu0 %4689
        %4691 = vrot.lane.b32.xlu0 %v3927, 96
        %v4692 = vpop.permute.xlu0 %4691
        %4693 = vrot.lane.b32.xlu0 %v3929, 96
        %v4694 = vpop.permute.xlu0 %4693
        %4695 = vrot.lane.b32.xlu0 %v3930, 96
        %v4696 = vpop.permute.xlu0 %4695
        %4697 = vrot.lane.b32.xlu0 %v3932, 96
        %v4698 = vpop.permute.xlu0 %4697
        %4699 = vrot.lane.b32.xlu0 %v3933, 96
        %v4700 = vpop.permute.xlu0 %4699
        %4701 = vrot.lane.b32.xlu0 %v3935, 96
        %v4702 = vpop.permute.xlu0 %4701
        %4703 = vrot.lane.b32.xlu0 %v3936, 96
        %v4704 = vpop.permute.xlu0 %4703
        %4705 = vrot.lane.b32.xlu0 %v3938, 96
        %v4706 = vpop.permute.xlu0 %4705
        %4707 = vrot.lane.b32.xlu0 %v3939, 96
        %v4708 = vpop.permute.xlu0 %4707
        %4709 = vrot.lane.b32.xlu0 %v3941, 96
        %v4710 = vpop.permute.xlu0 %4709
        %4711 = vrot.lane.b32.xlu0 %v3942, 96
        %v4712 = vpop.permute.xlu0 %4711
        %4713 = vrot.lane.b32.xlu0 %v3944, 96
        %v4714 = vpop.permute.xlu0 %4713
        %4715 = vrot.lane.b32.xlu0 %v3945, 96
        %v4716 = vpop.permute.xlu0 %4715
        %4717 = vrot.lane.b32.xlu0 %v3947, 96
        %v4718 = vpop.permute.xlu0 %4717
        %4719 = vrot.lane.b32.xlu0 %v3948, 96
        %v4720 = vpop.permute.xlu0 %4719
        %4721 = vrot.lane.b32.xlu0 %v3950, 96
        %v4722 = vpop.permute.xlu0 %4721
        %4723 = vrot.lane.b32.xlu0 %v3951, 96
        %v4724 = vpop.permute.xlu0 %4723
        %4725 = vrot.lane.b32.xlu0 %v3953, 96
        %v4726 = vpop.permute.xlu0 %4725
        %4727 = vrot.lane.b32.xlu0 %v3954, 96
        %v4728 = vpop.permute.xlu0 %4727
        %4729 = vrot.lane.b32.xlu0 %v3956, 96
        %v4730 = vpop.permute.xlu0 %4729
        %4731 = vrot.lane.b32.xlu0 %v3957, 96
        %v4732 = vpop.permute.xlu0 %4731
        %4733 = vrot.lane.b32.xlu0 %v3959, 96
        %v4734 = vpop.permute.xlu0 %4733
        %4735 = vrot.lane.b32.xlu0 %v3960, 96
        %v4736 = vpop.permute.xlu0 %4735
        %4737 = vrot.lane.b32.xlu0 %v3962, 96
        %v4738 = vpop.permute.xlu0 %4737
        %4739 = vrot.lane.b32.xlu0 %v3963, 96
        %v4740 = vpop.permute.xlu0 %4739
        %4741 = vrot.lane.b32.xlu0 %v3965, 96
        %v4742 = vpop.permute.xlu0 %4741
        %4743 = vrot.lane.b32.xlu0 %v3966, 96
        %v4744 = vpop.permute.xlu0 %4743
        %4745 = vrot.lane.b32.xlu0 %v3968, 96
        %v4746 = vpop.permute.xlu0 %4745
        %4747 = vrot.lane.b32.xlu0 %v3969, 96
        %v4748 = vpop.permute.xlu0 %4747
        %4781 = vrot.lane.b32.xlu0 %v4031, 112
        %v4782 = vpop.permute.xlu0 %4781
        %4783 = vrot.lane.b32.xlu0 %v4033, 112
        %v4784 = vpop.permute.xlu0 %4783
        %4785 = vrot.lane.b32.xlu0 %v4036, 112
        %v4786 = vpop.permute.xlu0 %4785
        %4787 = vrot.lane.b32.xlu0 %v4038, 112
        %v4788 = vpop.permute.xlu0 %4787
        %4789 = vrot.lane.b32.xlu0 %v4041, 112
        %v4790 = vpop.permute.xlu0 %4789
        %4791 = vrot.lane.b32.xlu0 %v4043, 112
        %v4792 = vpop.permute.xlu0 %4791
        %4793 = vrot.lane.b32.xlu0 %v4046, 112
        %v4794 = vpop.permute.xlu0 %4793
        %4795 = vrot.lane.b32.xlu0 %v4048, 112
        %v4796 = vpop.permute.xlu0 %4795
        %4797 = vrot.lane.b32.xlu0 %v4051, 112
        %v4798 = vpop.permute.xlu0 %4797
        %4799 = vrot.lane.b32.xlu0 %v4053, 112
        %v4800 = vpop.permute.xlu0 %4799
        %4801 = vrot.lane.b32.xlu0 %v4056, 112
        %v4802 = vpop.permute.xlu0 %4801
        %4803 = vrot.lane.b32.xlu0 %v4058, 112
        %v4804 = vpop.permute.xlu0 %4803
        %4805 = vrot.lane.b32.xlu0 %v4061, 112
        %v4806 = vpop.permute.xlu0 %4805
        %4807 = vrot.lane.b32.xlu0 %v4063, 112
        %v4808 = vpop.permute.xlu0 %4807
        %4809 = vrot.lane.b32.xlu0 %v4066, 112
        %v4810 = vpop.permute.xlu0 %4809
        %4811 = vrot.lane.b32.xlu0 %v4068, 112
        %v4812 = vpop.permute.xlu0 %4811
        %4813 = vrot.lane.b32.xlu0 %v4071, 112
        %v4814 = vpop.permute.xlu0 %4813
        %4815 = vrot.lane.b32.xlu0 %v4073, 112
        %v4816 = vpop.permute.xlu0 %4815
        %4817 = vrot.lane.b32.xlu0 %v4076, 112
        %v4818 = vpop.permute.xlu0 %4817
        %4819 = vrot.lane.b32.xlu0 %v4078, 112
        %v4820 = vpop.permute.xlu0 %4819
        %4821 = vrot.lane.b32.xlu0 %v4081, 112
        %v4822 = vpop.permute.xlu0 %4821
        %4823 = vrot.lane.b32.xlu0 %v4083, 112
        %v4824 = vpop.permute.xlu0 %4823
        %4825 = vrot.lane.b32.xlu0 %v4086, 112
        %v4826 = vpop.permute.xlu0 %4825
        %4827 = vrot.lane.b32.xlu0 %v4088, 112
        %v4828 = vpop.permute.xlu0 %4827
        %4829 = vrot.lane.b32.xlu0 %v4091, 112
        %v4830 = vpop.permute.xlu0 %4829
        %4831 = vrot.lane.b32.xlu0 %v4093, 112
        %v4832 = vpop.permute.xlu0 %4831
        %4833 = vrot.lane.b32.xlu0 %v4096, 112
        %v4834 = vpop.permute.xlu0 %4833
        %4835 = vrot.lane.b32.xlu0 %v4098, 112
        %v4836 = vpop.permute.xlu0 %4835
        %4837 = vrot.lane.b32.xlu0 %v4184, 112
        %v4838 = vpop.permute.xlu0 %4837
        %4839 = vrot.lane.b32.xlu0 %v4186, 112
        %v4840 = vpop.permute.xlu0 %4839
        %4841 = vrot.lane.b32.xlu0 %v4197, 112
        %v4842 = vpop.permute.xlu0 %4841
        %4843 = vrot.lane.b32.xlu0 %v4199, 112
        %v4844 = vpop.permute.xlu0 %4843
        %v4877 = vsel %vm318, %v3917, %v4206
        %v4878 = vsel %vm318, %v3918, %v4208
        %v4879 = vsel %vm318, %v3920, %v4210
        %v4880 = vsel %vm318, %v3921, %v4212
        %v4881 = vsel %vm318, %v3923, %v4214
        %v4882 = vsel %vm318, %v3924, %v4216
        %v4883 = vsel %vm318, %v3926, %v4218
        %v4884 = vsel %vm318, %v3927, %v4220
        %v4885 = vsel %vm318, %v3929, %v4222
        %v4886 = vsel %vm318, %v3930, %v4224
        %v4887 = vsel %vm318, %v3932, %v4226
        %v4888 = vsel %vm318, %v3933, %v4228
        %v4889 = vsel %vm318, %v3935, %v4230
        %v4890 = vsel %vm318, %v3936, %v4232
        %v4891 = vsel %vm318, %v3938, %v4234
        %v4892 = vsel %vm318, %v3939, %v4236
        %v4893 = vsel %vm318, %v3941, %v4238
        %v4894 = vsel %vm318, %v3942, %v4240
        %v4895 = vsel %vm318, %v3944, %v4242
        %v4896 = vsel %vm318, %v3945, %v4244
        %v4897 = vsel %vm318, %v3947, %v4246
        %v4898 = vsel %vm318, %v3948, %v4248
        %v4899 = vsel %vm318, %v3950, %v4250
        %v4900 = vsel %vm318, %v3951, %v4252
        %v4901 = vsel %vm318, %v3953, %v4254
        %v4902 = vsel %vm318, %v3954, %v4256
        %v4903 = vsel %vm318, %v3956, %v4258
        %v4904 = vsel %vm318, %v3957, %v4260
        %v4905 = vsel %vm318, %v3959, %v4262
        %v4906 = vsel %vm318, %v3960, %v4264
        %v4907 = vsel %vm318, %v3962, %v4266
        %v4908 = vsel %vm318, %v3963, %v4268
        %v4909 = vsel %vm3277, %v4877, %v4302
        %v4910 = vsel %vm3277, %v4878, %v4304
        %v4911 = vsel %vm3277, %v4879, %v4306
        %v4912 = vsel %vm3277, %v4880, %v4308
        %v4913 = vsel %vm3277, %v4881, %v4310
        %v4914 = vsel %vm3277, %v4882, %v4312
        %v4915 = vsel %vm3277, %v4883, %v4314
        %v4916 = vsel %vm3277, %v4884, %v4316
        %v4917 = vsel %vm3277, %v4885, %v4318
        %v4918 = vsel %vm3277, %v4886, %v4320
        %v4919 = vsel %vm3277, %v4887, %v4322
        %v4920 = vsel %vm3277, %v4888, %v4324
        %v4921 = vsel %vm3277, %v4889, %v4326
        %v4922 = vsel %vm3277, %v4890, %v4328
        %v4923 = vsel %vm3277, %v4891, %v4330
        %v4924 = vsel %vm3277, %v4892, %v4332
        %v4925 = vsel %vm3277, %v4893, %v4334
        %v4926 = vsel %vm3277, %v4894, %v4336
        %v4927 = vsel %vm3277, %v4895, %v4338
        %v4928 = vsel %vm3277, %v4896, %v4340
        %v4929 = vsel %vm3277, %v4897, %v4342
        %v4930 = vsel %vm3277, %v4898, %v4344
        %v4931 = vsel %vm3277, %v4899, %v4346
        %v4932 = vsel %vm3277, %v4900, %v4348
        %v4933 = vsel %vm3277, %v4901, %v4350
        %v4934 = vsel %vm3277, %v4902, %v4352
        %v4935 = vsel %vm3277, %v4903, %v4354
        %v4936 = vsel %vm3277, %v4904, %v4356
        %v4937 = vsel %vm3277, %v4905, %v4358
        %v4938 = vsel %vm3277, %v4906, %v4360
        %v4939 = vsel %vm3277, %v4907, %v4362
        %v4940 = vsel %vm3277, %v4908, %v4364
        %v4941 = vsel %vm3310, %v4909, %v4398
        %v4942 = vsel %vm3310, %v4910, %v4400
        %v4943 = vsel %vm3310, %v4911, %v4402
        %v4944 = vsel %vm3310, %v4912, %v4404
        %v4945 = vsel %vm3310, %v4913, %v4406
        %v4946 = vsel %vm3310, %v4914, %v4408
        %v4947 = vsel %vm3310, %v4915, %v4410
        %v4948 = vsel %vm3310, %v4916, %v4412
        %v4949 = vsel %vm3310, %v4917, %v4414
        %v4950 = vsel %vm3310, %v4918, %v4416
        %v4951 = vsel %vm3310, %v4919, %v4418
        %v4952 = vsel %vm3310, %v4920, %v4420
        %v4953 = vsel %vm3310, %v4921, %v4422
        %v4954 = vsel %vm3310, %v4922, %v4424
        %v4955 = vsel %vm3310, %v4923, %v4426
        %v4956 = vsel %vm3310, %v4924, %v4428
        %v4957 = vsel %vm3310, %v4925, %v4430
        %v4958 = vsel %vm3310, %v4926, %v4432
        %v4959 = vsel %vm3310, %v4927, %v4434
        %v4960 = vsel %vm3310, %v4928, %v4436
        %v4961 = vsel %vm3310, %v4929, %v4438
        %v4962 = vsel %vm3310, %v4930, %v4440
        %v4963 = vsel %vm3310, %v4931, %v4442
        %v4964 = vsel %vm3310, %v4932, %v4444
        %v4965 = vsel %vm3310, %v4933, %v4446
        %v4966 = vsel %vm3310, %v4934, %v4448
        %v4967 = vsel %vm3310, %v4935, %v4450
        %v4968 = vsel %vm3310, %v4936, %v4452
        %v4969 = vsel %vm3310, %v4937, %v4454
        %v4970 = vsel %vm3310, %v4938, %v4456
        %v4971 = vsel %vm3310, %v4939, %v4458
        %v4972 = vsel %vm3310, %v4940, %v4460
        %v4973 = vsel %vm3343, %v4941, %v4494
        %v4974 = vsel %vm3343, %v4942, %v4496
        %v4975 = vsel %vm3343, %v4943, %v4498
        %v4976 = vsel %vm3343, %v4944, %v4500
        %v4977 = vsel %vm3343, %v4945, %v4502
        %v4978 = vsel %vm3343, %v4946, %v4504
        %v4979 = vsel %vm3343, %v4947, %v4506
        %v4980 = vsel %vm3343, %v4948, %v4508
        %v4981 = vsel %vm3343, %v4949, %v4510
        %v4982 = vsel %vm3343, %v4950, %v4512
        %v4983 = vsel %vm3343, %v4951, %v4514
        %v4984 = vsel %vm3343, %v4952, %v4516
        %v4985 = vsel %vm3343, %v4953, %v4518
        %v4986 = vsel %vm3343, %v4954, %v4520
        %v4987 = vsel %vm3343, %v4955, %v4522
        %v4988 = vsel %vm3343, %v4956, %v4524
        %v4989 = vsel %vm3343, %v4957, %v4526
        %v4990 = vsel %vm3343, %v4958, %v4528
        %v4991 = vsel %vm3343, %v4959, %v4530
        %v4992 = vsel %vm3343, %v4960, %v4532
        %v4993 = vsel %vm3343, %v4961, %v4534
        %v4994 = vsel %vm3343, %v4962, %v4536
        %v4995 = vsel %vm3343, %v4963, %v4538
        %v4996 = vsel %vm3343, %v4964, %v4540
        %v4997 = vsel %vm3343, %v4965, %v4542
        %v4998 = vsel %vm3343, %v4966, %v4544
        %v4999 = vsel %vm3343, %v4967, %v4546
        %v5000 = vsel %vm3343, %v4968, %v4548
        %v5001 = vsel %vm3343, %v4969, %v4550
        %v5002 = vsel %vm3343, %v4970, %v4552
        %v5003 = vsel %vm3343, %v4971, %v4554
        %v5004 = vsel %vm3343, %v4972, %v4556
        %v5005 = vsel %vm3376, %v4973, %v4590
        %v5006 = vsel %vm3376, %v4974, %v4592
        %v5007 = vsel %vm3376, %v4975, %v4594
        %v5008 = vsel %vm3376, %v4976, %v4596
        %v5009 = vsel %vm3376, %v4977, %v4598
        %v5010 = vsel %vm3376, %v4978, %v4600
        %v5011 = vsel %vm3376, %v4979, %v4602
        %v5012 = vsel %vm3376, %v4980, %v4604
        %v5013 = vsel %vm3376, %v4981, %v4606
        %v5014 = vsel %vm3376, %v4982, %v4608
        %v5015 = vsel %vm3376, %v4983, %v4610
        %v5016 = vsel %vm3376, %v4984, %v4612
        %v5017 = vsel %vm3376, %v4985, %v4614
        %v5018 = vsel %vm3376, %v4986, %v4616
        %v5019 = vsel %vm3376, %v4987, %v4618
        %v5020 = vsel %vm3376, %v4988, %v4620
        %v5021 = vsel %vm3376, %v4989, %v4622
        %v5022 = vsel %vm3376, %v4990, %v4624
        %v5023 = vsel %vm3376, %v4991, %v4626
        %v5024 = vsel %vm3376, %v4992, %v4628
        %v5025 = vsel %vm3376, %v4993, %v4630
        %v5026 = vsel %vm3376, %v4994, %v4632
        %v5027 = vsel %vm3376, %v4995, %v4634
        %v5028 = vsel %vm3376, %v4996, %v4636
        %v5029 = vsel %vm3376, %v4997, %v4638
        %v5030 = vsel %vm3376, %v4998, %v4640
        %v5031 = vsel %vm3376, %v4999, %v4642
        %v5032 = vsel %vm3376, %v5000, %v4644
        %v5033 = vsel %vm3376, %v5001, %v4646
        %v5034 = vsel %vm3376, %v5002, %v4648
        %v5035 = vsel %vm3376, %v5003, %v4650
        %v5036 = vsel %vm3376, %v5004, %v4652
        %v5037 = vsel %vm3409, %v5005, %v4686
        %v5038 = vsel %vm3409, %v5006, %v4688
        %v5039 = vsel %vm3409, %v5007, %v4690
        %v5040 = vsel %vm3409, %v5008, %v4692
        %v5041 = vsel %vm3409, %v5009, %v4694
        %v5042 = vsel %vm3409, %v5010, %v4696
        %v5043 = vsel %vm3409, %v5011, %v4698
        %v5044 = vsel %vm3409, %v5012, %v4700
        %v5045 = vsel %vm3409, %v5013, %v4702
        %v5046 = vsel %vm3409, %v5014, %v4704
        %v5047 = vsel %vm3409, %v5015, %v4706
        %v5048 = vsel %vm3409, %v5016, %v4708
        %v5049 = vsel %vm3409, %v5017, %v4710
        %v5050 = vsel %vm3409, %v5018, %v4712
        %v5051 = vsel %vm3409, %v5019, %v4714
        %v5052 = vsel %vm3409, %v5020, %v4716
        %v5053 = vsel %vm3409, %v5021, %v4718
        %v5054 = vsel %vm3409, %v5022, %v4720
        %v5055 = vsel %vm3409, %v5023, %v4722
        %v5056 = vsel %vm3409, %v5024, %v4724
        %v5057 = vsel %vm3409, %v5025, %v4726
        %v5058 = vsel %vm3409, %v5026, %v4728
        %v5059 = vsel %vm3409, %v5027, %v4730
        %v5060 = vsel %vm3409, %v5028, %v4732
        %v5061 = vsel %vm3409, %v5029, %v4734
        %v5062 = vsel %vm3409, %v5030, %v4736
        %v5063 = vsel %vm3409, %v5031, %v4738
        %v5064 = vsel %vm3409, %v5032, %v4740
        %v5065 = vsel %vm3409, %v5033, %v4742
        %v5066 = vsel %vm3409, %v5034, %v4744
        %v5067 = vsel %vm3409, %v5035, %v4746
        %v5068 = vsel %vm3409, %v5036, %v4748
        %v5069 = vsel %vm3442, %v5037, %v4782
        %v5070 = vsel %vm3442, %v5038, %v4784
        %v5071 = vsel %vm3442, %v5039, %v4786
        %v5072 = vsel %vm3442, %v5040, %v4788
        %v5073 = vsel %vm3442, %v5041, %v4790
        %v5074 = vsel %vm3442, %v5042, %v4792
        %v5075 = vsel %vm3442, %v5043, %v4794
        %v5076 = vsel %vm3442, %v5044, %v4796
        %v5077 = vsel %vm3442, %v5045, %v4798
        %v5078 = vsel %vm3442, %v5046, %v4800
        %v5079 = vsel %vm3442, %v5047, %v4802
        %v5080 = vsel %vm3442, %v5048, %v4804
        %v5081 = vsel %vm3442, %v5049, %v4806
        %v5082 = vsel %vm3442, %v5050, %v4808
        %v5083 = vsel %vm3442, %v5051, %v4810
        %v5084 = vsel %vm3442, %v5052, %v4812
        %v5085 = vsel %vm3442, %v5053, %v4814
        %v5086 = vsel %vm3442, %v5054, %v4816
        %v5087 = vsel %vm3442, %v5055, %v4818
        %v5088 = vsel %vm3442, %v5056, %v4820
        %v5089 = vsel %vm3442, %v5057, %v4822
        %v5090 = vsel %vm3442, %v5058, %v4824
        %v5091 = vsel %vm3442, %v5059, %v4826
        %v5092 = vsel %vm3442, %v5060, %v4828
        %v5093 = vsel %vm3442, %v5061, %v4830
        %v5094 = vsel %vm3442, %v5062, %v4832
        %v5095 = vsel %vm3442, %v5063, %v4834
        %v5096 = vsel %vm3442, %v5064, %v4836
        %v5097 = vsel %vm3442, %v5065, %v4838
        %v5098 = vsel %vm3442, %v5066, %v4840
        %v5099 = vsel %vm3442, %v5067, %v4842
        %v5100 = vsel %vm3442, %v5068, %v4844
        %v5101 = vld [vmem:[%s6] sm:$0xff]
        %v5102 = vld [vmem:[%s6 + $0x8] sm:$0xff]
        %v5103 = vld [vmem:[%s6 + $0x10] sm:$0xff]
        %v5104 = vld [vmem:[%s6 + $0x18] sm:$0xff]
        %v5105 = vld [vmem:[%s6 + $0x20] sm:$0xff]
        %v5106 = vld [vmem:[%s6 + $0x28] sm:$0xff]
        %v5107 = vld [vmem:[%s6 + $0x30] sm:$0xff]
        %v5108 = vld [vmem:[%s6 + $0x38] sm:$0xff]
        %v5109 = vld [vmem:[%s6 + $0x40] sm:$0xff]
        %v5110 = vld [vmem:[%s6 + $0x48] sm:$0xff]
        %v5111 = vld [vmem:[%s6 + $0x50] sm:$0xff]
        %v5112 = vld [vmem:[%s6 + $0x58] sm:$0xff]
        %v5113 = vld [vmem:[%s6 + $0x60] sm:$0xff]
        %v5114 = vld [vmem:[%s6 + $0x68] sm:$0xff]
        %v5115 = vld [vmem:[%s6 + $0x70] sm:$0xff]
        %v5116 = vld [vmem:[%s6 + $0x78] sm:$0xff]
        %v5117 = vld [vmem:[%s6 + $0x80] sm:$0xff]
        %v5118 = vld [vmem:[%s6 + $0x88] sm:$0xff]
        %v5119 = vld [vmem:[%s7] sm:$0x1]
        %v5121 = vlaneseq
        %v5122 = vshrl.u32 %v5121, 7
        %v5123 = vsub.s32 0, %v5122
        %v5124 = vrot.slane %v5119, %v5123
        %v5126 = vsel %vm318, %v4111, 0
        %v5128 = vsel %vm318, %v4113, 0
        %v5130 = vsel %vm318, %v4116, 0
        %v5132 = vsel %vm318, %v4118, 0
        %v5134 = vsel %vm318, %v4121, 0
        %v5136 = vsel %vm318, %v4123, 0
        %v5138 = vsel %vm318, %v4126, 0
        %v5140 = vsel %vm318, %v4128, 0
        %v5142 = vsel %vm318, %v4131, 0
        %v5144 = vsel %vm318, %v4133, 0
        %v5146 = vsel %vm318, %v4136, 0
        %v5148 = vsel %vm318, %v4138, 0
        %v5150 = vsel %vm318, %v4141, 0
        %v5152 = vsel %vm318, %v4143, 0
        %v5154 = vsel %vm318, %v4146, 0
        %v5156 = vsel %vm318, %v4148, 0
        %v5158 = vsel %vm318, %v4151, 0
        %v5160 = vsel %vm318, %v4153, 0
        %v5162 = vsel %vm318, %v4156, 0
        %v5164 = vsel %vm318, %v4158, 0
        %v5166 = vsel %vm318, %v4161, 0
        %v5168 = vsel %vm318, %v4163, 0
        %v5170 = vsel %vm318, %v4166, 0
        %v5172 = vsel %vm318, %v4168, 0
        %v5174 = vsel %vm318, %v4171, 0
        %v5176 = vsel %vm318, %v4173, 0
        %v5178 = vsel %vm318, %v4176, 0
        %v5180 = vsel %vm318, %v4178, 0
        %v5182 = vsel %vm318, %v4189, 0
        %v5184 = vsel %vm318, %v4191, 0
        %v5186 = vsel %vm318, %v4202, 0
        %v5188 = vsel %vm318, %v4204, 0
        %5190 = vmatprep.subr.mxu0 0.0
        %5191 = vmatpush1.msra.mxu0 %v5101
        %5192 = vmatprep.subr.mxu0 0.0
        %5193 = vmatpush1.msra.mxu0 %v5102
        %5194 = vmatprep.subr.mxu0 0.0
        %5195 = vmatpush1.msra.mxu0 %v5103
        %5196 = vmatprep.subr.mxu0 0.0
        %5197 = vmatpush1.msra.mxu0 %v5104
        %5198 = vmatprep.subr.mxu0 0.0
        %5199 = vmatpush1.msra.mxu0 %v5105
        %5200 = vmatprep.subr.mxu0 0.0
        %5201 = vmatpush1.msra.mxu0 %v5106
        %5202 = vmatprep.subr.mxu0 0.0
        %5203 = vmatpush1.msra.mxu0 %v5107
        %5204 = vmatprep.subr.mxu0 0.0
        %5205 = vmatpush1.msra.mxu0 %v5108
        %5206 = vmatprep.subr.mxu0 0.0
        %5207 = vmatpush1.msra.mxu0 %v5109
        %5208 = vmatprep.subr.mxu0 0.0
        %5209 = vmatpush1.msra.mxu0 %v5110
        %5210 = vmatprep.subr.mxu0 0.0
        %5211 = vmatpush1.msra.mxu0 %v5111
        %5212 = vmatprep.subr.mxu0 0.0
        %5213 = vmatpush1.msra.mxu0 %v5112
        %5214 = vmatprep.subr.mxu0 0.0
        %5215 = vmatpush1.msra.mxu0 %v5113
        %5216 = vmatprep.subr.mxu0 0.0
        %5217 = vmatpush1.msra.mxu0 %v5114
        %5218 = vmatprep.subr.mxu0 0.0
        %5219 = vmatpush1.msra.mxu0 %v5115
        %5220 = vmatprep.subr.mxu0 0.0
        %5221 = vmatpush1.msra.mxu0 %v5116
        %5222 = vmatprep.subr.mxu0 0.0
        %5223 = vmatpush1.msra.mxu0 %v5117
        %5224 = vmatprep.subr.mxu0 0.0
        %5225 = vmatpush1.msra.mxu0 %v5118
        %5226 = vmatprep.subr.mxu0 0.0
        %5227 = vmatpush1.msra.mxu0 0.0
        %5228 = vmatprep.subr.mxu0 0.0
        %5229 = vmatpush1.msra.mxu0 0.0
        %5230 = vmatprep.subr.mxu0 0.0
        %5231 = vmatpush1.msra.mxu0 0.0
        %5232 = vmatprep.subr.mxu0 0.0
        %5233 = vmatpush1.msra.mxu0 0.0
        %5234 = vmatprep.subr.mxu0 0.0
        %5235 = vmatpush1.msra.mxu0 0.0
        %5236 = vmatprep.subr.mxu0 0.0
        %5237 = vmatpush1.msra.mxu0 0.0
        %5238 = vmatprep.subr.mxu0 0.0
        %5239 = vmatpush1.msra.mxu0 0.0
        %5240 = vmatprep.subr.mxu0 0.0
        %5241 = vmatpush1.msra.mxu0 0.0
        %5242 = vmatprep.subr.mxu0 0.0
        %5243 = vmatpush1.msra.mxu0 0.0
        %5244 = vmatprep.subr.mxu0 0.0
        %5245 = vmatpush1.msra.mxu0 0.0
        %5246 = vmatprep.subr.mxu0 0.0
        %5247 = vmatpush1.msra.mxu0 0.0
        %5248 = vmatprep.subr.mxu0 0.0
        %5249 = vmatpush1.msra.mxu0 0.0
        %5250 = vmatprep.subr.mxu0 0.0
        %5251 = vmatpush1.msra.mxu0 0.0
        %5252 = vmatprep.subr.mxu0 0.0
        %5253 = vmatpush1.msra.mxu0 0.0
        %5254 = vmatprep.mubr.f32.mxu0 %v5126
        %5255 = vmatmul.mubr.f32.gmra.mrb[0].mxu0 %v5069
        %v5256 = vpop.f32.mrb[0].mxu0
        %v5257 = vadd.f32 %v5124, %v5256
        %v5258 = vpop.f32.mrb[0].mxu0
        %5259 = vmatprep.mubr.f32.mxu0 %v5128
        %5260 = vmatmul.mubr.f32.gmra.mrb[0].mxu0 %v5070
        %v5261 = vpop.f32.mrb[0].mxu0
        %v5262 = vadd.f32 %v5124, %v5261
        %v5263 = vpop.f32.mrb[0].mxu0
        %5264 = vmatprep.mubr.f32.mxu0 %v5130
        %5265 = vmatmul.mubr.f32.gmra.mrb[0].mxu0 %v5071
        %v5266 = vpop.f32.mrb[0].mxu0
        %v5267 = vadd.f32 %v5124, %v5266
        %v5268 = vpop.f32.mrb[0].mxu0
        %5269 = vmatprep.mubr.f32.mxu0 %v5132
        %5270 = vmatmul.mubr.f32.gmra.mrb[0].mxu0 %v5072
        %v5271 = vpop.f32.mrb[0].mxu0
        %v5272 = vadd.f32 %v5124, %v5271
        %v5273 = vpop.f32.mrb[0].mxu0
        %5274 = vmatprep.mubr.f32.mxu0 %v5134
        %5275 = vmatmul.mubr.f32.gmra.mrb[0].mxu0 %v5073
        %v5276 = vpop.f32.mrb[0].mxu0
        %v5277 = vadd.f32 %v5124, %v5276
        %v5278 = vpop.f32.mrb[0].mxu0
        %5279 = vmatprep.mubr.f32.mxu0 %v5136
        %5280 = vmatmul.mubr.f32.gmra.mrb[0].mxu0 %v5074
        %v5281 = vpop.f32.mrb[0].mxu0
        %v5282 = vadd.f32 %v5124, %v5281
        %v5283 = vpop.f32.mrb[0].mxu0
        %5284 = vmatprep.mubr.f32.mxu0 %v5138
        %5285 = vmatmul.mubr.f32.gmra.mrb[0].mxu0 %v5075
        %v5286 = vpop.f32.mrb[0].mxu0
        %v5287 = vadd.f32 %v5124, %v5286
        %v5288 = vpop.f32.mrb[0].mxu0
        %5289 = vmatprep.mubr.f32.mxu0 %v5140
        %5290 = vmatmul.mubr.f32.gmra.mrb[0].mxu0 %v5076
        %v5291 = vpop.f32.mrb[0].mxu0
        %v5292 = vadd.f32 %v5124, %v5291
        %v5293 = vpop.f32.mrb[0].mxu0
        %5294 = vmatprep.mubr.f32.mxu0 %v5142
        %5295 = vmatmul.mubr.f32.gmra.mrb[0].mxu0 %v5077
        %v5296 = vpop.f32.mrb[0].mxu0
        %v5297 = vadd.f32 %v5124, %v5296
        %v5298 = vpop.f32.mrb[0].mxu0
        %5299 = vmatprep.mubr.f32.mxu0 %v5144
        %5300 = vmatmul.mubr.f32.gmra.mrb[0].mxu0 %v5078
        %v5301 = vpop.f32.mrb[0].mxu0
        %v5302 = vadd.f32 %v5124, %v5301
        %v5303 = vpop.f32.mrb[0].mxu0
        %5304 = vmatprep.mubr.f32.mxu0 %v5146
        %5305 = vmatmul.mubr.f32.gmra.mrb[0].mxu0 %v5079
        %v5306 = vpop.f32.mrb[0].mxu0
        %v5307 = vadd.f32 %v5124, %v5306
        %v5308 = vpop.f32.mrb[0].mxu0
        %5309 = vmatprep.mubr.f32.mxu0 %v5148
        %5310 = vmatmul.mubr.f32.gmra.mrb[0].mxu0 %v5080
        %v5311 = vpop.f32.mrb[0].mxu0
        %v5312 = vadd.f32 %v5124, %v5311
        %v5313 = vpop.f32.mrb[0].mxu0
        %5314 = vmatprep.mubr.f32.mxu0 %v5150
        %5315 = vmatmul.mubr.f32.gmra.mrb[0].mxu0 %v5081
        %v5316 = vpop.f32.mrb[0].mxu0
        %v5317 = vadd.f32 %v5124, %v5316
        %v5318 = vpop.f32.mrb[0].mxu0
        %5319 = vmatprep.mubr.f32.mxu0 %v5152
        %5320 = vmatmul.mubr.f32.gmra.mrb[0].mxu0 %v5082
        %v5321 = vpop.f32.mrb[0].mxu0
        %v5322 = vadd.f32 %v5124, %v5321
        %v5323 = vpop.f32.mrb[0].mxu0
        %5324 = vmatprep.mubr.f32.mxu0 %v5154
        %5325 = vmatmul.mubr.f32.gmra.mrb[0].mxu0 %v5083
        %v5326 = vpop.f32.mrb[0].mxu0
        %v5327 = vadd.f32 %v5124, %v5326
        %v5328 = vpop.f32.mrb[0].mxu0
        %5329 = vmatprep.mubr.f32.mxu0 %v5156
        %5330 = vmatmul.mubr.f32.gmra.mrb[0].mxu0 %v5084
        %v5331 = vpop.f32.mrb[0].mxu0
        %v5332 = vadd.f32 %v5124, %v5331
        %v5333 = vpop.f32.mrb[0].mxu0
        %5334 = vmatprep.mubr.f32.mxu0 %v5158
        %5335 = vmatmul.mubr.f32.gmra.mrb[0].mxu0 %v5085
        %v5336 = vpop.f32.mrb[0].mxu0
        %v5337 = vadd.f32 %v5124, %v5336
        %v5338 = vpop.f32.mrb[0].mxu0
        %5339 = vmatprep.mubr.f32.mxu0 %v5160
        %5340 = vmatmul.mubr.f32.gmra.mrb[0].mxu0 %v5086
        %v5341 = vpop.f32.mrb[0].mxu0
        %v5342 = vadd.f32 %v5124, %v5341
        %v5343 = vpop.f32.mrb[0].mxu0
        %5344 = vmatprep.mubr.f32.mxu0 %v5162
        %5345 = vmatmul.mubr.f32.gmra.mrb[0].mxu0 %v5087
        %v5346 = vpop.f32.mrb[0].mxu0
        %v5347 = vadd.f32 %v5124, %v5346
        %v5348 = vpop.f32.mrb[0].mxu0
        %5349 = vmatprep.mubr.f32.mxu0 %v5164
        %5350 = vmatmul.mubr.f32.gmra.mrb[0].mxu0 %v5088
        %v5351 = vpop.f32.mrb[0].mxu0
        %v5352 = vadd.f32 %v5124, %v5351
        %v5353 = vpop.f32.mrb[0].mxu0
        %5354 = vmatprep.mubr.f32.mxu0 %v5166
        %5355 = vmatmul.mubr.f32.gmra.mrb[0].mxu0 %v5089
        %v5356 = vpop.f32.mrb[0].mxu0
        %v5357 = vadd.f32 %v5124, %v5356
        %v5358 = vpop.f32.mrb[0].mxu0
        %5359 = vmatprep.mubr.f32.mxu0 %v5168
        %5360 = vmatmul.mubr.f32.gmra.mrb[0].mxu0 %v5090
        %v5361 = vpop.f32.mrb[0].mxu0
        %v5362 = vadd.f32 %v5124, %v5361
        %v5363 = vpop.f32.mrb[0].mxu0
        %5364 = vmatprep.mubr.f32.mxu0 %v5170
        %5365 = vmatmul.mubr.f32.gmra.mrb[0].mxu0 %v5091
        %v5366 = vpop.f32.mrb[0].mxu0
        %v5367 = vadd.f32 %v5124, %v5366
        %v5368 = vpop.f32.mrb[0].mxu0
        %5369 = vmatprep.mubr.f32.mxu0 %v5172
        %5370 = vmatmul.mubr.f32.gmra.mrb[0].mxu0 %v5092
        %v5371 = vpop.f32.mrb[0].mxu0
        %v5372 = vadd.f32 %v5124, %v5371
        %v5373 = vpop.f32.mrb[0].mxu0
        %5374 = vmatprep.mubr.f32.mxu0 %v5174
        %5375 = vmatmul.mubr.f32.gmra.mrb[0].mxu0 %v5093
        %v5376 = vpop.f32.mrb[0].mxu0
        %v5377 = vadd.f32 %v5124, %v5376
        %v5378 = vpop.f32.mrb[0].mxu0
        %5379 = vmatprep.mubr.f32.mxu0 %v5176
        %5380 = vmatmul.mubr.f32.gmra.mrb[0].mxu0 %v5094
        %v5381 = vpop.f32.mrb[0].mxu0
        %v5382 = vadd.f32 %v5124, %v5381
        %v5383 = vpop.f32.mrb[0].mxu0
        %5384 = vmatprep.mubr.f32.mxu0 %v5178
        %5385 = vmatmul.mubr.f32.gmra.mrb[0].mxu0 %v5095
        %v5386 = vpop.f32.mrb[0].mxu0
        %v5387 = vadd.f32 %v5124, %v5386
        %v5388 = vpop.f32.mrb[0].mxu0
        %5389 = vmatprep.mubr.f32.mxu0 %v5180
        %5390 = vmatmul.mubr.f32.gmra.mrb[0].mxu0 %v5096
        %v5391 = vpop.f32.mrb[0].mxu0
        %v5392 = vadd.f32 %v5124, %v5391
        %v5393 = vpop.f32.mrb[0].mxu0
        %5394 = vmatprep.mubr.f32.mxu0 %v5182
        %5395 = vmatmul.mubr.f32.gmra.mrb[0].mxu0 %v5097
        %v5396 = vpop.f32.mrb[0].mxu0
        %v5397 = vadd.f32 %v5124, %v5396
        %v5398 = vpop.f32.mrb[0].mxu0
        %5399 = vmatprep.mubr.f32.mxu0 %v5184
        %5400 = vmatmul.mubr.f32.gmra.mrb[0].mxu0 %v5098
        %v5401 = vpop.f32.mrb[0].mxu0
        %v5402 = vadd.f32 %v5124, %v5401
        %v5403 = vpop.f32.mrb[0].mxu0
        %5404 = vmatprep.mubr.f32.mxu0 %v5186
        %5405 = vmatmul.mubr.f32.gmra.mrb[0].mxu0 %v5099
        %v5406 = vpop.f32.mrb[0].mxu0
        %v5407 = vadd.f32 %v5124, %v5406
        %v5408 = vpop.f32.mrb[0].mxu0
        %5409 = vmatprep.mubr.f32.mxu0 %v5188
        %5410 = vmatmul.mubr.f32.gmra.mrb[0].mxu0 %v5100
        %v5411 = vpop.f32.mrb[0].mxu0
        %v5412 = vadd.f32 %v5124, %v5411
        %v5413 = vpop.f32.mrb[0].mxu0
        %5414 = vdwg.mxu0
        %5415 = vxpose.xlu0.b32.start [1/16] %v5257, 128
        %5416 = vxpose.xlu0.b32.cont [2/16] %v5262, 128
        %5417 = vxpose.xlu0.b32.cont [3/16] %v5267, 128
        %5418 = vxpose.xlu0.b32.cont [4/16] %v5272, 128
        %5419 = vxpose.xlu0.b32.cont [5/16] %v5277, 128
        %5420 = vxpose.xlu0.b32.cont [6/16] %v5282, 128
        %5421 = vxpose.xlu0.b32.cont [7/16] %v5287, 128
        %5422 = vxpose.xlu0.b32.cont [8/16] %v5292, 128
        %5423 = vxpose.xlu0.b32.cont [9/16] %v5297, 128
        %5424 = vxpose.xlu0.b32.cont [10/16] %v5302, 128
        %5425 = vxpose.xlu0.b32.cont [11/16] %v5307, 128
        %5426 = vxpose.xlu0.b32.cont [12/16] %v5312, 128
        %5427 = vxpose.xlu0.b32.cont [13/16] %v5317, 128
        %5428 = vxpose.xlu0.b32.cont [14/16] %v5322, 128
        %5429 = vxpose.xlu0.b32.cont [15/16] %v5327, 128
        %5430 = vxpose.xlu0.b32.end [16/16] %v5332, 128
        %v5431 = vpop.trf.xlu0
        %v5432 = vpop.trf.xlu0
        %v5433 = vpop.trf.xlu0
        %v5434 = vpop.trf.xlu0
        %v5435 = vpop.trf.xlu0
        %v5436 = vpop.trf.xlu0
        %v5437 = vpop.trf.xlu0
        %v5438 = vpop.trf.xlu0
        %v5439 = vpop.trf.xlu0
        %v5440 = vpop.trf.xlu0
        %v5441 = vpop.trf.xlu0
        %v5442 = vpop.trf.xlu0
        %v5443 = vpop.trf.xlu0
        %v5444 = vpop.trf.xlu0
        %v5445 = vpop.trf.xlu0
        %v5446 = vpop.trf.xlu0
        %5447 = vxpose.xlu0.b32.start [1/16] %v5337, 128
        %5448 = vxpose.xlu0.b32.cont [2/16] %v5342, 128
        %5449 = vxpose.xlu0.b32.cont [3/16] %v5347, 128
        %5450 = vxpose.xlu0.b32.cont [4/16] %v5352, 128
        %5451 = vxpose.xlu0.b32.cont [5/16] %v5357, 128
        %5452 = vxpose.xlu0.b32.cont [6/16] %v5362, 128
        %5453 = vxpose.xlu0.b32.cont [7/16] %v5367, 128
        %5454 = vxpose.xlu0.b32.cont [8/16] %v5372, 128
        %5455 = vxpose.xlu0.b32.cont [9/16] %v5377, 128
        %5456 = vxpose.xlu0.b32.cont [10/16] %v5382, 128
        %5457 = vxpose.xlu0.b32.cont [11/16] %v5387, 128
        %5458 = vxpose.xlu0.b32.cont [12/16] %v5392, 128
        %5459 = vxpose.xlu0.b32.cont [13/16] %v5397, 128
        %5460 = vxpose.xlu0.b32.cont [14/16] %v5402, 128
        %5461 = vxpose.xlu0.b32.cont [15/16] %v5407, 128
        %5462 = vxpose.xlu0.b32.end [16/16] %v5412, 128
        %v5463 = vpop.trf.xlu0
        %v5464 = vpop.trf.xlu0
        %v5465 = vpop.trf.xlu0
        %v5466 = vpop.trf.xlu0
        %v5467 = vpop.trf.xlu0
        %v5468 = vpop.trf.xlu0
        %v5469 = vpop.trf.xlu0
        %v5470 = vpop.trf.xlu0
        %v5471 = vpop.trf.xlu0
        %v5472 = vpop.trf.xlu0
        %v5473 = vpop.trf.xlu0
        %v5474 = vpop.trf.xlu0
        %v5475 = vpop.trf.xlu0
        %v5476 = vpop.trf.xlu0
        %v5477 = vpop.trf.xlu0
        %v5478 = vpop.trf.xlu0
        %v5481 = vcombine.low %v5431, %v5463
        %v5483 = vunpack.c.l.s4 1983009808
        %v5484 = vunpack.c.0.s8 %v5483
        %v5485 = vlaneseq
        %v5486 = vshrl.u32 %v5485, 7
        %v5487 = vsub.s32 %v5484, %v5486
        %v5488 = vrot.slane %v5481, %v5487
        %5490 = vst [vmem:[%s309] sm:$0xf] %v5488
        %s5491 = sand.u32 %s208, 1
        %s5492 = scalar_lea.sflag [#allocation4], %s5491
        %s5493 = sand.u32 %s208, 1
        %s5494 = smul.addr %s5493, 4
        %s5495 = scalar_lea.vmem [#allocation3], %s5494
        // Predicated region
        $region53: #{tpu_custom_call.1} parent=51 // pred_check
          %p5496 = pneg %p218
        $region54: #{tpu_custom_call.1} parent=51 // pred_check_branch
          %5498 = sbr.rel (%p5496) target = $region56
        $region55: #{tpu_custom_call.1} parent=51 // pred_region
          %s5500 = ssub.s32 64, 64
          %5501 = vsyncadd %s5492, %s5500
          %s5502 = smul.addr %s22, 2
          %s5503 = smul.addr %s5502, 32
          %s5504 = scalar_lea.hbm %s8, %s5503
          %s5506 = sshll.u32 %s5495, 4
          %s5507 = int_to_ptr.vmem [resolvable:$true] %s5506
          %5509 = dma.vmem_to_hbm [thread:$0]  %s5507, 64, %s5504, %s5492
        $region56: #{tpu_custom_call.1} parent=51 // pred_fallthru
          _
      $region52: #{tpu_custom_call.1} parent=5 // pred_fallthru
        _
      %p5510 = scmp.le.s32.totalorder 2, %s17
      // Predicated region
      $region57: #{tpu_custom_call.1} parent=5 // pred_check
        %p5511 = pneg %p5510
      $region58: #{tpu_custom_call.1} parent=5 // pred_check_branch
        %5513 = sbr.rel (%p5511) target = $region60
      $region59: #{tpu_custom_call.1} parent=5 // pred_region
        %s5514 = ssub.s32 %s17, 2
        // Predicated region
        $region61: #{tpu_custom_call.1} parent=59 // pred_check
          %p5515 = pneg %p224
        $region62: #{tpu_custom_call.1} parent=59 // pred_check_branch
          %5517 = sbr.rel (%p5515) target = $region64
        $region63: #{tpu_custom_call.1} parent=59 // pred_region
          %s5518 = sand.u32 %s209, 1
          %s5519 = scalar_lea.sflag [#allocation4], %s5518
          %s5520 = sand.u32 %s209, 1
          %s5521 = smul.addr %s5520, 4
          %s5522 = scalar_lea.vmem [#allocation3], %s5521
          %5523 = dma.done %s5519, 64
        $region64: #{tpu_custom_call.1} parent=59 // pred_fallthru
          _
      $region60: #{tpu_custom_call.1} parent=5 // pred_fallthru
        _
    $region6: #{tpu_custom_call.1} parent=1 // loop_footer
      %s21 = sadd.s32 1, %s17
    $region7: #{tpu_custom_call.1} parent=1 // loop_footer_branch
      %16 = sbr.rel target = $region3
    $region8: #{tpu_custom_call.1} parent=1 // loop_exit
      _
    %5524 = vsyncpa [#allocation4], 1
    %s5525 = scalar_lea.sflag [#allocation4], 1
    %5526 = vsyncpa %s5525, 1

</llo_original>
